<compile_context>
chip_gen: v6e
topology: v6e:2x2x1
jax: 0.10.0
libtpu: 0.0.40
codegen_flags: <defaults>
</compile_context>

<pallas_src>
import jax
import jax.numpy as jnp
from jax import lax
from jax.experimental import pallas as pl
from jax.experimental.pallas import tpu as pltpu

EPS = 1e-5
LANE = 128


# ---------------------------------------------------------------------------
# small helpers
# ---------------------------------------------------------------------------
def _round_up(n, m):
    return ((n + m - 1) // m) * m


def _pad_last(x, c_pad):
    c = x.shape[-1]
    if c == c_pad:
        return x
    pads = [(0, 0)] * (x.ndim - 1) + [(0, c_pad - c)]
    return jnp.pad(x, pads)


def _pick_row_tile(n, cap=256):
    for t in (cap, 128, 64, 32, 16, 8):
        if t <= n and n % t == 0:
            return t
    return n


# ---------------------------------------------------------------------------
# Pallas kernel 1: per-channel batch statistics (sum, sum of squares)
# ---------------------------------------------------------------------------
def _stats_kernel(x_ref, sum_ref, sq_ref):
    @pl.when(pl.program_id(0) == 0)
    def _init():
        sum_ref[...] = jnp.zeros_like(sum_ref)
        sq_ref[...] = jnp.zeros_like(sq_ref)

    x = x_ref[...]
    sum_ref[...] += jnp.sum(x, axis=0, keepdims=True)
    sq_ref[...] += jnp.sum(x * x, axis=0, keepdims=True)


def _channel_stats(x_flat):
    n, cp = x_flat.shape
    tile = _pick_row_tile(n)
    sums, sqs = pl.pallas_call(
        _stats_kernel,
        grid=(n // tile,),
        in_specs=[pl.BlockSpec((tile, cp), lambda i: (i, 0))],
        out_specs=[pl.BlockSpec((1, cp), lambda i: (0, 0)),
                   pl.BlockSpec((1, cp), lambda i: (0, 0))],
        out_shape=[jax.ShapeDtypeStruct((1, cp), jnp.float32),
                   jax.ShapeDtypeStruct((1, cp), jnp.float32)],
        compiler_params=pltpu.CompilerParams(
            dimension_semantics=("arbitrary",)),
    )(x_flat)
    return sums, sqs


def _bn_affine(x_pc, gamma, beta):
    """Train-mode BN (batch stats, biased variance) folded to scale/shift."""
    b, h, w, cp = x_pc.shape
    n = b * h * w
    s, sq = _channel_stats(x_pc.reshape(n, cp))
    mean = s / n
    var = jnp.maximum(sq / n - mean * mean, 0.0)
    g = _pad_last(gamma.astype(jnp.float32).reshape(1, -1), cp)   # pad with 0
    bt = _pad_last(beta.astype(jnp.float32).reshape(1, -1), cp)   # pad with 0
    scale = g * lax.rsqrt(var + EPS)
    shift = bt - mean * scale
    return scale, shift                                            # (1, cp)


# ---------------------------------------------------------------------------
# Pallas kernel 2: fused BN-affine + ReLU + 3x3 conv (+ fused residual skip)
# ---------------------------------------------------------------------------
def _make_conv_kernel(*, stride, h_in, w_in, w_out, skip_mode):
    n_phase = stride            # column phases of the padded input
    n_rows = 3 * n_phase        # 3 shifted rows per phase

    def kernel(*refs):
        rows = refs[:n_rows]
        scale_ref, shift_ref, w_ref = refs[n_rows:n_rows + 3]
        idx = n_rows + 3
        sx_ref = sw_ref = None
        if skip_mode == "identity":
            sx_ref = refs[idx]
            idx += 1
        elif skip_mode == "conv":
            sx_ref, sw_ref = refs[idx], refs[idx + 1]
            idx += 2
        o_ref = refs[idx]

        oh = pl.program_id(1)
        scale = scale_ref[...]                        # (1, Cp)
        shift = shift_ref[...]

        taps = []
        for dh in range(3):
            rpad = oh * stride + dh                   # row index in padded img
            row_ok = jnp.logical_and(rpad >= 1, rpad <= h_in)
            for dw in range(3):
                p, start = dw % n_phase, dw // n_phase
                t = rows[dh * n_phase + p][pl.ds(start, w_out), :]  # (Wout,Cp)
                t = jnp.maximum(t * scale + shift, 0.0)             # BN + ReLU
                # re-zero the spatial padding halo (pad happened pre-BN)
                col = dw + stride * lax.broadcasted_iota(
                    jnp.int32, (w_out, 1), 0)
                ok = jnp.logical_and(
                    jnp.logical_and(col >= 1, col <= w_in), row_ok)
                taps.append(jnp.where(ok, t, 0.0).astype(jnp.bfloat16))

        xt = jnp.concatenate(taps, axis=-1)           # (Wout, 9*Cp) bf16
        acc = jnp.dot(xt, w_ref[...],                 # single K=9*Cp MXU dot
                      preferred_element_type=jnp.float32)

        if skip_mode == "identity":                   # residual add, exact f32
            acc = acc + sx_ref[...]
        elif skip_mode == "conv":                     # fused 1x1 skip conv
            acc = acc + jnp.dot(sx_ref[...].astype(jnp.bfloat16), sw_ref[...],
                                preferred_element_type=jnp.float32)

        o_ref[...] = acc
    return kernel


def _conv_stage(x_pc, scale, shift, w9, *, stride, skip=None):
    """Fused BN+ReLU+3x3 conv (pad=1) with optional fused residual skip.

    x_pc : (B, H, W, Cp)  float32 raw (pre-BN) activation, channel-padded.
    w9   : (9*Cp, Cop)    bfloat16 packed 3x3 weights (resident in VMEM).
    skip : None | ("identity", skip_x) | ("conv", skip_x, skip_w)
           skip_x already decimated to the output spatial grid.
    """
    b, h, w, cp = x_pc.shape
    cop = w9.shape[1]
    h_out = (h - 1) // stride + 1
    w_out = (w - 1) // stride + 1

    xp = jnp.pad(x_pc, ((0, 0), (1, 1), (1, 1), (0, 0)))
    # column-phase split so all in-kernel slices are contiguous
    phases = [xp] if stride == 1 else [xp[:, :, p::stride, :]
                                       for p in range(stride)]

    in_specs, inputs = [], []
    for dh in range(3):
        for p in range(stride):
            wp_p = phases[p].shape[2]
            in_specs.append(pl.BlockSpec(
                (None, None, wp_p, cp),
                (lambda bi, ohi, dh=dh: (bi, ohi * stride + dh, 0, 0))))
            inputs.append(phases[p])
    in_specs += [pl.BlockSpec((1, cp), lambda bi, ohi: (0, 0)),
                 pl.BlockSpec((1, cp), lambda bi, ohi: (0, 0)),
                 pl.BlockSpec(w9.shape, lambda bi, ohi: (0, 0))]  # resident W
    inputs += [scale, shift, w9]

    skip_mode = "none"
    if skip is not None:
        skip_mode = skip[0]
        skip_x = skip[1]
        in_specs.append(pl.BlockSpec(
            (None, None, skip_x.shape[2], skip_x.shape[3]),
            lambda bi, ohi: (bi, ohi, 0, 0)))
        inputs.append(skip_x)
        if skip_mode == "conv":
            skip_w = skip[2]
            in_specs.append(pl.BlockSpec(skip_w.shape, lambda bi, ohi: (0, 0)))
            inputs.append(skip_w)

    kernel = _make_conv_kernel(stride=stride, h_in=h, w_in=w, w_out=w_out,
                               skip_mode=skip_mode)
    return pl.pallas_call(
        kernel,
        grid=(b, h_out),
        in_specs=in_specs,
        out_specs=pl.BlockSpec((None, None, w_out, cop),
                               lambda bi, ohi: (bi, ohi, 0, 0)),
        out_shape=jax.ShapeDtypeStruct((b, h_out, w_out, cop), jnp.float32),
        compiler_params=pltpu.CompilerParams(
            dimension_semantics=("parallel", "parallel")),
    )(*inputs)


# ---------------------------------------------------------------------------
# weight packing (JAX glue, tiny)
# ---------------------------------------------------------------------------
def _pack_w3x3(w_oihw, cin_p, cout_p):
    cout, cin = w_oihw.shape[0], w_oihw.shape[1]
    w_t = jnp.transpose(w_oihw, (2, 3, 1, 0)).astype(jnp.float32)  # (3,3,ci,co)
    w_p = jnp.zeros((3, 3, cin_p, cout_p), jnp.float32)
    w_p = w_p.at[:, :, :cin, :cout].set(w_t)
    return w_p.reshape(9 * cin_p, cout_p).astype(jnp.bfloat16)


def _pack_w1x1(w_oihw, cin_p, cout_p):
    cout, cin = w_oihw.shape[0], w_oihw.shape[1]
    w_t = jnp.transpose(w_oihw.reshape(cout, cin), (1, 0)).astype(jnp.float32)
    w_p = jnp.zeros((cin_p, cout_p), jnp.float32).at[:cin, :cout].set(w_t)
    return w_p.astype(jnp.bfloat16)


# ---------------------------------------------------------------------------
# ResidualBlock forward (bias=False, matching the module's default)
# ---------------------------------------------------------------------------
def residual_block(x_nchw, params, stride):
    x = jnp.transpose(x_nchw, (0, 2, 3, 1)).astype(jnp.float32)   # NHWC
    cin = x.shape[-1]
    cmid = params["in_conv_w"].shape[0]
    cout = params["out_conv_w"].shape[0]
    cin_p, cmid_p, cout_p = (_round_up(cin, LANE), _round_up(cmid, LANE),
                             _round_up(cout, LANE))

    x_pc = _pad_last(x, cin_p)

    # stage 1: BN(in)+ReLU -> 3x3 conv (stride)   [one fused Pallas kernel]
    s1, t1 = _bn_affine(x_pc, params["in_gamma"], params["in_beta"])
    h1 = _conv_stage(x_pc, s1, t1,
                     _pack_w3x3(params["in_conv_w"], cin_p, cmid_p),
                     stride=stride)

    # stage 2: BN(mid)+ReLU -> 3x3 conv
    s2, t2 = _bn_affine(h1, params["mid_gamma"], params["mid_beta"])
    h2 = _conv_stage(h1, s2, t2,
                     _pack_w3x3(params["mid_conv_w"], cmid_p, cmid_p),
                     stride=1)

    # stage 3: BN(out)+ReLU -> 3x3 conv, with the residual skip fused in
    s3, t3 = _bn_affine(h2, params["out_gamma"], params["out_beta"])
    if "skip_w" in params:
        skip_x = x_pc[:, ::stride, ::stride, :]                   # 1x1-conv input
        skip = ("conv", skip_x, _pack_w1x1(params["skip_w"], cin_p, cout_p))
    else:
        skip = ("identity", x_pc)                                 # Cin==Cout, s==1
    out = _conv_stage(h2, s3, t3,
                      _pack_w3x3(params["out_conv_w"], cmid_p, cout_p),
                      stride=1, skip=skip)

    out = out[..., :cout]
    return jnp.transpose(out, (0, 3, 1, 2))                       # back to NCHW


fwd = jax.jit(residual_block, static_argnames=("stride",))

# TODO(synk): BatchNorm running_mean/running_var buffer updates (training-time
# state mutation) are not reproduced; forward math uses batch stats (train mode).


# ---------------------------------------------------------------------------
# Pure-JAX references (correctness check only)
# ---------------------------------------------------------------------------
def _bn_relu_ref(x, gamma, beta):
    mu = jnp.mean(x, axis=(0, 2, 3), keepdims=True)
    var = jnp.mean((x - mu) ** 2, axis=(0, 2, 3), keepdims=True)
    xn = (x - mu) * lax.rsqrt(var + EPS)
    return jnp.maximum(xn * gamma.reshape(1, -1, 1, 1)
                       + beta.reshape(1, -1, 1, 1), 0.0)


def _conv_ref(x, w, stride, pad, round_bf16):
    if round_bf16:  # mimic the kernel's bf16 MXU operands (f32 accumulation)
        x = x.astype(jnp.bfloat16).astype(jnp.float32)
        w = w.astype(jnp.bfloat16).astype(jnp.float32)
    return lax.conv_general_dilated(
        x, w, (stride, stride), [(pad, pad), (pad, pad)],
        dimension_numbers=("NCHW", "OIHW", "NCHW"),
        precision=lax.Precision.HIGHEST)


def residual_block_ref(x, params, stride, round_bf16=False):
    if "skip_w" in params:
        skip = _conv_ref(x, params["skip_w"], stride, 0, round_bf16)
    else:
        skip = x
    h = _conv_ref(_bn_relu_ref(x, params["in_gamma"], params["in_beta"]),
                  params["in_conv_w"], stride, 1, round_bf16)
    h = _conv_ref(_bn_relu_ref(h, params["mid_gamma"], params["mid_beta"]),
                  params["mid_conv_w"], 1, 1, round_bf16)
    h = _conv_ref(_bn_relu_ref(h, params["out_gamma"], params["out_beta"]),
                  params["out_conv_w"], 1, 1, round_bf16)
    return h + skip


# ---------------------------------------------------------------------------
def _make_params(key, cin, cmid, cout, with_skip):
    ks = jax.random.split(key, 10)
    p = {
        "in_gamma":   1.0 + 0.1 * jax.random.normal(ks[0], (cin,), jnp.float32),
        "in_beta":    0.1 * jax.random.normal(ks[1], (cin,), jnp.float32),
        "in_conv_w":  0.1 * jax.random.normal(ks[2], (cmid, cin, 3, 3), jnp.float32),
        "mid_gamma":  1.0 + 0.1 * jax.random.normal(ks[3], (cmid,), jnp.float32),
        "mid_beta":   0.1 * jax.random.normal(ks[4], (cmid,), jnp.float32),
        "mid_conv_w": 0.1 * jax.random.normal(ks[5], (cmid, cmid, 3, 3), jnp.float32),
        "out_gamma":  1.0 + 0.1 * jax.random.normal(ks[6], (cmid,), jnp.float32),
        "out_beta":   0.1 * jax.random.normal(ks[7], (cmid,), jnp.float32),
        "out_conv_w": 0.1 * jax.random.normal(ks[8], (cout, cmid, 3, 3), jnp.float32),
        # bias=False (module default): no conv biases.
    }
    if with_skip:
        p["skip_w"] = 0.1 * jax.random.normal(ks[9], (cout, cin, 1, 1), jnp.float32)
    return p


def _check(x, params, stride):
    out = jax.block_until_ready(fwd(x, params, stride=stride))
    ref_b = residual_block_ref(x, params, stride, round_bf16=True)   # tight
    ref_f = residual_block_ref(x, params, stride, round_bf16=False)  # sanity
    assert out.shape == ref_f.shape, (out.shape, ref_f.shape)
    assert bool(jnp.allclose(out, ref_b, atol=5e-3, rtol=5e-3)), \
        float(jnp.max(jnp.abs(out - ref_b)))
    assert bool(jnp.allclose(out, ref_f, atol=1e-1, rtol=1e-1)), \
        float(jnp.max(jnp.abs(out - ref_f)))


if __name__ == "__main__":
    key = jax.random.PRNGKey(0)
    k_pa, k_pb, k_xa, k_xb = jax.random.split(key, 4)

    # Config A: downsampling block with a 1x1-conv skip (stride=2, Cin != Cout).
    x_a = jax.random.normal(k_xa, (2, 4, 16, 16), jnp.float32)
    p_a = _make_params(k_pa, cin=4, cmid=8, cout=16, with_skip=True)
    _check(x_a, p_a, stride=2)

    # Config B: identity-skip block (stride=1, Cin == Cout).
    x_b = jax.random.normal(k_xb, (2, 8, 16, 16), jnp.float32)
    p_b = _make_params(k_pb, cin=8, cmid=8, cout=8, with_skip=False)
    _check(x_b, p_b, stride=1)

    print("KERNEL_OK")
</pallas_src>

<mosaic_0001>
module attributes {stable_mosaic.version = 11 : i64} {
  func.func @_stats_kernel(%arg0: i32, %arg1: memref<256x128xf32, #tpu.memory_space<vmem>>, %arg2: memref<1x128xf32, #tpu.memory_space<vmem>>, %arg3: memref<1x128xf32, #tpu.memory_space<vmem>>) attributes {dimension_semantics = [#tpu.dimension_semantics<arbitrary>], iteration_bounds = array<i64: 2>, scalar_prefetch = 0 : i64, scratch_operands = 0 : i64, tpu.core_type = #tpu.core_type<tc>, window_params = [{transform_indices = @transform_0, window_bounds = array<i64: 256, 128>}, {pipeline_mode = #tpu.pipeline_mode<synchronous>, transform_indices = @transform_1, window_bounds = array<i64: 1, 128>}, {pipeline_mode = #tpu.pipeline_mode<synchronous>, transform_indices = @transform_2, window_bounds = array<i64: 1, 128>}]} {
    %c0_i32 = arith.constant 0 : i32
    %0 = arith.cmpi eq, %arg0, %c0_i32 : i32
    %1 = arith.extui %0 : i1 to i32
    %c0_i32_0 = arith.constant 0 : i32
    %2 = arith.cmpi ne, %1, %c0_i32_0 : i32
    scf.if %2 {
      %cst_11 = arith.constant 0.000000e+00 : f32
      %15 = vector.broadcast %cst_11 : f32 to vector<1x128xf32>
      %c0_12 = arith.constant 0 : index
      %c0_13 = arith.constant 0 : index
      %16 = vector.load %arg2[%c0_12, %c0_13] : memref<1x128xf32, #tpu.memory_space<vmem>>, vector<1x128xf32>
      tpu.vector_store %arg2[%c0_12, %c0_13], %15 {strides = array<i32>} : memref<1x128xf32, #tpu.memory_space<vmem>>, vector<1x128xf32>,
      %cst_14 = arith.constant 0.000000e+00 : f32
      %17 = vector.broadcast %cst_14 : f32 to vector<1x128xf32>
      %c0_15 = arith.constant 0 : index
      %c0_16 = arith.constant 0 : index
      %18 = vector.load %arg3[%c0_15, %c0_16] : memref<1x128xf32, #tpu.memory_space<vmem>>, vector<1x128xf32>
      tpu.vector_store %arg3[%c0_15, %c0_16], %17 {strides = array<i32>} : memref<1x128xf32, #tpu.memory_space<vmem>>, vector<1x128xf32>,
    } else {
    }
    %c0 = arith.constant 0 : index
    %c0_1 = arith.constant 0 : index
    %3 = vector.load %arg1[%c0, %c0_1] : memref<256x128xf32, #tpu.memory_space<vmem>>, vector<256x128xf32>
    %c0_2 = arith.constant 0 : index
    %c0_3 = arith.constant 0 : index
    %4 = vector.load %arg2[%c0_2, %c0_3] : memref<1x128xf32, #tpu.memory_space<vmem>>, vector<1x128xf32>
    %cst = arith.constant dense<0.000000e+00> : vector<128xf32>
    %5 = vector.multi_reduction <add>, %3, %cst [0] : vector<256x128xf32> to vector<128xf32>
    %6 = vector.shape_cast %5 : vector<128xf32> to vector<1x128xf32>
    %7 = arith.addf %4, %6 : vector<1x128xf32>
    %c0_4 = arith.constant 0 : index
    %c0_5 = arith.constant 0 : index
    %8 = vector.load %arg2[%c0_4, %c0_5] : memref<1x128xf32, #tpu.memory_space<vmem>>, vector<1x128xf32>
    tpu.vector_store %arg2[%c0_4, %c0_5], %7 {strides = array<i32>} : memref<1x128xf32, #tpu.memory_space<vmem>>, vector<1x128xf32>,
    %c0_6 = arith.constant 0 : index
    %c0_7 = arith.constant 0 : index
    %9 = vector.load %arg3[%c0_6, %c0_7] : memref<1x128xf32, #tpu.memory_space<vmem>>, vector<1x128xf32>
    %10 = arith.mulf %3, %3 : vector<256x128xf32>
    %cst_8 = arith.constant dense<0.000000e+00> : vector<128xf32>
    %11 = vector.multi_reduction <add>, %10, %cst_8 [0] : vector<256x128xf32> to vector<128xf32>
    %12 = vector.shape_cast %11 : vector<128xf32> to vector<1x128xf32>
    %13 = arith.addf %9, %12 : vector<1x128xf32>
    %c0_9 = arith.constant 0 : index
    %c0_10 = arith.constant 0 : index
    %14 = vector.load %arg3[%c0_9, %c0_10] : memref<1x128xf32, #tpu.memory_space<vmem>>, vector<1x128xf32>
    tpu.vector_store %arg3[%c0_9, %c0_10], %13 {strides = array<i32>} : memref<1x128xf32, #tpu.memory_space<vmem>>, vector<1x128xf32>,
    return
  }
  func.func @transform_0(%arg0: i32) -> (i32, i32) {
    %c0_i32 = arith.constant 0 : i32
    %c0_i32_0 = arith.constant 0 : i32
    return %arg0, %c0_i32 : i32, i32
  }
  func.func @transform_1(%arg0: i32) -> (i32, i32) {
    %c0_i32 = arith.constant 0 : i32
    %c0_i32_0 = arith.constant 0 : i32
    %c0_i32_1 = arith.constant 0 : i32
    return %c0_i32, %c0_i32_0 : i32, i32
  }
  func.func @transform_2(%arg0: i32) -> (i32, i32) {
    %c0_i32 = arith.constant 0 : i32
    %c0_i32_0 = arith.constant 0 : i32
    %c0_i32_1 = arith.constant 0 : i32
    return %c0_i32, %c0_i32_0 : i32, i32
  }
}

module attributes {stable_mosaic.version = 11 : i64} {
  func.func @kernel(%arg0: i32, %arg1: i32, %arg2: memref<1x1x9x128xf32, #tpu.memory_space<vmem>>, %arg3: memref<1x1x9x128xf32, #tpu.memory_space<vmem>>, %arg4: memref<1x1x9x128xf32, #tpu.memory_space<vmem>>, %arg5: memref<1x1x9x128xf32, #tpu.memory_space<vmem>>, %arg6: memref<1x1x9x128xf32, #tpu.memory_space<vmem>>, %arg7: memref<1x1x9x128xf32, #tpu.memory_space<vmem>>, %arg8: memref<1x128xf32, #tpu.memory_space<vmem>>, %arg9: memref<1x128xf32, #tpu.memory_space<vmem>>, %arg10: memref<1152x128xbf16, #tpu.memory_space<vmem>>, %arg11: memref<1x1x8x128xf32, #tpu.memory_space<vmem>>) attributes {dimension_semantics = [#tpu.dimension_semantics<parallel>, #tpu.dimension_semantics<parallel>], iteration_bounds = array<i64: 2, 8>, scalar_prefetch = 0 : i64, scratch_operands = 0 : i64, tpu.core_type = #tpu.core_type<tc>, window_params = [{transform_indices = @transform_0, window_bounds = array<i64: 1, 1, 9, 128>}, {transform_indices = @transform_1, window_bounds = array<i64: 1, 1, 9, 128>}, {transform_indices = @transform_2, window_bounds = array<i64: 1, 1, 9, 128>}, {transform_indices = @transform_3, window_bounds = array<i64: 1, 1, 9, 128>}, {transform_indices = @transform_4, window_bounds = array<i64: 1, 1, 9, 128>}, {transform_indices = @transform_5, window_bounds = array<i64: 1, 1, 9, 128>}, {pipeline_mode = #tpu.pipeline_mode<synchronous>, transform_indices = @transform_6, window_bounds = array<i64: 1, 128>}, {pipeline_mode = #tpu.pipeline_mode<synchronous>, transform_indices = @transform_7, window_bounds = array<i64: 1, 128>}, {pipeline_mode = #tpu.pipeline_mode<synchronous>, transform_indices = @transform_8, window_bounds = array<i64: 1152, 128>}, {transform_indices = @transform_9, window_bounds = array<i64: 1, 1, 8, 128>}]} {
    %c0 = arith.constant 0 : index
    %c0_0 = arith.constant 0 : index
    %0 = vector.load %arg8[%c0, %c0_0] : memref<1x128xf32, #tpu.memory_space<vmem>>, vector<1x128xf32>
    %c0_1 = arith.constant 0 : index
    %c0_2 = arith.constant 0 : index
    %1 = vector.load %arg9[%c0_1, %c0_2] : memref<1x128xf32, #tpu.memory_space<vmem>>, vector<1x128xf32>
    %c2_i32 = arith.constant 2 : i32
    %2 = arith.muli %arg1, %c2_i32 : i32
    %c0_i32 = arith.constant 0 : i32
    %3 = arith.addi %2, %c0_i32 : i32
    %c1_i32 = arith.constant 1 : i32
    %4 = arith.cmpi sge, %3, %c1_i32 : i32
    %c16_i32 = arith.constant 16 : i32
    %5 = arith.cmpi sle, %3, %c16_i32 : i32
    %6 = arith.andi %4, %5 : i1
    %c0_3 = arith.constant 0 : index
    %c0_4 = arith.constant 0 : index
    %c0_5 = arith.constant 0 : index
    %c0_6 = arith.constant 0 : index
    %7 = vector.load %arg2[%c0_3, %c0_4, %c0_5, %c0_6] : memref<1x1x9x128xf32, #tpu.memory_space<vmem>>, vector<1x1x8x128xf32>
    %8 = vector.shape_cast %7 : vector<1x1x8x128xf32> to vector<8x128xf32>
    %9 = vector.broadcast %0 : vector<1x128xf32> to vector<8x128xf32>
    %10 = arith.mulf %8, %9 : vector<8x128xf32>
    %11 = vector.broadcast %1 : vector<1x128xf32> to vector<8x128xf32>
    %12 = arith.addf %10, %11 : vector<8x128xf32>
    %cst = arith.constant 0.000000e+00 : f32
    %13 = vector.broadcast %cst : f32 to vector<8x128xf32>
    %14 = arith.maximumf %12, %13 : vector<8x128xf32>
    %15 = tpu.iota {dimensions = array<i32: 0>} : vector<8x1xi32>
    %c2_i32_7 = arith.constant 2 : i32
    %16 = vector.broadcast %c2_i32_7 : i32 to vector<8x1xi32>
    %17 = arith.muli %16, %15 : vector<8x1xi32>
    %c0_i32_8 = arith.constant 0 : i32
    %18 = vector.broadcast %c0_i32_8 : i32 to vector<8x1xi32>
    %19 = arith.addi %18, %17 : vector<8x1xi32>
    %c1_i32_9 = arith.constant 1 : i32
    %20 = vector.broadcast %c1_i32_9 : i32 to vector<8x1xi32>
    %21 = arith.cmpi sge, %19, %20 : vector<8x1xi32>
    %c16_i32_10 = arith.constant 16 : i32
    %22 = vector.broadcast %c16_i32_10 : i32 to vector<8x1xi32>
    %23 = arith.cmpi sle, %19, %22 : vector<8x1xi32>
    %24 = arith.andi %21, %23 : vector<8x1xi1>
    %25 = vector.broadcast %6 : i1 to vector<8x1xi1>
    %26 = arith.andi %24, %25 : vector<8x1xi1>
    %cst_11 = arith.constant 0.000000e+00 : f32
    %27 = vector.shape_cast %26 : vector<8x1xi1> to vector<8x1xi1>
    %28 = vector.broadcast %27 : vector<8x1xi1> to vector<8x128xi1>
    %29 = vector.broadcast %cst_11 : f32 to vector<8x128xf32>
    %30 = arith.select %28, %14, %29 : vector<8x128xi1>, vector<8x128xf32>
    %31 = arith.truncf %30 : vector<8x128xf32> to vector<8x128xbf16>
    %c0_12 = arith.constant 0 : index
    %c0_13 = arith.constant 0 : index
    %c0_14 = arith.constant 0 : index
    %c0_15 = arith.constant 0 : index
    %32 = vector.load %arg3[%c0_12, %c0_13, %c0_14, %c0_15] : memref<1x1x9x128xf32, #tpu.memory_space<vmem>>, vector<1x1x8x128xf32>
    %33 = vector.shape_cast %32 : vector<1x1x8x128xf32> to vector<8x128xf32>
    %34 = vector.broadcast %0 : vector<1x128xf32> to vector<8x128xf32>
    %35 = arith.mulf %33, %34 : vector<8x128xf32>
    %36 = vector.broadcast %1 : vector<1x128xf32> to vector<8x128xf32>
    %37 = arith.addf %35, %36 : vector<8x128xf32>
    %cst_16 = arith.constant 0.000000e+00 : f32
    %38 = vector.broadcast %cst_16 : f32 to vector<8x128xf32>
    %39 = arith.maximumf %37, %38 : vector<8x128xf32>
    %40 = tpu.iota {dimensions = array<i32: 0>} : vector<8x1xi32>
    %c2_i32_17 = arith.constant 2 : i32
    %41 = vector.broadcast %c2_i32_17 : i32 to vector<8x1xi32>
    %42 = arith.muli %41, %40 : vector<8x1xi32>
    %c1_i32_18 = arith.constant 1 : i32
    %43 = vector.broadcast %c1_i32_18 : i32 to vector<8x1xi32>
    %44 = arith.addi %43, %42 : vector<8x1xi32>
    %c1_i32_19 = arith.constant 1 : i32
    %45 = vector.broadcast %c1_i32_19 : i32 to vector<8x1xi32>
    %46 = arith.cmpi sge, %44, %45 : vector<8x1xi32>
    %c16_i32_20 = arith.constant 16 : i32
    %47 = vector.broadcast %c16_i32_20 : i32 to vector<8x1xi32>
    %48 = arith.cmpi sle, %44, %47 : vector<8x1xi32>
    %49 = arith.andi %46, %48 : vector<8x1xi1>
    %50 = vector.broadcast %6 : i1 to vector<8x1xi1>
    %51 = arith.andi %49, %50 : vector<8x1xi1>
    %cst_21 = arith.constant 0.000000e+00 : f32
    %52 = vector.shape_cast %51 : vector<8x1xi1> to vector<8x1xi1>
    %53 = vector.broadcast %52 : vector<8x1xi1> to vector<8x128xi1>
    %54 = vector.broadcast %cst_21 : f32 to vector<8x128xf32>
    %55 = arith.select %53, %39, %54 : vector<8x128xi1>, vector<8x128xf32>
    %56 = arith.truncf %55 : vector<8x128xf32> to vector<8x128xbf16>
    %c0_22 = arith.constant 0 : index
    %c0_23 = arith.constant 0 : index
    %c1 = arith.constant 1 : index
    %c0_24 = arith.constant 0 : index
    %57 = vector.load %arg2[%c0_22, %c0_23, %c1, %c0_24] : memref<1x1x9x128xf32, #tpu.memory_space<vmem>>, vector<1x1x8x128xf32>
    %58 = vector.shape_cast %57 : vector<1x1x8x128xf32> to vector<8x128xf32>
    %59 = vector.broadcast %0 : vector<1x128xf32> to vector<8x128xf32>
    %60 = arith.mulf %58, %59 : vector<8x128xf32>
    %61 = vector.broadcast %1 : vector<1x128xf32> to vector<8x128xf32>
    %62 = arith.addf %60, %61 : vector<8x128xf32>
    %cst_25 = arith.constant 0.000000e+00 : f32
    %63 = vector.broadcast %cst_25 : f32 to vector<8x128xf32>
    %64 = arith.maximumf %62, %63 : vector<8x128xf32>
    %65 = tpu.iota {dimensions = array<i32: 0>} : vector<8x1xi32>
    %c2_i32_26 = arith.constant 2 : i32
    %66 = vector.broadcast %c2_i32_26 : i32 to vector<8x1xi32>
    %67 = arith.muli %66, %65 : vector<8x1xi32>
    %c2_i32_27 = arith.constant 2 : i32
    %68 = vector.broadcast %c2_i32_27 : i32 to vector<8x1xi32>
    %69 = arith.addi %68, %67 : vector<8x1xi32>
    %c1_i32_28 = arith.constant 1 : i32
    %70 = vector.broadcast %c1_i32_28 : i32 to vector<8x1xi32>
    %71 = arith.cmpi sge, %69, %70 : vector<8x1xi32>
    %c16_i32_29 = arith.constant 16 : i32
    %72 = vector.broadcast %c16_i32_29 : i32 to vector<8x1xi32>
    %73 = arith.cmpi sle, %69, %72 : vector<8x1xi32>
    %74 = arith.andi %71, %73 : vector<8x1xi1>
    %75 = vector.broadcast %6 : i1 to vector<8x1xi1>
    %76 = arith.andi %74, %75 : vector<8x1xi1>
    %cst_30 = arith.constant 0.000000e+00 : f32
    %77 = vector.shape_cast %76 : vector<8x1xi1> to vector<8x1xi1>
    %78 = vector.broadcast %77 : vector<8x1xi1> to vector<8x128xi1>
    %79 = vector.broadcast %cst_30 : f32 to vector<8x128xf32>
    %80 = arith.select %78, %64, %79 : vector<8x128xi1>, vector<8x128xf32>
    %81 = arith.truncf %80 : vector<8x128xf32> to vector<8x128xbf16>
    %c2_i32_31 = arith.constant 2 : i32
    %82 = arith.muli %arg1, %c2_i32_31 : i32
    %c1_i32_32 = arith.constant 1 : i32
    %83 = arith.addi %82, %c1_i32_32 : i32
    %c1_i32_33 = arith.constant 1 : i32
    %84 = arith.cmpi sge, %83, %c1_i32_33 : i32
    %c16_i32_34 = arith.constant 16 : i32
    %85 = arith.cmpi sle, %83, %c16_i32_34 : i32
    %86 = arith.andi %84, %85 : i1
    %c0_35 = arith.constant 0 : index
    %c0_36 = arith.constant 0 : index
    %c0_37 = arith.constant 0 : index
    %c0_38 = arith.constant 0 : index
    %87 = vector.load %arg4[%c0_35, %c0_36, %c0_37, %c0_38] : memref<1x1x9x128xf32, #tpu.memory_space<vmem>>, vector<1x1x8x128xf32>
    %88 = vector.shape_cast %87 : vector<1x1x8x128xf32> to vector<8x128xf32>
    %89 = vector.broadcast %0 : vector<1x128xf32> to vector<8x128xf32>
    %90 = arith.mulf %88, %89 : vector<8x128xf32>
    %91 = vector.broadcast %1 : vector<1x128xf32> to vector<8x128xf32>
    %92 = arith.addf %90, %91 : vector<8x128xf32>
    %cst_39 = arith.constant 0.000000e+00 : f32
    %93 = vector.broadcast %cst_39 : f32 to vector<8x128xf32>
    %94 = arith.maximumf %92, %93 : vector<8x128xf32>
    %95 = tpu.iota {dimensions = array<i32: 0>} : vector<8x1xi32>
    %c2_i32_40 = arith.constant 2 : i32
    %96 = vector.broadcast %c2_i32_40 : i32 to vector<8x1xi32>
    %97 = arith.muli %96, %95 : vector<8x1xi32>
    %c0_i32_41 = arith.constant 0 : i32
    %98 = vector.broadcast %c0_i32_41 : i32 to vector<8x1xi32>
    %99 = arith.addi %98, %97 : vector<8x1xi32>
    %c1_i32_42 = arith.constant 1 : i32
    %100 = vector.broadcast %c1_i32_42 : i32 to vector<8x1xi32>
    %101 = arith.cmpi sge, %99, %100 : vector<8x1xi32>
    %c16_i32_43 = arith.constant 16 : i32
    %102 = vector.broadcast %c16_i32_43 : i32 to vector<8x1xi32>
    %103 = arith.cmpi sle, %99, %102 : vector<8x1xi32>
    %104 = arith.andi %101, %103 : vector<8x1xi1>
    %105 = vector.broadcast %86 : i1 to vector<8x1xi1>
    %106 = arith.andi %104, %105 : vector<8x1xi1>
    %cst_44 = arith.constant 0.000000e+00 : f32
    %107 = vector.shape_cast %106 : vector<8x1xi1> to vector<8x1xi1>
    %108 = vector.broadcast %107 : vector<8x1xi1> to vector<8x128xi1>
    %109 = vector.broadcast %cst_44 : f32 to vector<8x128xf32>
    %110 = arith.select %108, %94, %109 : vector<8x128xi1>, vector<8x128xf32>
    %111 = arith.truncf %110 : vector<8x128xf32> to vector<8x128xbf16>
    %c0_45 = arith.constant 0 : index
    %c0_46 = arith.constant 0 : index
    %c0_47 = arith.constant 0 : index
    %c0_48 = arith.constant 0 : index
    %112 = vector.load %arg5[%c0_45, %c0_46, %c0_47, %c0_48] : memref<1x1x9x128xf32, #tpu.memory_space<vmem>>, vector<1x1x8x128xf32>
    %113 = vector.shape_cast %112 : vector<1x1x8x128xf32> to vector<8x128xf32>
    %114 = vector.broadcast %0 : vector<1x128xf32> to vector<8x128xf32>
    %115 = arith.mulf %113, %114 : vector<8x128xf32>
    %116 = vector.broadcast %1 : vector<1x128xf32> to vector<8x128xf32>
    %117 = arith.addf %115, %116 : vector<8x128xf32>
    %cst_49 = arith.constant 0.000000e+00 : f32
    %118 = vector.broadcast %cst_49 : f32 to vector<8x128xf32>
    %119 = arith.maximumf %117, %118 : vector<8x128xf32>
    %120 = tpu.iota {dimensions = array<i32: 0>} : vector<8x1xi32>
    %c2_i32_50 = arith.constant 2 : i32
    %121 = vector.broadcast %c2_i32_50 : i32 to vector<8x1xi32>
    %122 = arith.muli %121, %120 : vector<8x1xi32>
    %c1_i32_51 = arith.constant 1 : i32
    %123 = vector.broadcast %c1_i32_51 : i32 to vector<8x1xi32>
    %124 = arith.addi %123, %122 : vector<8x1xi32>
    %c1_i32_52 = arith.constant 1 : i32
    %125 = vector.broadcast %c1_i32_52 : i32 to vector<8x1xi32>
    %126 = arith.cmpi sge, %124, %125 : vector<8x1xi32>
    %c16_i32_53 = arith.constant 16 : i32
    %127 = vector.broadcast %c16_i32_53 : i32 to vector<8x1xi32>
    %128 = arith.cmpi sle, %124, %127 : vector<8x1xi32>
    %129 = arith.andi %126, %128 : vector<8x1xi1>
    %130 = vector.broadcast %86 : i1 to vector<8x1xi1>
    %131 = arith.andi %129, %130 : vector<8x1xi1>
    %cst_54 = arith.constant 0.000000e+00 : f32
    %132 = vector.shape_cast %131 : vector<8x1xi1> to vector<8x1xi1>
    %133 = vector.broadcast %132 : vector<8x1xi1> to vector<8x128xi1>
    %134 = vector.broadcast %cst_54 : f32 to vector<8x128xf32>
    %135 = arith.select %133, %119, %134 : vector<8x128xi1>, vector<8x128xf32>
    %136 = arith.truncf %135 : vector<8x128xf32> to vector<8x128xbf16>
    %c0_55 = arith.constant 0 : index
    %c0_56 = arith.constant 0 : index
    %c1_57 = arith.constant 1 : index
    %c0_58 = arith.constant 0 : index
    %137 = vector.load %arg4[%c0_55, %c0_56, %c1_57, %c0_58] : memref<1x1x9x128xf32, #tpu.memory_space<vmem>>, vector<1x1x8x128xf32>
    %138 = vector.shape_cast %137 : vector<1x1x8x128xf32> to vector<8x128xf32>
    %139 = vector.broadcast %0 : vector<1x128xf32> to vector<8x128xf32>
    %140 = arith.mulf %138, %139 : vector<8x128xf32>
    %141 = vector.broadcast %1 : vector<1x128xf32> to vector<8x128xf32>
    %142 = arith.addf %140, %141 : vector<8x128xf32>
    %cst_59 = arith.constant 0.000000e+00 : f32
    %143 = vector.broadcast %cst_59 : f32 to vector<8x128xf32>
    %144 = arith.maximumf %142, %143 : vector<8x128xf32>
    %145 = tpu.iota {dimensions = array<i32: 0>} : vector<8x1xi32>
    %c2_i32_60 = arith.constant 2 : i32
    %146 = vector.broadcast %c2_i32_60 : i32 to vector<8x1xi32>
    %147 = arith.muli %146, %145 : vector<8x1xi32>
    %c2_i32_61 = arith.constant 2 : i32
    %148 = vector.broadcast %c2_i32_61 : i32 to vector<8x1xi32>
    %149 = arith.addi %148, %147 : vector<8x1xi32>
    %c1_i32_62 = arith.constant 1 : i32
    %150 = vector.broadcast %c1_i32_62 : i32 to vector<8x1xi32>
    %151 = arith.cmpi sge, %149, %150 : vector<8x1xi32>
    %c16_i32_63 = arith.constant 16 : i32
    %152 = vector.broadcast %c16_i32_63 : i32 to vector<8x1xi32>
    %153 = arith.cmpi sle, %149, %152 : vector<8x1xi32>
    %154 = arith.andi %151, %153 : vector<8x1xi1>
    %155 = vector.broadcast %86 : i1 to vector<8x1xi1>
    %156 = arith.andi %154, %155 : vector<8x1xi1>
    %cst_64 = arith.constant 0.000000e+00 : f32
    %157 = vector.shape_cast %156 : vector<8x1xi1> to vector<8x1xi1>
    %158 = vector.broadcast %157 : vector<8x1xi1> to vector<8x128xi1>
    %159 = vector.broadcast %cst_64 : f32 to vector<8x128xf32>
    %160 = arith.select %158, %144, %159 : vector<8x128xi1>, vector<8x128xf32>
    %161 = arith.truncf %160 : vector<8x128xf32> to vector<8x128xbf16>
    %c2_i32_65 = arith.constant 2 : i32
    %162 = arith.muli %arg1, %c2_i32_65 : i32
    %c2_i32_66 = arith.constant 2 : i32
    %163 = arith.addi %162, %c2_i32_66 : i32
    %c1_i32_67 = arith.constant 1 : i32
    %164 = arith.cmpi sge, %163, %c1_i32_67 : i32
    %c16_i32_68 = arith.constant 16 : i32
    %165 = arith.cmpi sle, %163, %c16_i32_68 : i32
    %166 = arith.andi %164, %165 : i1
    %c0_69 = arith.constant 0 : index
    %c0_70 = arith.constant 0 : index
    %c0_71 = arith.constant 0 : index
    %c0_72 = arith.constant 0 : index
    %167 = vector.load %arg6[%c0_69, %c0_70, %c0_71, %c0_72] : memref<1x1x9x128xf32, #tpu.memory_space<vmem>>, vector<1x1x8x128xf32>
    %168 = vector.shape_cast %167 : vector<1x1x8x128xf32> to vector<8x128xf32>
    %169 = vector.broadcast %0 : vector<1x128xf32> to vector<8x128xf32>
    %170 = arith.mulf %168, %169 : vector<8x128xf32>
    %171 = vector.broadcast %1 : vector<1x128xf32> to vector<8x128xf32>
    %172 = arith.addf %170, %171 : vector<8x128xf32>
    %cst_73 = arith.constant 0.000000e+00 : f32
    %173 = vector.broadcast %cst_73 : f32 to vector<8x128xf32>
    %174 = arith.maximumf %172, %173 : vector<8x128xf32>
    %175 = tpu.iota {dimensions = array<i32: 0>} : vector<8x1xi32>
    %c2_i32_74 = arith.constant 2 : i32
    %176 = vector.broadcast %c2_i32_74 : i32 to vector<8x1xi32>
    %177 = arith.muli %176, %175 : vector<8x1xi32>
    %c0_i32_75 = arith.constant 0 : i32
    %178 = vector.broadcast %c0_i32_75 : i32 to vector<8x1xi32>
    %179 = arith.addi %178, %177 : vector<8x1xi32>
    %c1_i32_76 = arith.constant 1 : i32
    %180 = vector.broadcast %c1_i32_76 : i32 to vector<8x1xi32>
    %181 = arith.cmpi sge, %179, %180 : vector<8x1xi32>
    %c16_i32_77 = arith.constant 16 : i32
    %182 = vector.broadcast %c16_i32_77 : i32 to vector<8x1xi32>
    %183 = arith.cmpi sle, %179, %182 : vector<8x1xi32>
    %184 = arith.andi %181, %183 : vector<8x1xi1>
    %185 = vector.broadcast %166 : i1 to vector<8x1xi1>
    %186 = arith.andi %184, %185 : vector<8x1xi1>
    %cst_78 = arith.constant 0.000000e+00 : f32
    %187 = vector.shape_cast %186 : vector<8x1xi1> to vector<8x1xi1>
    %188 = vector.broadcast %187 : vector<8x1xi1> to vector<8x128xi1>
    %189 = vector.broadcast %cst_78 : f32 to vector<8x128xf32>
    %190 = arith.select %188, %174, %189 : vector<8x128xi1>, vector<8x128xf32>
    %191 = arith.truncf %190 : vector<8x128xf32> to vector<8x128xbf16>
    %c0_79 = arith.constant 0 : index
    %c0_80 = arith.constant 0 : index
    %c0_81 = arith.constant 0 : index
    %c0_82 = arith.constant 0 : index
    %192 = vector.load %arg7[%c0_79, %c0_80, %c0_81, %c0_82] : memref<1x1x9x128xf32, #tpu.memory_space<vmem>>, vector<1x1x8x128xf32>
    %193 = vector.shape_cast %192 : vector<1x1x8x128xf32> to vector<8x128xf32>
    %194 = vector.broadcast %0 : vector<1x128xf32> to vector<8x128xf32>
    %195 = arith.mulf %193, %194 : vector<8x128xf32>
    %196 = vector.broadcast %1 : vector<1x128xf32> to vector<8x128xf32>
    %197 = arith.addf %195, %196 : vector<8x128xf32>
    %cst_83 = arith.constant 0.000000e+00 : f32
    %198 = vector.broadcast %cst_83 : f32 to vector<8x128xf32>
    %199 = arith.maximumf %197, %198 : vector<8x128xf32>
    %200 = tpu.iota {dimensions = array<i32: 0>} : vector<8x1xi32>
    %c2_i32_84 = arith.constant 2 : i32
    %201 = vector.broadcast %c2_i32_84 : i32 to vector<8x1xi32>
    %202 = arith.muli %201, %200 : vector<8x1xi32>
    %c1_i32_85 = arith.constant 1 : i32
    %203 = vector.broadcast %c1_i32_85 : i32 to vector<8x1xi32>
    %204 = arith.addi %203, %202 : vector<8x1xi32>
    %c1_i32_86 = arith.constant 1 : i32
    %205 = vector.broadcast %c1_i32_86 : i32 to vector<8x1xi32>
    %206 = arith.cmpi sge, %204, %205 : vector<8x1xi32>
    %c16_i32_87 = arith.constant 16 : i32
    %207 = vector.broadcast %c16_i32_87 : i32 to vector<8x1xi32>
    %208 = arith.cmpi sle, %204, %207 : vector<8x1xi32>
    %209 = arith.andi %206, %208 : vector<8x1xi1>
    %210 = vector.broadcast %166 : i1 to vector<8x1xi1>
    %211 = arith.andi %209, %210 : vector<8x1xi1>
    %cst_88 = arith.constant 0.000000e+00 : f32
    %212 = vector.shape_cast %211 : vector<8x1xi1> to vector<8x1xi1>
    %213 = vector.broadcast %212 : vector<8x1xi1> to vector<8x128xi1>
    %214 = vector.broadcast %cst_88 : f32 to vector<8x128xf32>
    %215 = arith.select %213, %199, %214 : vector<8x128xi1>, vector<8x128xf32>
    %216 = arith.truncf %215 : vector<8x128xf32> to vector<8x128xbf16>
    %c0_89 = arith.constant 0 : index
    %c0_90 = arith.constant 0 : index
    %c1_91 = arith.constant 1 : index
    %c0_92 = arith.constant 0 : index
    %217 = vector.load %arg6[%c0_89, %c0_90, %c1_91, %c0_92] : memref<1x1x9x128xf32, #tpu.memory_space<vmem>>, vector<1x1x8x128xf32>
    %218 = vector.shape_cast %217 : vector<1x1x8x128xf32> to vector<8x128xf32>
    %219 = vector.broadcast %0 : vector<1x128xf32> to vector<8x128xf32>
    %220 = arith.mulf %218, %219 : vector<8x128xf32>
    %221 = vector.broadcast %1 : vector<1x128xf32> to vector<8x128xf32>
    %222 = arith.addf %220, %221 : vector<8x128xf32>
    %cst_93 = arith.constant 0.000000e+00 : f32
    %223 = vector.broadcast %cst_93 : f32 to vector<8x128xf32>
    %224 = arith.maximumf %222, %223 : vector<8x128xf32>
    %225 = tpu.iota {dimensions = array<i32: 0>} : vector<8x1xi32>
    %c2_i32_94 = arith.constant 2 : i32
    %226 = vector.broadcast %c2_i32_94 : i32 to vector<8x1xi32>
    %227 = arith.muli %226, %225 : vector<8x1xi32>
    %c2_i32_95 = arith.constant 2 : i32
    %228 = vector.broadcast %c2_i32_95 : i32 to vector<8x1xi32>
    %229 = arith.addi %228, %227 : vector<8x1xi32>
    %c1_i32_96 = arith.constant 1 : i32
    %230 = vector.broadcast %c1_i32_96 : i32 to vector<8x1xi32>
    %231 = arith.cmpi sge, %229, %230 : vector<8x1xi32>
    %c16_i32_97 = arith.constant 16 : i32
    %232 = vector.broadcast %c16_i32_97 : i32 to vector<8x1xi32>
    %233 = arith.cmpi sle, %229, %232 : vector<8x1xi32>
    %234 = arith.andi %231, %233 : vector<8x1xi1>
    %235 = vector.broadcast %166 : i1 to vector<8x1xi1>
    %236 = arith.andi %234, %235 : vector<8x1xi1>
    %cst_98 = arith.constant 0.000000e+00 : f32
    %237 = vector.shape_cast %236 : vector<8x1xi1> to vector<8x1xi1>
    %238 = vector.broadcast %237 : vector<8x1xi1> to vector<8x128xi1>
    %239 = vector.broadcast %cst_98 : f32 to vector<8x128xf32>
    %240 = arith.select %238, %224, %239 : vector<8x128xi1>, vector<8x128xf32>
    %241 = arith.truncf %240 : vector<8x128xf32> to vector<8x128xbf16>
    %242 = tpu.concatenate %31, %56, %81, %111, %136, %161, %191, %216, %241 in 1 : vector<8x128xbf16>, vector<8x128xbf16>, vector<8x128xbf16>, vector<8x128xbf16>, vector<8x128xbf16>, vector<8x128xbf16>, vector<8x128xbf16>, vector<8x128xbf16>, vector<8x128xbf16> -> vector<8x1152xbf16>
    %c0_99 = arith.constant 0 : index
    %c0_100 = arith.constant 0 : index
    %243 = vector.load %arg10[%c0_99, %c0_100] : memref<1152x128xbf16, #tpu.memory_space<vmem>>, vector<1152x128xbf16>
    %cst_101 = arith.constant dense<0.000000e+00> : vector<8x128xf32>
    %244 = tpu.matmul %242, %243, %cst_101 {dimension_numbers = #tpu.dot_dimension_numbers<[1], [0], [0], [1], [0, 0, 1, 1], [], []>} : vector<8x1152xbf16>, vector<1152x128xbf16>, vector<8x128xf32> -> vector<8x128xf32>
    %c0_102 = arith.constant 0 : index
    %c0_103 = arith.constant 0 : index
    %c0_104 = arith.constant 0 : index
    %c0_105 = arith.constant 0 : index
    %245 = vector.load %arg11[%c0_102, %c0_103, %c0_104, %c0_105] : memref<1x1x8x128xf32, #tpu.memory_space<vmem>>, vector<1x1x8x128xf32>
    %246 = vector.shape_cast %245 : vector<1x1x8x128xf32> to vector<8x128xf32>
    %247 = vector.shape_cast %244 : vector<8x128xf32> to vector<1x1x8x128xf32>
    tpu.vector_store %arg11[%c0_102, %c0_103, %c0_104, %c0_105], %247 {strides = array<i32>} : memref<1x1x8x128xf32, #tpu.memory_space<vmem>>, vector<1x1x8x128xf32>,
    return
  }
  func.func @transform_0(%arg0: i32, %arg1: i32) -> (i32, i32, i32, i32) {
    %c2_i32 = arith.constant 2 : i32
    %0 = arith.muli %arg1, %c2_i32 : i32
    %c0_i32 = arith.constant 0 : i32
    %1 = arith.addi %0, %c0_i32 : i32
    %c0_i32_0 = arith.constant 0 : i32
    %c0_i32_1 = arith.constant 0 : i32
    %c0_i32_2 = arith.constant 0 : i32
    return %arg0, %1, %c0_i32_0, %c0_i32_1 : i32, i32, i32, i32
  }
  func.func @transform_1(%arg0: i32, %arg1: i32) -> (i32, i32, i32, i32) {
    %c2_i32 = arith.constant 2 : i32
    %0 = arith.muli %arg1, %c2_i32 : i32
    %c0_i32 = arith.constant 0 : i32
    %1 = arith.addi %0, %c0_i32 : i32
    %c0_i32_0 = arith.constant 0 : i32
    %c0_i32_1 = arith.constant 0 : i32
    %c0_i32_2 = arith.constant 0 : i32
    return %arg0, %1, %c0_i32_0, %c0_i32_1 : i32, i32, i32, i32
  }
  func.func @transform_2(%arg0: i32, %arg1: i32) -> (i32, i32, i32, i32) {
    %c2_i32 = arith.constant 2 : i32
    %0 = arith.muli %arg1, %c2_i32 : i32
    %c1_i32 = arith.constant 1 : i32
    %1 = arith.addi %0, %c1_i32 : i32
    %c0_i32 = arith.constant 0 : i32
    %c0_i32_0 = arith.constant 0 : i32
    %c0_i32_1 = arith.constant 0 : i32
    return %arg0, %1, %c0_i32, %c0_i32_0 : i32, i32, i32, i32
  }
  func.func @transform_3(%arg0: i32, %arg1: i32) -> (i32, i32, i32, i32) {
    %c2_i32 = arith.constant 2 : i32
    %0 = arith.muli %arg1, %c2_i32 : i32
    %c1_i32 = arith.constant 1 : i32
    %1 = arith.addi %0, %c1_i32 : i32
    %c0_i32 = arith.constant 0 : i32
    %c0_i32_0 = arith.constant 0 : i32
    %c0_i32_1 = arith.constant 0 : i32
    return %arg0, %1, %c0_i32, %c0_i32_0 : i32, i32, i32, i32
  }
  func.func @transform_4(%arg0: i32, %arg1: i32) -> (i32, i32, i32, i32) {
    %c2_i32 = arith.constant 2 : i32
    %0 = arith.muli %arg1, %c2_i32 : i32
    %c2_i32_0 = arith.constant 2 : i32
    %1 = arith.addi %0, %c2_i32_0 : i32
    %c0_i32 = arith.constant 0 : i32
    %c0_i32_1 = arith.constant 0 : i32
    %c0_i32_2 = arith.constant 0 : i32
    return %arg0, %1, %c0_i32, %c0_i32_1 : i32, i32, i32, i32
  }
  func.func @transform_5(%arg0: i32, %arg1: i32) -> (i32, i32, i32, i32) {
    %c2_i32 = arith.constant 2 : i32
    %0 = arith.muli %arg1, %c2_i32 : i32
    %c2_i32_0 = arith.constant 2 : i32
    %1 = arith.addi %0, %c2_i32_0 : i32
    %c0_i32 = arith.constant 0 : i32
    %c0_i32_1 = arith.constant 0 : i32
    %c0_i32_2 = arith.constant 0 : i32
    return %arg0, %1, %c0_i32, %c0_i32_1 : i32, i32, i32, i32
  }
  func.func @transform_6(%arg0: i32, %arg1: i32) -> (i32, i32) {
    %c0_i32 = arith.constant 0 : i32
    %c0_i32_0 = arith.constant 0 : i32
    %c0_i32_1 = arith.constant 0 : i32
    return %c0_i32, %c0_i32_0 : i32, i32
  }
  func.func @transform_7(%arg0: i32, %arg1: i32) -> (i32, i32) {
    %c0_i32 = arith.constant 0 : i32
    %c0_i32_0 = arith.constant 0 : i32
    %c0_i32_1 = arith.constant 0 : i32
    return %c0_i32, %c0_i32_0 : i32, i32
  }
  func.func @transform_8(%arg0: i32, %arg1: i32) -> (i32, i32) {
    %c0_i32 = arith.constant 0 : i32
    %c0_i32_0 = arith.constant 0 : i32
    %c0_i32_1 = arith.constant 0 : i32
    return %c0_i32, %c0_i32_0 : i32, i32
  }
  func.func @transform_9(%arg0: i32, %arg1: i32) -> (i32, i32, i32, i32) {
    %c0_i32 = arith.constant 0 : i32
    %c0_i32_0 = arith.constant 0 : i32
    %c0_i32_1 = arith.constant 0 : i32
    return %arg0, %arg1, %c0_i32, %c0_i32_0 : i32, i32, i32, i32
  }
}

module attributes {stable_mosaic.version = 11 : i64} {
  func.func @_stats_kernel(%arg0: i32, %arg1: memref<128x128xf32, #tpu.memory_space<vmem>>, %arg2: memref<1x128xf32, #tpu.memory_space<vmem>>, %arg3: memref<1x128xf32, #tpu.memory_space<vmem>>) attributes {dimension_semantics = [#tpu.dimension_semantics<arbitrary>], iteration_bounds = array<i64: 1>, scalar_prefetch = 0 : i64, scratch_operands = 0 : i64, tpu.core_type = #tpu.core_type<tc>, window_params = [{transform_indices = @transform_0, window_bounds = array<i64: 128, 128>}, {pipeline_mode = #tpu.pipeline_mode<synchronous>, transform_indices = @transform_1, window_bounds = array<i64: 1, 128>}, {pipeline_mode = #tpu.pipeline_mode<synchronous>, transform_indices = @transform_2, window_bounds = array<i64: 1, 128>}]} {
    %c0_i32 = arith.constant 0 : i32
    %0 = arith.cmpi eq, %arg0, %c0_i32 : i32
    %1 = arith.extui %0 : i1 to i32
    %c0_i32_0 = arith.constant 0 : i32
    %2 = arith.cmpi ne, %1, %c0_i32_0 : i32
    scf.if %2 {
      %cst_11 = arith.constant 0.000000e+00 : f32
      %15 = vector.broadcast %cst_11 : f32 to vector<1x128xf32>
      %c0_12 = arith.constant 0 : index
      %c0_13 = arith.constant 0 : index
      %16 = vector.load %arg2[%c0_12, %c0_13] : memref<1x128xf32, #tpu.memory_space<vmem>>, vector<1x128xf32>
      tpu.vector_store %arg2[%c0_12, %c0_13], %15 {strides = array<i32>} : memref<1x128xf32, #tpu.memory_space<vmem>>, vector<1x128xf32>,
      %cst_14 = arith.constant 0.000000e+00 : f32
      %17 = vector.broadcast %cst_14 : f32 to vector<1x128xf32>
      %c0_15 = arith.constant 0 : index
      %c0_16 = arith.constant 0 : index
      %18 = vector.load %arg3[%c0_15, %c0_16] : memref<1x128xf32, #tpu.memory_space<vmem>>, vector<1x128xf32>
      tpu.vector_store %arg3[%c0_15, %c0_16], %17 {strides = array<i32>} : memref<1x128xf32, #tpu.memory_space<vmem>>, vector<1x128xf32>,
    } else {
    }
    %c0 = arith.constant 0 : index
    %c0_1 = arith.constant 0 : index
    %3 = vector.load %arg1[%c0, %c0_1] : memref<128x128xf32, #tpu.memory_space<vmem>>, vector<128x128xf32>
    %c0_2 = arith.constant 0 : index
    %c0_3 = arith.constant 0 : index
    %4 = vector.load %arg2[%c0_2, %c0_3] : memref<1x128xf32, #tpu.memory_space<vmem>>, vector<1x128xf32>
    %cst = arith.constant dense<0.000000e+00> : vector<128xf32>
    %5 = vector.multi_reduction <add>, %3, %cst [0] : vector<128x128xf32> to vector<128xf32>
    %6 = vector.shape_cast %5 : vector<128xf32> to vector<1x128xf32>
    %7 = arith.addf %4, %6 : vector<1x128xf32>
    %c0_4 = arith.constant 0 : index
    %c0_5 = arith.constant 0 : index
    %8 = vector.load %arg2[%c0_4, %c0_5] : memref<1x128xf32, #tpu.memory_space<vmem>>, vector<1x128xf32>
    tpu.vector_store %arg2[%c0_4, %c0_5], %7 {strides = array<i32>} : memref<1x128xf32, #tpu.memory_space<vmem>>, vector<1x128xf32>,
    %c0_6 = arith.constant 0 : index
    %c0_7 = arith.constant 0 : index
    %9 = vector.load %arg3[%c0_6, %c0_7] : memref<1x128xf32, #tpu.memory_space<vmem>>, vector<1x128xf32>
    %10 = arith.mulf %3, %3 : vector<128x128xf32>
    %cst_8 = arith.constant dense<0.000000e+00> : vector<128xf32>
    %11 = vector.multi_reduction <add>, %10, %cst_8 [0] : vector<128x128xf32> to vector<128xf32>
    %12 = vector.shape_cast %11 : vector<128xf32> to vector<1x128xf32>
    %13 = arith.addf %9, %12 : vector<1x128xf32>
    %c0_9 = arith.constant 0 : index
    %c0_10 = arith.constant 0 : index
    %14 = vector.load %arg3[%c0_9, %c0_10] : memref<1x128xf32, #tpu.memory_space<vmem>>, vector<1x128xf32>
    tpu.vector_store %arg3[%c0_9, %c0_10], %13 {strides = array<i32>} : memref<1x128xf32, #tpu.memory_space<vmem>>, vector<1x128xf32>,
    return
  }
  func.func @transform_0(%arg0: i32) -> (i32, i32) {
    %c0_i32 = arith.constant 0 : i32
    %c0_i32_0 = arith.constant 0 : i32
    return %arg0, %c0_i32 : i32, i32
  }
  func.func @transform_1(%arg0: i32) -> (i32, i32) {
    %c0_i32 = arith.constant 0 : i32
    %c0_i32_0 = arith.constant 0 : i32
    %c0_i32_1 = arith.constant 0 : i32
    return %c0_i32, %c0_i32_0 : i32, i32
  }
  func.func @transform_2(%arg0: i32) -> (i32, i32) {
    %c0_i32 = arith.constant 0 : i32
    %c0_i32_0 = arith.constant 0 : i32
    %c0_i32_1 = arith.constant 0 : i32
    return %c0_i32, %c0_i32_0 : i32, i32
  }
}

module attributes {stable_mosaic.version = 11 : i64} {
  func.func @kernel(%arg0: i32, %arg1: i32, %arg2: memref<1x1x10x128xf32, #tpu.memory_space<vmem>>, %arg3: memref<1x1x10x128xf32, #tpu.memory_space<vmem>>, %arg4: memref<1x1x10x128xf32, #tpu.memory_space<vmem>>, %arg5: memref<1x128xf32, #tpu.memory_space<vmem>>, %arg6: memref<1x128xf32, #tpu.memory_space<vmem>>, %arg7: memref<1152x128xbf16, #tpu.memory_space<vmem>>, %arg8: memref<1x1x8x128xf32, #tpu.memory_space<vmem>>) attributes {dimension_semantics = [#tpu.dimension_semantics<parallel>, #tpu.dimension_semantics<parallel>], iteration_bounds = array<i64: 2, 8>, scalar_prefetch = 0 : i64, scratch_operands = 0 : i64, tpu.core_type = #tpu.core_type<tc>, window_params = [{transform_indices = @transform_0, window_bounds = array<i64: 1, 1, 10, 128>}, {transform_indices = @transform_1, window_bounds = array<i64: 1, 1, 10, 128>}, {transform_indices = @transform_2, window_bounds = array<i64: 1, 1, 10, 128>}, {pipeline_mode = #tpu.pipeline_mode<synchronous>, transform_indices = @transform_3, window_bounds = array<i64: 1, 128>}, {pipeline_mode = #tpu.pipeline_mode<synchronous>, transform_indices = @transform_4, window_bounds = array<i64: 1, 128>}, {pipeline_mode = #tpu.pipeline_mode<synchronous>, transform_indices = @transform_5, window_bounds = array<i64: 1152, 128>}, {transform_indices = @transform_6, window_bounds = array<i64: 1, 1, 8, 128>}]} {
    %c0 = arith.constant 0 : index
    %c0_0 = arith.constant 0 : index
    %0 = vector.load %arg5[%c0, %c0_0] : memref<1x128xf32, #tpu.memory_space<vmem>>, vector<1x128xf32>
    %c0_1 = arith.constant 0 : index
    %c0_2 = arith.constant 0 : index
    %1 = vector.load %arg6[%c0_1, %c0_2] : memref<1x128xf32, #tpu.memory_space<vmem>>, vector<1x128xf32>
    %c1_i32 = arith.constant 1 : i32
    %2 = arith.muli %arg1, %c1_i32 : i32
    %c0_i32 = arith.constant 0 : i32
    %3 = arith.addi %2, %c0_i32 : i32
    %c1_i32_3 = arith.constant 1 : i32
    %4 = arith.cmpi sge, %3, %c1_i32_3 : i32
    %c8_i32 = arith.constant 8 : i32
    %5 = arith.cmpi sle, %3, %c8_i32 : i32
    %6 = arith.andi %4, %5 : i1
    %c0_4 = arith.constant 0 : index
    %c0_5 = arith.constant 0 : index
    %c0_6 = arith.constant 0 : index
    %c0_7 = arith.constant 0 : index
    %7 = vector.load %arg2[%c0_4, %c0_5, %c0_6, %c0_7] : memref<1x1x10x128xf32, #tpu.memory_space<vmem>>, vector<1x1x8x128xf32>
    %8 = vector.shape_cast %7 : vector<1x1x8x128xf32> to vector<8x128xf32>
    %9 = vector.broadcast %0 : vector<1x128xf32> to vector<8x128xf32>
    %10 = arith.mulf %8, %9 : vector<8x128xf32>
    %11 = vector.broadcast %1 : vector<1x128xf32> to vector<8x128xf32>
    %12 = arith.addf %10, %11 : vector<8x128xf32>
    %cst = arith.constant 0.000000e+00 : f32
    %13 = vector.broadcast %cst : f32 to vector<8x128xf32>
    %14 = arith.maximumf %12, %13 : vector<8x128xf32>
    %15 = tpu.iota {dimensions = array<i32: 0>} : vector<8x1xi32>
    %c1_i32_8 = arith.constant 1 : i32
    %16 = vector.broadcast %c1_i32_8 : i32 to vector<8x1xi32>
    %17 = arith.muli %16, %15 : vector<8x1xi32>
    %c0_i32_9 = arith.constant 0 : i32
    %18 = vector.broadcast %c0_i32_9 : i32 to vector<8x1xi32>
    %19 = arith.addi %18, %17 : vector<8x1xi32>
    %c1_i32_10 = arith.constant 1 : i32
    %20 = vector.broadcast %c1_i32_10 : i32 to vector<8x1xi32>
    %21 = arith.cmpi sge, %19, %20 : vector<8x1xi32>
    %c8_i32_11 = arith.constant 8 : i32
    %22 = vector.broadcast %c8_i32_11 : i32 to vector<8x1xi32>
    %23 = arith.cmpi sle, %19, %22 : vector<8x1xi32>
    %24 = arith.andi %21, %23 : vector<8x1xi1>
    %25 = vector.broadcast %6 : i1 to vector<8x1xi1>
    %26 = arith.andi %24, %25 : vector<8x1xi1>
    %cst_12 = arith.constant 0.000000e+00 : f32
    %27 = vector.shape_cast %26 : vector<8x1xi1> to vector<8x1xi1>
    %28 = vector.broadcast %27 : vector<8x1xi1> to vector<8x128xi1>
    %29 = vector.broadcast %cst_12 : f32 to vector<8x128xf32>
    %30 = arith.select %28, %14, %29 : vector<8x128xi1>, vector<8x128xf32>
    %31 = arith.truncf %30 : vector<8x128xf32> to vector<8x128xbf16>
    %c0_13 = arith.constant 0 : index
    %c0_14 = arith.constant 0 : index
    %c1 = arith.constant 1 : index
    %c0_15 = arith.constant 0 : index
    %32 = vector.load %arg2[%c0_13, %c0_14, %c1, %c0_15] : memref<1x1x10x128xf32, #tpu.memory_space<vmem>>, vector<1x1x8x128xf32>
    %33 = vector.shape_cast %32 : vector<1x1x8x128xf32> to vector<8x128xf32>
    %34 = vector.broadcast %0 : vector<1x128xf32> to vector<8x128xf32>
    %35 = arith.mulf %33, %34 : vector<8x128xf32>
    %36 = vector.broadcast %1 : vector<1x128xf32> to vector<8x128xf32>
    %37 = arith.addf %35, %36 : vector<8x128xf32>
    %cst_16 = arith.constant 0.000000e+00 : f32
    %38 = vector.broadcast %cst_16 : f32 to vector<8x128xf32>
    %39 = arith.maximumf %37, %38 : vector<8x128xf32>
    %40 = tpu.iota {dimensions = array<i32: 0>} : vector<8x1xi32>
    %c1_i32_17 = arith.constant 1 : i32
    %41 = vector.broadcast %c1_i32_17 : i32 to vector<8x1xi32>
    %42 = arith.muli %41, %40 : vector<8x1xi32>
    %c1_i32_18 = arith.constant 1 : i32
    %43 = vector.broadcast %c1_i32_18 : i32 to vector<8x1xi32>
    %44 = arith.addi %43, %42 : vector<8x1xi32>
    %c1_i32_19 = arith.constant 1 : i32
    %45 = vector.broadcast %c1_i32_19 : i32 to vector<8x1xi32>
    %46 = arith.cmpi sge, %44, %45 : vector<8x1xi32>
    %c8_i32_20 = arith.constant 8 : i32
    %47 = vector.broadcast %c8_i32_20 : i32 to vector<8x1xi32>
    %48 = arith.cmpi sle, %44, %47 : vector<8x1xi32>
    %49 = arith.andi %46, %48 : vector<8x1xi1>
    %50 = vector.broadcast %6 : i1 to vector<8x1xi1>
    %51 = arith.andi %49, %50 : vector<8x1xi1>
    %cst_21 = arith.constant 0.000000e+00 : f32
    %52 = vector.shape_cast %51 : vector<8x1xi1> to vector<8x1xi1>
    %53 = vector.broadcast %52 : vector<8x1xi1> to vector<8x128xi1>
    %54 = vector.broadcast %cst_21 : f32 to vector<8x128xf32>
    %55 = arith.select %53, %39, %54 : vector<8x128xi1>, vector<8x128xf32>
    %56 = arith.truncf %55 : vector<8x128xf32> to vector<8x128xbf16>
    %c0_22 = arith.constant 0 : index
    %c0_23 = arith.constant 0 : index
    %c2 = arith.constant 2 : index
    %c0_24 = arith.constant 0 : index
    %57 = vector.load %arg2[%c0_22, %c0_23, %c2, %c0_24] : memref<1x1x10x128xf32, #tpu.memory_space<vmem>>, vector<1x1x8x128xf32>
    %58 = vector.shape_cast %57 : vector<1x1x8x128xf32> to vector<8x128xf32>
    %59 = vector.broadcast %0 : vector<1x128xf32> to vector<8x128xf32>
    %60 = arith.mulf %58, %59 : vector<8x128xf32>
    %61 = vector.broadcast %1 : vector<1x128xf32> to vector<8x128xf32>
    %62 = arith.addf %60, %61 : vector<8x128xf32>
    %cst_25 = arith.constant 0.000000e+00 : f32
    %63 = vector.broadcast %cst_25 : f32 to vector<8x128xf32>
    %64 = arith.maximumf %62, %63 : vector<8x128xf32>
    %65 = tpu.iota {dimensions = array<i32: 0>} : vector<8x1xi32>
    %c1_i32_26 = arith.constant 1 : i32
    %66 = vector.broadcast %c1_i32_26 : i32 to vector<8x1xi32>
    %67 = arith.muli %66, %65 : vector<8x1xi32>
    %c2_i32 = arith.constant 2 : i32
    %68 = vector.broadcast %c2_i32 : i32 to vector<8x1xi32>
    %69 = arith.addi %68, %67 : vector<8x1xi32>
    %c1_i32_27 = arith.constant 1 : i32
    %70 = vector.broadcast %c1_i32_27 : i32 to vector<8x1xi32>
    %71 = arith.cmpi sge, %69, %70 : vector<8x1xi32>
    %c8_i32_28 = arith.constant 8 : i32
    %72 = vector.broadcast %c8_i32_28 : i32 to vector<8x1xi32>
    %73 = arith.cmpi sle, %69, %72 : vector<8x1xi32>
    %74 = arith.andi %71, %73 : vector<8x1xi1>
    %75 = vector.broadcast %6 : i1 to vector<8x1xi1>
    %76 = arith.andi %74, %75 : vector<8x1xi1>
    %cst_29 = arith.constant 0.000000e+00 : f32
    %77 = vector.shape_cast %76 : vector<8x1xi1> to vector<8x1xi1>
    %78 = vector.broadcast %77 : vector<8x1xi1> to vector<8x128xi1>
    %79 = vector.broadcast %cst_29 : f32 to vector<8x128xf32>
    %80 = arith.select %78, %64, %79 : vector<8x128xi1>, vector<8x128xf32>
    %81 = arith.truncf %80 : vector<8x128xf32> to vector<8x128xbf16>
    %c1_i32_30 = arith.constant 1 : i32
    %82 = arith.muli %arg1, %c1_i32_30 : i32
    %c1_i32_31 = arith.constant 1 : i32
    %83 = arith.addi %82, %c1_i32_31 : i32
    %c1_i32_32 = arith.constant 1 : i32
    %84 = arith.cmpi sge, %83, %c1_i32_32 : i32
    %c8_i32_33 = arith.constant 8 : i32
    %85 = arith.cmpi sle, %83, %c8_i32_33 : i32
    %86 = arith.andi %84, %85 : i1
    %c0_34 = arith.constant 0 : index
    %c0_35 = arith.constant 0 : index
    %c0_36 = arith.constant 0 : index
    %c0_37 = arith.constant 0 : index
    %87 = vector.load %arg3[%c0_34, %c0_35, %c0_36, %c0_37] : memref<1x1x10x128xf32, #tpu.memory_space<vmem>>, vector<1x1x8x128xf32>
    %88 = vector.shape_cast %87 : vector<1x1x8x128xf32> to vector<8x128xf32>
    %89 = vector.broadcast %0 : vector<1x128xf32> to vector<8x128xf32>
    %90 = arith.mulf %88, %89 : vector<8x128xf32>
    %91 = vector.broadcast %1 : vector<1x128xf32> to vector<8x128xf32>
    %92 = arith.addf %90, %91 : vector<8x128xf32>
    %cst_38 = arith.constant 0.000000e+00 : f32
    %93 = vector.broadcast %cst_38 : f32 to vector<8x128xf32>
    %94 = arith.maximumf %92, %93 : vector<8x128xf32>
    %95 = tpu.iota {dimensions = array<i32: 0>} : vector<8x1xi32>
    %c1_i32_39 = arith.constant 1 : i32
    %96 = vector.broadcast %c1_i32_39 : i32 to vector<8x1xi32>
    %97 = arith.muli %96, %95 : vector<8x1xi32>
    %c0_i32_40 = arith.constant 0 : i32
    %98 = vector.broadcast %c0_i32_40 : i32 to vector<8x1xi32>
    %99 = arith.addi %98, %97 : vector<8x1xi32>
    %c1_i32_41 = arith.constant 1 : i32
    %100 = vector.broadcast %c1_i32_41 : i32 to vector<8x1xi32>
    %101 = arith.cmpi sge, %99, %100 : vector<8x1xi32>
    %c8_i32_42 = arith.constant 8 : i32
    %102 = vector.broadcast %c8_i32_42 : i32 to vector<8x1xi32>
    %103 = arith.cmpi sle, %99, %102 : vector<8x1xi32>
    %104 = arith.andi %101, %103 : vector<8x1xi1>
    %105 = vector.broadcast %86 : i1 to vector<8x1xi1>
    %106 = arith.andi %104, %105 : vector<8x1xi1>
    %cst_43 = arith.constant 0.000000e+00 : f32
    %107 = vector.shape_cast %106 : vector<8x1xi1> to vector<8x1xi1>
    %108 = vector.broadcast %107 : vector<8x1xi1> to vector<8x128xi1>
    %109 = vector.broadcast %cst_43 : f32 to vector<8x128xf32>
    %110 = arith.select %108, %94, %109 : vector<8x128xi1>, vector<8x128xf32>
    %111 = arith.truncf %110 : vector<8x128xf32> to vector<8x128xbf16>
    %c0_44 = arith.constant 0 : index
    %c0_45 = arith.constant 0 : index
    %c1_46 = arith.constant 1 : index
    %c0_47 = arith.constant 0 : index
    %112 = vector.load %arg3[%c0_44, %c0_45, %c1_46, %c0_47] : memref<1x1x10x128xf32, #tpu.memory_space<vmem>>, vector<1x1x8x128xf32>
    %113 = vector.shape_cast %112 : vector<1x1x8x128xf32> to vector<8x128xf32>
    %114 = vector.broadcast %0 : vector<1x128xf32> to vector<8x128xf32>
    %115 = arith.mulf %113, %114 : vector<8x128xf32>
    %116 = vector.broadcast %1 : vector<1x128xf32> to vector<8x128xf32>
    %117 = arith.addf %115, %116 : vector<8x128xf32>
    %cst_48 = arith.constant 0.000000e+00 : f32
    %118 = vector.broadcast %cst_48 : f32 to vector<8x128xf32>
    %119 = arith.maximumf %117, %118 : vector<8x128xf32>
    %120 = tpu.iota {dimensions = array<i32: 0>} : vector<8x1xi32>
    %c1_i32_49 = arith.constant 1 : i32
    %121 = vector.broadcast %c1_i32_49 : i32 to vector<8x1xi32>
    %122 = arith.muli %121, %120 : vector<8x1xi32>
    %c1_i32_50 = arith.constant 1 : i32
    %123 = vector.broadcast %c1_i32_50 : i32 to vector<8x1xi32>
    %124 = arith.addi %123, %122 : vector<8x1xi32>
    %c1_i32_51 = arith.constant 1 : i32
    %125 = vector.broadcast %c1_i32_51 : i32 to vector<8x1xi32>
    %126 = arith.cmpi sge, %124, %125 : vector<8x1xi32>
    %c8_i32_52 = arith.constant 8 : i32
    %127 = vector.broadcast %c8_i32_52 : i32 to vector<8x1xi32>
    %128 = arith.cmpi sle, %124, %127 : vector<8x1xi32>
    %129 = arith.andi %126, %128 : vector<8x1xi1>
    %130 = vector.broadcast %86 : i1 to vector<8x1xi1>
    %131 = arith.andi %129, %130 : vector<8x1xi1>
    %cst_53 = arith.constant 0.000000e+00 : f32
    %132 = vector.shape_cast %131 : vector<8x1xi1> to vector<8x1xi1>
    %133 = vector.broadcast %132 : vector<8x1xi1> to vector<8x128xi1>
    %134 = vector.broadcast %cst_53 : f32 to vector<8x128xf32>
    %135 = arith.select %133, %119, %134 : vector<8x128xi1>, vector<8x128xf32>
    %136 = arith.truncf %135 : vector<8x128xf32> to vector<8x128xbf16>
    %c0_54 = arith.constant 0 : index
    %c0_55 = arith.constant 0 : index
    %c2_56 = arith.constant 2 : index
    %c0_57 = arith.constant 0 : index
    %137 = vector.load %arg3[%c0_54, %c0_55, %c2_56, %c0_57] : memref<1x1x10x128xf32, #tpu.memory_space<vmem>>, vector<1x1x8x128xf32>
    %138 = vector.shape_cast %137 : vector<1x1x8x128xf32> to vector<8x128xf32>
    %139 = vector.broadcast %0 : vector<1x128xf32> to vector<8x128xf32>
    %140 = arith.mulf %138, %139 : vector<8x128xf32>
    %141 = vector.broadcast %1 : vector<1x128xf32> to vector<8x128xf32>
    %142 = arith.addf %140, %141 : vector<8x128xf32>
    %cst_58 = arith.constant 0.000000e+00 : f32
    %143 = vector.broadcast %cst_58 : f32 to vector<8x128xf32>
    %144 = arith.maximumf %142, %143 : vector<8x128xf32>
    %145 = tpu.iota {dimensions = array<i32: 0>} : vector<8x1xi32>
    %c1_i32_59 = arith.constant 1 : i32
    %146 = vector.broadcast %c1_i32_59 : i32 to vector<8x1xi32>
    %147 = arith.muli %146, %145 : vector<8x1xi32>
    %c2_i32_60 = arith.constant 2 : i32
    %148 = vector.broadcast %c2_i32_60 : i32 to vector<8x1xi32>
    %149 = arith.addi %148, %147 : vector<8x1xi32>
    %c1_i32_61 = arith.constant 1 : i32
    %150 = vector.broadcast %c1_i32_61 : i32 to vector<8x1xi32>
    %151 = arith.cmpi sge, %149, %150 : vector<8x1xi32>
    %c8_i32_62 = arith.constant 8 : i32
    %152 = vector.broadcast %c8_i32_62 : i32 to vector<8x1xi32>
    %153 = arith.cmpi sle, %149, %152 : vector<8x1xi32>
    %154 = arith.andi %151, %153 : vector<8x1xi1>
    %155 = vector.broadcast %86 : i1 to vector<8x1xi1>
    %156 = arith.andi %154, %155 : vector<8x1xi1>
    %cst_63 = arith.constant 0.000000e+00 : f32
    %157 = vector.shape_cast %156 : vector<8x1xi1> to vector<8x1xi1>
    %158 = vector.broadcast %157 : vector<8x1xi1> to vector<8x128xi1>
    %159 = vector.broadcast %cst_63 : f32 to vector<8x128xf32>
    %160 = arith.select %158, %144, %159 : vector<8x128xi1>, vector<8x128xf32>
    %161 = arith.truncf %160 : vector<8x128xf32> to vector<8x128xbf16>
    %c1_i32_64 = arith.constant 1 : i32
    %162 = arith.muli %arg1, %c1_i32_64 : i32
    %c2_i32_65 = arith.constant 2 : i32
    %163 = arith.addi %162, %c2_i32_65 : i32
    %c1_i32_66 = arith.constant 1 : i32
    %164 = arith.cmpi sge, %163, %c1_i32_66 : i32
    %c8_i32_67 = arith.constant 8 : i32
    %165 = arith.cmpi sle, %163, %c8_i32_67 : i32
    %166 = arith.andi %164, %165 : i1
    %c0_68 = arith.constant 0 : index
    %c0_69 = arith.constant 0 : index
    %c0_70 = arith.constant 0 : index
    %c0_71 = arith.constant 0 : index
    %167 = vector.load %arg4[%c0_68, %c0_69, %c0_70, %c0_71] : memref<1x1x10x128xf32, #tpu.memory_space<vmem>>, vector<1x1x8x128xf32>
    %168 = vector.shape_cast %167 : vector<1x1x8x128xf32> to vector<8x128xf32>
    %169 = vector.broadcast %0 : vector<1x128xf32> to vector<8x128xf32>
    %170 = arith.mulf %168, %169 : vector<8x128xf32>
    %171 = vector.broadcast %1 : vector<1x128xf32> to vector<8x128xf32>
    %172 = arith.addf %170, %171 : vector<8x128xf32>
    %cst_72 = arith.constant 0.000000e+00 : f32
    %173 = vector.broadcast %cst_72 : f32 to vector<8x128xf32>
    %174 = arith.maximumf %172, %173 : vector<8x128xf32>
    %175 = tpu.iota {dimensions = array<i32: 0>} : vector<8x1xi32>
    %c1_i32_73 = arith.constant 1 : i32
    %176 = vector.broadcast %c1_i32_73 : i32 to vector<8x1xi32>
    %177 = arith.muli %176, %175 : vector<8x1xi32>
    %c0_i32_74 = arith.constant 0 : i32
    %178 = vector.broadcast %c0_i32_74 : i32 to vector<8x1xi32>
    %179 = arith.addi %178, %177 : vector<8x1xi32>
    %c1_i32_75 = arith.constant 1 : i32
    %180 = vector.broadcast %c1_i32_75 : i32 to vector<8x1xi32>
    %181 = arith.cmpi sge, %179, %180 : vector<8x1xi32>
    %c8_i32_76 = arith.constant 8 : i32
    %182 = vector.broadcast %c8_i32_76 : i32 to vector<8x1xi32>
    %183 = arith.cmpi sle, %179, %182 : vector<8x1xi32>
    %184 = arith.andi %181, %183 : vector<8x1xi1>
    %185 = vector.broadcast %166 : i1 to vector<8x1xi1>
    %186 = arith.andi %184, %185 : vector<8x1xi1>
    %cst_77 = arith.constant 0.000000e+00 : f32
    %187 = vector.shape_cast %186 : vector<8x1xi1> to vector<8x1xi1>
    %188 = vector.broadcast %187 : vector<8x1xi1> to vector<8x128xi1>
    %189 = vector.broadcast %cst_77 : f32 to vector<8x128xf32>
    %190 = arith.select %188, %174, %189 : vector<8x128xi1>, vector<8x128xf32>
    %191 = arith.truncf %190 : vector<8x128xf32> to vector<8x128xbf16>
    %c0_78 = arith.constant 0 : index
    %c0_79 = arith.constant 0 : index
    %c1_80 = arith.constant 1 : index
    %c0_81 = arith.constant 0 : index
    %192 = vector.load %arg4[%c0_78, %c0_79, %c1_80, %c0_81] : memref<1x1x10x128xf32, #tpu.memory_space<vmem>>, vector<1x1x8x128xf32>
    %193 = vector.shape_cast %192 : vector<1x1x8x128xf32> to vector<8x128xf32>
    %194 = vector.broadcast %0 : vector<1x128xf32> to vector<8x128xf32>
    %195 = arith.mulf %193, %194 : vector<8x128xf32>
    %196 = vector.broadcast %1 : vector<1x128xf32> to vector<8x128xf32>
    %197 = arith.addf %195, %196 : vector<8x128xf32>
    %cst_82 = arith.constant 0.000000e+00 : f32
    %198 = vector.broadcast %cst_82 : f32 to vector<8x128xf32>
    %199 = arith.maximumf %197, %198 : vector<8x128xf32>
    %200 = tpu.iota {dimensions = array<i32: 0>} : vector<8x1xi32>
    %c1_i32_83 = arith.constant 1 : i32
    %201 = vector.broadcast %c1_i32_83 : i32 to vector<8x1xi32>
    %202 = arith.muli %201, %200 : vector<8x1xi32>
    %c1_i32_84 = arith.constant 1 : i32
    %203 = vector.broadcast %c1_i32_84 : i32 to vector<8x1xi32>
    %204 = arith.addi %203, %202 : vector<8x1xi32>
    %c1_i32_85 = arith.constant 1 : i32
    %205 = vector.broadcast %c1_i32_85 : i32 to vector<8x1xi32>
    %206 = arith.cmpi sge, %204, %205 : vector<8x1xi32>
    %c8_i32_86 = arith.constant 8 : i32
    %207 = vector.broadcast %c8_i32_86 : i32 to vector<8x1xi32>
    %208 = arith.cmpi sle, %204, %207 : vector<8x1xi32>
    %209 = arith.andi %206, %208 : vector<8x1xi1>
    %210 = vector.broadcast %166 : i1 to vector<8x1xi1>
    %211 = arith.andi %209, %210 : vector<8x1xi1>
    %cst_87 = arith.constant 0.000000e+00 : f32
    %212 = vector.shape_cast %211 : vector<8x1xi1> to vector<8x1xi1>
    %213 = vector.broadcast %212 : vector<8x1xi1> to vector<8x128xi1>
    %214 = vector.broadcast %cst_87 : f32 to vector<8x128xf32>
    %215 = arith.select %213, %199, %214 : vector<8x128xi1>, vector<8x128xf32>
    %216 = arith.truncf %215 : vector<8x128xf32> to vector<8x128xbf16>
    %c0_88 = arith.constant 0 : index
    %c0_89 = arith.constant 0 : index
    %c2_90 = arith.constant 2 : index
    %c0_91 = arith.constant 0 : index
    %217 = vector.load %arg4[%c0_88, %c0_89, %c2_90, %c0_91] : memref<1x1x10x128xf32, #tpu.memory_space<vmem>>, vector<1x1x8x128xf32>
    %218 = vector.shape_cast %217 : vector<1x1x8x128xf32> to vector<8x128xf32>
    %219 = vector.broadcast %0 : vector<1x128xf32> to vector<8x128xf32>
    %220 = arith.mulf %218, %219 : vector<8x128xf32>
    %221 = vector.broadcast %1 : vector<1x128xf32> to vector<8x128xf32>
    %222 = arith.addf %220, %221 : vector<8x128xf32>
    %cst_92 = arith.constant 0.000000e+00 : f32
    %223 = vector.broadcast %cst_92 : f32 to vector<8x128xf32>
    %224 = arith.maximumf %222, %223 : vector<8x128xf32>
    %225 = tpu.iota {dimensions = array<i32: 0>} : vector<8x1xi32>
    %c1_i32_93 = arith.constant 1 : i32
    %226 = vector.broadcast %c1_i32_93 : i32 to vector<8x1xi32>
    %227 = arith.muli %226, %225 : vector<8x1xi32>
    %c2_i32_94 = arith.constant 2 : i32
    %228 = vector.broadcast %c2_i32_94 : i32 to vector<8x1xi32>
    %229 = arith.addi %228, %227 : vector<8x1xi32>
    %c1_i32_95 = arith.constant 1 : i32
    %230 = vector.broadcast %c1_i32_95 : i32 to vector<8x1xi32>
    %231 = arith.cmpi sge, %229, %230 : vector<8x1xi32>
    %c8_i32_96 = arith.constant 8 : i32
    %232 = vector.broadcast %c8_i32_96 : i32 to vector<8x1xi32>
    %233 = arith.cmpi sle, %229, %232 : vector<8x1xi32>
    %234 = arith.andi %231, %233 : vector<8x1xi1>
    %235 = vector.broadcast %166 : i1 to vector<8x1xi1>
    %236 = arith.andi %234, %235 : vector<8x1xi1>
    %cst_97 = arith.constant 0.000000e+00 : f32
    %237 = vector.shape_cast %236 : vector<8x1xi1> to vector<8x1xi1>
    %238 = vector.broadcast %237 : vector<8x1xi1> to vector<8x128xi1>
    %239 = vector.broadcast %cst_97 : f32 to vector<8x128xf32>
    %240 = arith.select %238, %224, %239 : vector<8x128xi1>, vector<8x128xf32>
    %241 = arith.truncf %240 : vector<8x128xf32> to vector<8x128xbf16>
    %242 = tpu.concatenate %31, %56, %81, %111, %136, %161, %191, %216, %241 in 1 : vector<8x128xbf16>, vector<8x128xbf16>, vector<8x128xbf16>, vector<8x128xbf16>, vector<8x128xbf16>, vector<8x128xbf16>, vector<8x128xbf16>, vector<8x128xbf16>, vector<8x128xbf16> -> vector<8x1152xbf16>
    %c0_98 = arith.constant 0 : index
    %c0_99 = arith.constant 0 : index
    %243 = vector.load %arg7[%c0_98, %c0_99] : memref<1152x128xbf16, #tpu.memory_space<vmem>>, vector<1152x128xbf16>
    %cst_100 = arith.constant dense<0.000000e+00> : vector<8x128xf32>
    %244 = tpu.matmul %242, %243, %cst_100 {dimension_numbers = #tpu.dot_dimension_numbers<[1], [0], [0], [1], [0, 0, 1, 1], [], []>} : vector<8x1152xbf16>, vector<1152x128xbf16>, vector<8x128xf32> -> vector<8x128xf32>
    %c0_101 = arith.constant 0 : index
    %c0_102 = arith.constant 0 : index
    %c0_103 = arith.constant 0 : index
    %c0_104 = arith.constant 0 : index
    %245 = vector.load %arg8[%c0_101, %c0_102, %c0_103, %c0_104] : memref<1x1x8x128xf32, #tpu.memory_space<vmem>>, vector<1x1x8x128xf32>
    %246 = vector.shape_cast %245 : vector<1x1x8x128xf32> to vector<8x128xf32>
    %247 = vector.shape_cast %244 : vector<8x128xf32> to vector<1x1x8x128xf32>
    tpu.vector_store %arg8[%c0_101, %c0_102, %c0_103, %c0_104], %247 {strides = array<i32>} : memref<1x1x8x128xf32, #tpu.memory_space<vmem>>, vector<1x1x8x128xf32>,
    return
  }
  func.func @transform_0(%arg0: i32, %arg1: i32) -> (i32, i32, i32, i32) {
    %c1_i32 = arith.constant 1 : i32
    %0 = arith.muli %arg1, %c1_i32 : i32
    %c0_i32 = arith.constant 0 : i32
    %1 = arith.addi %0, %c0_i32 : i32
    %c0_i32_0 = arith.constant 0 : i32
    %c0_i32_1 = arith.constant 0 : i32
    %c0_i32_2 = arith.constant 0 : i32
    return %arg0, %1, %c0_i32_0, %c0_i32_1 : i32, i32, i32, i32
  }
  func.func @transform_1(%arg0: i32, %arg1: i32) -> (i32, i32, i32, i32) {
    %c1_i32 = arith.constant 1 : i32
    %0 = arith.muli %arg1, %c1_i32 : i32
    %c1_i32_0 = arith.constant 1 : i32
    %1 = arith.addi %0, %c1_i32_0 : i32
    %c0_i32 = arith.constant 0 : i32
    %c0_i32_1 = arith.constant 0 : i32
    %c0_i32_2 = arith.constant 0 : i32
    return %arg0, %1, %c0_i32, %c0_i32_1 : i32, i32, i32, i32
  }
  func.func @transform_2(%arg0: i32, %arg1: i32) -> (i32, i32, i32, i32) {
    %c1_i32 = arith.constant 1 : i32
    %0 = arith.muli %arg1, %c1_i32 : i32
    %c2_i32 = arith.constant 2 : i32
    %1 = arith.addi %0, %c2_i32 : i32
    %c0_i32 = arith.constant 0 : i32
    %c0_i32_0 = arith.constant 0 : i32
    %c0_i32_1 = arith.constant 0 : i32
    return %arg0, %1, %c0_i32, %c0_i32_0 : i32, i32, i32, i32
  }
  func.func @transform_3(%arg0: i32, %arg1: i32) -> (i32, i32) {
    %c0_i32 = arith.constant 0 : i32
    %c0_i32_0 = arith.constant 0 : i32
    %c0_i32_1 = arith.constant 0 : i32
    return %c0_i32, %c0_i32_0 : i32, i32
  }
  func.func @transform_4(%arg0: i32, %arg1: i32) -> (i32, i32) {
    %c0_i32 = arith.constant 0 : i32
    %c0_i32_0 = arith.constant 0 : i32
    %c0_i32_1 = arith.constant 0 : i32
    return %c0_i32, %c0_i32_0 : i32, i32
  }
  func.func @transform_5(%arg0: i32, %arg1: i32) -> (i32, i32) {
    %c0_i32 = arith.constant 0 : i32
    %c0_i32_0 = arith.constant 0 : i32
    %c0_i32_1 = arith.constant 0 : i32
    return %c0_i32, %c0_i32_0 : i32, i32
  }
  func.func @transform_6(%arg0: i32, %arg1: i32) -> (i32, i32, i32, i32) {
    %c0_i32 = arith.constant 0 : i32
    %c0_i32_0 = arith.constant 0 : i32
    %c0_i32_1 = arith.constant 0 : i32
    return %arg0, %arg1, %c0_i32, %c0_i32_0 : i32, i32, i32, i32
  }
}

module attributes {stable_mosaic.version = 11 : i64} {
  func.func @kernel(%arg0: i32, %arg1: i32, %arg2: memref<1x1x10x128xf32, #tpu.memory_space<vmem>>, %arg3: memref<1x1x10x128xf32, #tpu.memory_space<vmem>>, %arg4: memref<1x1x10x128xf32, #tpu.memory_space<vmem>>, %arg5: memref<1x128xf32, #tpu.memory_space<vmem>>, %arg6: memref<1x128xf32, #tpu.memory_space<vmem>>, %arg7: memref<1152x128xbf16, #tpu.memory_space<vmem>>, %arg8: memref<1x1x8x128xf32, #tpu.memory_space<vmem>>, %arg9: memref<128x128xbf16, #tpu.memory_space<vmem>>, %arg10: memref<1x1x8x128xf32, #tpu.memory_space<vmem>>) attributes {dimension_semantics = [#tpu.dimension_semantics<parallel>, #tpu.dimension_semantics<parallel>], iteration_bounds = array<i64: 2, 8>, scalar_prefetch = 0 : i64, scratch_operands = 0 : i64, tpu.core_type = #tpu.core_type<tc>, window_params = [{transform_indices = @transform_0, window_bounds = array<i64: 1, 1, 10, 128>}, {transform_indices = @transform_1, window_bounds = array<i64: 1, 1, 10, 128>}, {transform_indices = @transform_2, window_bounds = array<i64: 1, 1, 10, 128>}, {pipeline_mode = #tpu.pipeline_mode<synchronous>, transform_indices = @transform_3, window_bounds = array<i64: 1, 128>}, {pipeline_mode = #tpu.pipeline_mode<synchronous>, transform_indices = @transform_4, window_bounds = array<i64: 1, 128>}, {pipeline_mode = #tpu.pipeline_mode<synchronous>, transform_indices = @transform_5, window_bounds = array<i64: 1152, 128>}, {transform_indices = @transform_6, window_bounds = array<i64: 1, 1, 8, 128>}, {pipeline_mode = #tpu.pipeline_mode<synchronous>, transform_indices = @transform_7, window_bounds = array<i64: 128, 128>}, {transform_indices = @transform_8, window_bounds = array<i64: 1, 1, 8, 128>}]} {
    %c0 = arith.constant 0 : index
    %c0_0 = arith.constant 0 : index
    %0 = vector.load %arg5[%c0, %c0_0] : memref<1x128xf32, #tpu.memory_space<vmem>>, vector<1x128xf32>
    %c0_1 = arith.constant 0 : index
    %c0_2 = arith.constant 0 : index
    %1 = vector.load %arg6[%c0_1, %c0_2] : memref<1x128xf32, #tpu.memory_space<vmem>>, vector<1x128xf32>
    %c1_i32 = arith.constant 1 : i32
    %2 = arith.muli %arg1, %c1_i32 : i32
    %c0_i32 = arith.constant 0 : i32
    %3 = arith.addi %2, %c0_i32 : i32
    %c1_i32_3 = arith.constant 1 : i32
    %4 = arith.cmpi sge, %3, %c1_i32_3 : i32
    %c8_i32 = arith.constant 8 : i32
    %5 = arith.cmpi sle, %3, %c8_i32 : i32
    %6 = arith.andi %4, %5 : i1
    %c0_4 = arith.constant 0 : index
    %c0_5 = arith.constant 0 : index
    %c0_6 = arith.constant 0 : index
    %c0_7 = arith.constant 0 : index
    %7 = vector.load %arg2[%c0_4, %c0_5, %c0_6, %c0_7] : memref<1x1x10x128xf32, #tpu.memory_space<vmem>>, vector<1x1x8x128xf32>
    %8 = vector.shape_cast %7 : vector<1x1x8x128xf32> to vector<8x128xf32>
    %9 = vector.broadcast %0 : vector<1x128xf32> to vector<8x128xf32>
    %10 = arith.mulf %8, %9 : vector<8x128xf32>
    %11 = vector.broadcast %1 : vector<1x128xf32> to vector<8x128xf32>
    %12 = arith.addf %10, %11 : vector<8x128xf32>
    %cst = arith.constant 0.000000e+00 : f32
    %13 = vector.broadcast %cst : f32 to vector<8x128xf32>
    %14 = arith.maximumf %12, %13 : vector<8x128xf32>
    %15 = tpu.iota {dimensions = array<i32: 0>} : vector<8x1xi32>
    %c1_i32_8 = arith.constant 1 : i32
    %16 = vector.broadcast %c1_i32_8 : i32 to vector<8x1xi32>
    %17 = arith.muli %16, %15 : vector<8x1xi32>
    %c0_i32_9 = arith.constant 0 : i32
    %18 = vector.broadcast %c0_i32_9 : i32 to vector<8x1xi32>
    %19 = arith.addi %18, %17 : vector<8x1xi32>
    %c1_i32_10 = arith.constant 1 : i32
    %20 = vector.broadcast %c1_i32_10 : i32 to vector<8x1xi32>
    %21 = arith.cmpi sge, %19, %20 : vector<8x1xi32>
    %c8_i32_11 = arith.constant 8 : i32
    %22 = vector.broadcast %c8_i32_11 : i32 to vector<8x1xi32>
    %23 = arith.cmpi sle, %19, %22 : vector<8x1xi32>
    %24 = arith.andi %21, %23 : vector<8x1xi1>
    %25 = vector.broadcast %6 : i1 to vector<8x1xi1>
    %26 = arith.andi %24, %25 : vector<8x1xi1>
    %cst_12 = arith.constant 0.000000e+00 : f32
    %27 = vector.shape_cast %26 : vector<8x1xi1> to vector<8x1xi1>
    %28 = vector.broadcast %27 : vector<8x1xi1> to vector<8x128xi1>
    %29 = vector.broadcast %cst_12 : f32 to vector<8x128xf32>
    %30 = arith.select %28, %14, %29 : vector<8x128xi1>, vector<8x128xf32>
    %31 = arith.truncf %30 : vector<8x128xf32> to vector<8x128xbf16>
    %c0_13 = arith.constant 0 : index
    %c0_14 = arith.constant 0 : index
    %c1 = arith.constant 1 : index
    %c0_15 = arith.constant 0 : index
    %32 = vector.load %arg2[%c0_13, %c0_14, %c1, %c0_15] : memref<1x1x10x128xf32, #tpu.memory_space<vmem>>, vector<1x1x8x128xf32>
    %33 = vector.shape_cast %32 : vector<1x1x8x128xf32> to vector<8x128xf32>
    %34 = vector.broadcast %0 : vector<1x128xf32> to vector<8x128xf32>
    %35 = arith.mulf %33, %34 : vector<8x128xf32>
    %36 = vector.broadcast %1 : vector<1x128xf32> to vector<8x128xf32>
    %37 = arith.addf %35, %36 : vector<8x128xf32>
    %cst_16 = arith.constant 0.000000e+00 : f32
    %38 = vector.broadcast %cst_16 : f32 to vector<8x128xf32>
    %39 = arith.maximumf %37, %38 : vector<8x128xf32>
    %40 = tpu.iota {dimensions = array<i32: 0>} : vector<8x1xi32>
    %c1_i32_17 = arith.constant 1 : i32
    %41 = vector.broadcast %c1_i32_17 : i32 to vector<8x1xi32>
    %42 = arith.muli %41, %40 : vector<8x1xi32>
    %c1_i32_18 = arith.constant 1 : i32
    %43 = vector.broadcast %c1_i32_18 : i32 to vector<8x1xi32>
    %44 = arith.addi %43, %42 : vector<8x1xi32>
    %c1_i32_19 = arith.constant 1 : i32
    %45 = vector.broadcast %c1_i32_19 : i32 to vector<8x1xi32>
    %46 = arith.cmpi sge, %44, %45 : vector<8x1xi32>
    %c8_i32_20 = arith.constant 8 : i32
    %47 = vector.broadcast %c8_i32_20 : i32 to vector<8x1xi32>
    %48 = arith.cmpi sle, %44, %47 : vector<8x1xi32>
    %49 = arith.andi %46, %48 : vector<8x1xi1>
    %50 = vector.broadcast %6 : i1 to vector<8x1xi1>
    %51 = arith.andi %49, %50 : vector<8x1xi1>
    %cst_21 = arith.constant 0.000000e+00 : f32
    %52 = vector.shape_cast %51 : vector<8x1xi1> to vector<8x1xi1>
    %53 = vector.broadcast %52 : vector<8x1xi1> to vector<8x128xi1>
    %54 = vector.broadcast %cst_21 : f32 to vector<8x128xf32>
    %55 = arith.select %53, %39, %54 : vector<8x128xi1>, vector<8x128xf32>
    %56 = arith.truncf %55 : vector<8x128xf32> to vector<8x128xbf16>
    %c0_22 = arith.constant 0 : index
    %c0_23 = arith.constant 0 : index
    %c2 = arith.constant 2 : index
    %c0_24 = arith.constant 0 : index
    %57 = vector.load %arg2[%c0_22, %c0_23, %c2, %c0_24] : memref<1x1x10x128xf32, #tpu.memory_space<vmem>>, vector<1x1x8x128xf32>
    %58 = vector.shape_cast %57 : vector<1x1x8x128xf32> to vector<8x128xf32>
    %59 = vector.broadcast %0 : vector<1x128xf32> to vector<8x128xf32>
    %60 = arith.mulf %58, %59 : vector<8x128xf32>
    %61 = vector.broadcast %1 : vector<1x128xf32> to vector<8x128xf32>
    %62 = arith.addf %60, %61 : vector<8x128xf32>
    %cst_25 = arith.constant 0.000000e+00 : f32
    %63 = vector.broadcast %cst_25 : f32 to vector<8x128xf32>
    %64 = arith.maximumf %62, %63 : vector<8x128xf32>
    %65 = tpu.iota {dimensions = array<i32: 0>} : vector<8x1xi32>
    %c1_i32_26 = arith.constant 1 : i32
    %66 = vector.broadcast %c1_i32_26 : i32 to vector<8x1xi32>
    %67 = arith.muli %66, %65 : vector<8x1xi32>
    %c2_i32 = arith.constant 2 : i32
    %68 = vector.broadcast %c2_i32 : i32 to vector<8x1xi32>
    %69 = arith.addi %68, %67 : vector<8x1xi32>
    %c1_i32_27 = arith.constant 1 : i32
    %70 = vector.broadcast %c1_i32_27 : i32 to vector<8x1xi32>
    %71 = arith.cmpi sge, %69, %70 : vector<8x1xi32>
    %c8_i32_28 = arith.constant 8 : i32
    %72 = vector.broadcast %c8_i32_28 : i32 to vector<8x1xi32>
    %73 = arith.cmpi sle, %69, %72 : vector<8x1xi32>
    %74 = arith.andi %71, %73 : vector<8x1xi1>
    %75 = vector.broadcast %6 : i1 to vector<8x1xi1>
    %76 = arith.andi %74, %75 : vector<8x1xi1>
    %cst_29 = arith.constant 0.000000e+00 : f32
    %77 = vector.shape_cast %76 : vector<8x1xi1> to vector<8x1xi1>
    %78 = vector.broadcast %77 : vector<8x1xi1> to vector<8x128xi1>
    %79 = vector.broadcast %cst_29 : f32 to vector<8x128xf32>
    %80 = arith.select %78, %64, %79 : vector<8x128xi1>, vector<8x128xf32>
    %81 = arith.truncf %80 : vector<8x128xf32> to vector<8x128xbf16>
    %c1_i32_30 = arith.constant 1 : i32
    %82 = arith.muli %arg1, %c1_i32_30 : i32
    %c1_i32_31 = arith.constant 1 : i32
    %83 = arith.addi %82, %c1_i32_31 : i32
    %c1_i32_32 = arith.constant 1 : i32
    %84 = arith.cmpi sge, %83, %c1_i32_32 : i32
    %c8_i32_33 = arith.constant 8 : i32
    %85 = arith.cmpi sle, %83, %c8_i32_33 : i32
    %86 = arith.andi %84, %85 : i1
    %c0_34 = arith.constant 0 : index
    %c0_35 = arith.constant 0 : index
    %c0_36 = arith.constant 0 : index
    %c0_37 = arith.constant 0 : index
    %87 = vector.load %arg3[%c0_34, %c0_35, %c0_36, %c0_37] : memref<1x1x10x128xf32, #tpu.memory_space<vmem>>, vector<1x1x8x128xf32>
    %88 = vector.shape_cast %87 : vector<1x1x8x128xf32> to vector<8x128xf32>
    %89 = vector.broadcast %0 : vector<1x128xf32> to vector<8x128xf32>
    %90 = arith.mulf %88, %89 : vector<8x128xf32>
    %91 = vector.broadcast %1 : vector<1x128xf32> to vector<8x128xf32>
    %92 = arith.addf %90, %91 : vector<8x128xf32>
    %cst_38 = arith.constant 0.000000e+00 : f32
    %93 = vector.broadcast %cst_38 : f32 to vector<8x128xf32>
    %94 = arith.maximumf %92, %93 : vector<8x128xf32>
    %95 = tpu.iota {dimensions = array<i32: 0>} : vector<8x1xi32>
    %c1_i32_39 = arith.constant 1 : i32
    %96 = vector.broadcast %c1_i32_39 : i32 to vector<8x1xi32>
    %97 = arith.muli %96, %95 : vector<8x1xi32>
    %c0_i32_40 = arith.constant 0 : i32
    %98 = vector.broadcast %c0_i32_40 : i32 to vector<8x1xi32>
    %99 = arith.addi %98, %97 : vector<8x1xi32>
    %c1_i32_41 = arith.constant 1 : i32
    %100 = vector.broadcast %c1_i32_41 : i32 to vector<8x1xi32>
    %101 = arith.cmpi sge, %99, %100 : vector<8x1xi32>
    %c8_i32_42 = arith.constant 8 : i32
    %102 = vector.broadcast %c8_i32_42 : i32 to vector<8x1xi32>
    %103 = arith.cmpi sle, %99, %102 : vector<8x1xi32>
    %104 = arith.andi %101, %103 : vector<8x1xi1>
    %105 = vector.broadcast %86 : i1 to vector<8x1xi1>
    %106 = arith.andi %104, %105 : vector<8x1xi1>
    %cst_43 = arith.constant 0.000000e+00 : f32
    %107 = vector.shape_cast %106 : vector<8x1xi1> to vector<8x1xi1>
    %108 = vector.broadcast %107 : vector<8x1xi1> to vector<8x128xi1>
    %109 = vector.broadcast %cst_43 : f32 to vector<8x128xf32>
    %110 = arith.select %108, %94, %109 : vector<8x128xi1>, vector<8x128xf32>
    %111 = arith.truncf %110 : vector<8x128xf32> to vector<8x128xbf16>
    %c0_44 = arith.constant 0 : index
    %c0_45 = arith.constant 0 : index
    %c1_46 = arith.constant 1 : index
    %c0_47 = arith.constant 0 : index
    %112 = vector.load %arg3[%c0_44, %c0_45, %c1_46, %c0_47] : memref<1x1x10x128xf32, #tpu.memory_space<vmem>>, vector<1x1x8x128xf32>
    %113 = vector.shape_cast %112 : vector<1x1x8x128xf32> to vector<8x128xf32>
    %114 = vector.broadcast %0 : vector<1x128xf32> to vector<8x128xf32>
    %115 = arith.mulf %113, %114 : vector<8x128xf32>
    %116 = vector.broadcast %1 : vector<1x128xf32> to vector<8x128xf32>
    %117 = arith.addf %115, %116 : vector<8x128xf32>
    %cst_48 = arith.constant 0.000000e+00 : f32
    %118 = vector.broadcast %cst_48 : f32 to vector<8x128xf32>
    %119 = arith.maximumf %117, %118 : vector<8x128xf32>
    %120 = tpu.iota {dimensions = array<i32: 0>} : vector<8x1xi32>
    %c1_i32_49 = arith.constant 1 : i32
    %121 = vector.broadcast %c1_i32_49 : i32 to vector<8x1xi32>
    %122 = arith.muli %121, %120 : vector<8x1xi32>
    %c1_i32_50 = arith.constant 1 : i32
    %123 = vector.broadcast %c1_i32_50 : i32 to vector<8x1xi32>
    %124 = arith.addi %123, %122 : vector<8x1xi32>
    %c1_i32_51 = arith.constant 1 : i32
    %125 = vector.broadcast %c1_i32_51 : i32 to vector<8x1xi32>
    %126 = arith.cmpi sge, %124, %125 : vector<8x1xi32>
    %c8_i32_52 = arith.constant 8 : i32
    %127 = vector.broadcast %c8_i32_52 : i32 to vector<8x1xi32>
    %128 = arith.cmpi sle, %124, %127 : vector<8x1xi32>
    %129 = arith.andi %126, %128 : vector<8x1xi1>
    %130 = vector.broadcast %86 : i1 to vector<8x1xi1>
    %131 = arith.andi %129, %130 : vector<8x1xi1>
    %cst_53 = arith.constant 0.000000e+00 : f32
    %132 = vector.shape_cast %131 : vector<8x1xi1> to vector<8x1xi1>
    %133 = vector.broadcast %132 : vector<8x1xi1> to vector<8x128xi1>
    %134 = vector.broadcast %cst_53 : f32 to vector<8x128xf32>
    %135 = arith.select %133, %119, %134 : vector<8x128xi1>, vector<8x128xf32>
    %136 = arith.truncf %135 : vector<8x128xf32> to vector<8x128xbf16>
    %c0_54 = arith.constant 0 : index
    %c0_55 = arith.constant 0 : index
    %c2_56 = arith.constant 2 : index
    %c0_57 = arith.constant 0 : index
    %137 = vector.load %arg3[%c0_54, %c0_55, %c2_56, %c0_57] : memref<1x1x10x128xf32, #tpu.memory_space<vmem>>, vector<1x1x8x128xf32>
    %138 = vector.shape_cast %137 : vector<1x1x8x128xf32> to vector<8x128xf32>
    %139 = vector.broadcast %0 : vector<1x128xf32> to vector<8x128xf32>
    %140 = arith.mulf %138, %139 : vector<8x128xf32>
    %141 = vector.broadcast %1 : vector<1x128xf32> to vector<8x128xf32>
    %142 = arith.addf %140, %141 : vector<8x128xf32>
    %cst_58 = arith.constant 0.000000e+00 : f32
    %143 = vector.broadcast %cst_58 : f32 to vector<8x128xf32>
    %144 = arith.maximumf %142, %143 : vector<8x128xf32>
    %145 = tpu.iota {dimensions = array<i32: 0>} : vector<8x1xi32>
    %c1_i32_59 = arith.constant 1 : i32
    %146 = vector.broadcast %c1_i32_59 : i32 to vector<8x1xi32>
    %147 = arith.muli %146, %145 : vector<8x1xi32>
    %c2_i32_60 = arith.constant 2 : i32
    %148 = vector.broadcast %c2_i32_60 : i32 to vector<8x1xi32>
    %149 = arith.addi %148, %147 : vector<8x1xi32>
    %c1_i32_61 = arith.constant 1 : i32
    %150 = vector.broadcast %c1_i32_61 : i32 to vector<8x1xi32>
    %151 = arith.cmpi sge, %149, %150 : vector<8x1xi32>
    %c8_i32_62 = arith.constant 8 : i32
    %152 = vector.broadcast %c8_i32_62 : i32 to vector<8x1xi32>
    %153 = arith.cmpi sle, %149, %152 : vector<8x1xi32>
    %154 = arith.andi %151, %153 : vector<8x1xi1>
    %155 = vector.broadcast %86 : i1 to vector<8x1xi1>
    %156 = arith.andi %154, %155 : vector<8x1xi1>
    %cst_63 = arith.constant 0.000000e+00 : f32
    %157 = vector.shape_cast %156 : vector<8x1xi1> to vector<8x1xi1>
    %158 = vector.broadcast %157 : vector<8x1xi1> to vector<8x128xi1>
    %159 = vector.broadcast %cst_63 : f32 to vector<8x128xf32>
    %160 = arith.select %158, %144, %159 : vector<8x128xi1>, vector<8x128xf32>
    %161 = arith.truncf %160 : vector<8x128xf32> to vector<8x128xbf16>
    %c1_i32_64 = arith.constant 1 : i32
    %162 = arith.muli %arg1, %c1_i32_64 : i32
    %c2_i32_65 = arith.constant 2 : i32
    %163 = arith.addi %162, %c2_i32_65 : i32
    %c1_i32_66 = arith.constant 1 : i32
    %164 = arith.cmpi sge, %163, %c1_i32_66 : i32
    %c8_i32_67 = arith.constant 8 : i32
    %165 = arith.cmpi sle, %163, %c8_i32_67 : i32
    %166 = arith.andi %164, %165 : i1
    %c0_68 = arith.constant 0 : index
    %c0_69 = arith.constant 0 : index
    %c0_70 = arith.constant 0 : index
    %c0_71 = arith.constant 0 : index
    %167 = vector.load %arg4[%c0_68, %c0_69, %c0_70, %c0_71] : memref<1x1x10x128xf32, #tpu.memory_space<vmem>>, vector<1x1x8x128xf32>
    %168 = vector.shape_cast %167 : vector<1x1x8x128xf32> to vector<8x128xf32>
    %169 = vector.broadcast %0 : vector<1x128xf32> to vector<8x128xf32>
    %170 = arith.mulf %168, %169 : vector<8x128xf32>
    %171 = vector.broadcast %1 : vector<1x128xf32> to vector<8x128xf32>
    %172 = arith.addf %170, %171 : vector<8x128xf32>
    %cst_72 = arith.constant 0.000000e+00 : f32
    %173 = vector.broadcast %cst_72 : f32 to vector<8x128xf32>
    %174 = arith.maximumf %172, %173 : vector<8x128xf32>
    %175 = tpu.iota {dimensions = array<i32: 0>} : vector<8x1xi32>
    %c1_i32_73 = arith.constant 1 : i32
    %176 = vector.broadcast %c1_i32_73 : i32 to vector<8x1xi32>
    %177 = arith.muli %176, %175 : vector<8x1xi32>
    %c0_i32_74 = arith.constant 0 : i32
    %178 = vector.broadcast %c0_i32_74 : i32 to vector<8x1xi32>
    %179 = arith.addi %178, %177 : vector<8x1xi32>
    %c1_i32_75 = arith.constant 1 : i32
    %180 = vector.broadcast %c1_i32_75 : i32 to vector<8x1xi32>
    %181 = arith.cmpi sge, %179, %180 : vector<8x1xi32>
    %c8_i32_76 = arith.constant 8 : i32
    %182 = vector.broadcast %c8_i32_76 : i32 to vector<8x1xi32>
    %183 = arith.cmpi sle, %179, %182 : vector<8x1xi32>
    %184 = arith.andi %181, %183 : vector<8x1xi1>
    %185 = vector.broadcast %166 : i1 to vector<8x1xi1>
    %186 = arith.andi %184, %185 : vector<8x1xi1>
    %cst_77 = arith.constant 0.000000e+00 : f32
    %187 = vector.shape_cast %186 : vector<8x1xi1> to vector<8x1xi1>
    %188 = vector.broadcast %187 : vector<8x1xi1> to vector<8x128xi1>
    %189 = vector.broadcast %cst_77 : f32 to vector<8x128xf32>
    %190 = arith.select %188, %174, %189 : vector<8x128xi1>, vector<8x128xf32>
    %191 = arith.truncf %190 : vector<8x128xf32> to vector<8x128xbf16>
    %c0_78 = arith.constant 0 : index
    %c0_79 = arith.constant 0 : index
    %c1_80 = arith.constant 1 : index
    %c0_81 = arith.constant 0 : index
    %192 = vector.load %arg4[%c0_78, %c0_79, %c1_80, %c0_81] : memref<1x1x10x128xf32, #tpu.memory_space<vmem>>, vector<1x1x8x128xf32>
    %193 = vector.shape_cast %192 : vector<1x1x8x128xf32> to vector<8x128xf32>
    %194 = vector.broadcast %0 : vector<1x128xf32> to vector<8x128xf32>
    %195 = arith.mulf %193, %194 : vector<8x128xf32>
    %196 = vector.broadcast %1 : vector<1x128xf32> to vector<8x128xf32>
    %197 = arith.addf %195, %196 : vector<8x128xf32>
    %cst_82 = arith.constant 0.000000e+00 : f32
    %198 = vector.broadcast %cst_82 : f32 to vector<8x128xf32>
    %199 = arith.maximumf %197, %198 : vector<8x128xf32>
    %200 = tpu.iota {dimensions = array<i32: 0>} : vector<8x1xi32>
    %c1_i32_83 = arith.constant 1 : i32
    %201 = vector.broadcast %c1_i32_83 : i32 to vector<8x1xi32>
    %202 = arith.muli %201, %200 : vector<8x1xi32>
    %c1_i32_84 = arith.constant 1 : i32
    %203 = vector.broadcast %c1_i32_84 : i32 to vector<8x1xi32>
    %204 = arith.addi %203, %202 : vector<8x1xi32>
    %c1_i32_85 = arith.constant 1 : i32
    %205 = vector.broadcast %c1_i32_85 : i32 to vector<8x1xi32>
    %206 = arith.cmpi sge, %204, %205 : vector<8x1xi32>
    %c8_i32_86 = arith.constant 8 : i32
    %207 = vector.broadcast %c8_i32_86 : i32 to vector<8x1xi32>
    %208 = arith.cmpi sle, %204, %207 : vector<8x1xi32>
    %209 = arith.andi %206, %208 : vector<8x1xi1>
    %210 = vector.broadcast %166 : i1 to vector<8x1xi1>
    %211 = arith.andi %209, %210 : vector<8x1xi1>
    %cst_87 = arith.constant 0.000000e+00 : f32
    %212 = vector.shape_cast %211 : vector<8x1xi1> to vector<8x1xi1>
    %213 = vector.broadcast %212 : vector<8x1xi1> to vector<8x128xi1>
    %214 = vector.broadcast %cst_87 : f32 to vector<8x128xf32>
    %215 = arith.select %213, %199, %214 : vector<8x128xi1>, vector<8x128xf32>
    %216 = arith.truncf %215 : vector<8x128xf32> to vector<8x128xbf16>
    %c0_88 = arith.constant 0 : index
    %c0_89 = arith.constant 0 : index
    %c2_90 = arith.constant 2 : index
    %c0_91 = arith.constant 0 : index
    %217 = vector.load %arg4[%c0_88, %c0_89, %c2_90, %c0_91] : memref<1x1x10x128xf32, #tpu.memory_space<vmem>>, vector<1x1x8x128xf32>
    %218 = vector.shape_cast %217 : vector<1x1x8x128xf32> to vector<8x128xf32>
    %219 = vector.broadcast %0 : vector<1x128xf32> to vector<8x128xf32>
    %220 = arith.mulf %218, %219 : vector<8x128xf32>
    %221 = vector.broadcast %1 : vector<1x128xf32> to vector<8x128xf32>
    %222 = arith.addf %220, %221 : vector<8x128xf32>
    %cst_92 = arith.constant 0.000000e+00 : f32
    %223 = vector.broadcast %cst_92 : f32 to vector<8x128xf32>
    %224 = arith.maximumf %222, %223 : vector<8x128xf32>
    %225 = tpu.iota {dimensions = array<i32: 0>} : vector<8x1xi32>
    %c1_i32_93 = arith.constant 1 : i32
    %226 = vector.broadcast %c1_i32_93 : i32 to vector<8x1xi32>
    %227 = arith.muli %226, %225 : vector<8x1xi32>
    %c2_i32_94 = arith.constant 2 : i32
    %228 = vector.broadcast %c2_i32_94 : i32 to vector<8x1xi32>
    %229 = arith.addi %228, %227 : vector<8x1xi32>
    %c1_i32_95 = arith.constant 1 : i32
    %230 = vector.broadcast %c1_i32_95 : i32 to vector<8x1xi32>
    %231 = arith.cmpi sge, %229, %230 : vector<8x1xi32>
    %c8_i32_96 = arith.constant 8 : i32
    %232 = vector.broadcast %c8_i32_96 : i32 to vector<8x1xi32>
    %233 = arith.cmpi sle, %229, %232 : vector<8x1xi32>
    %234 = arith.andi %231, %233 : vector<8x1xi1>
    %235 = vector.broadcast %166 : i1 to vector<8x1xi1>
    %236 = arith.andi %234, %235 : vector<8x1xi1>
    %cst_97 = arith.constant 0.000000e+00 : f32
    %237 = vector.shape_cast %236 : vector<8x1xi1> to vector<8x1xi1>
    %238 = vector.broadcast %237 : vector<8x1xi1> to vector<8x128xi1>
    %239 = vector.broadcast %cst_97 : f32 to vector<8x128xf32>
    %240 = arith.select %238, %224, %239 : vector<8x128xi1>, vector<8x128xf32>
    %241 = arith.truncf %240 : vector<8x128xf32> to vector<8x128xbf16>
    %242 = tpu.concatenate %31, %56, %81, %111, %136, %161, %191, %216, %241 in 1 : vector<8x128xbf16>, vector<8x128xbf16>, vector<8x128xbf16>, vector<8x128xbf16>, vector<8x128xbf16>, vector<8x128xbf16>, vector<8x128xbf16>, vector<8x128xbf16>, vector<8x128xbf16> -> vector<8x1152xbf16>
    %c0_98 = arith.constant 0 : index
    %c0_99 = arith.constant 0 : index
    %243 = vector.load %arg7[%c0_98, %c0_99] : memref<1152x128xbf16, #tpu.memory_space<vmem>>, vector<1152x128xbf16>
    %cst_100 = arith.constant dense<0.000000e+00> : vector<8x128xf32>
    %244 = tpu.matmul %242, %243, %cst_100 {dimension_numbers = #tpu.dot_dimension_numbers<[1], [0], [0], [1], [0, 0, 1, 1], [], []>} : vector<8x1152xbf16>, vector<1152x128xbf16>, vector<8x128xf32> -> vector<8x128xf32>
    %c0_101 = arith.constant 0 : index
    %c0_102 = arith.constant 0 : index
    %c0_103 = arith.constant 0 : index
    %c0_104 = arith.constant 0 : index
    %245 = vector.load %arg8[%c0_101, %c0_102, %c0_103, %c0_104] : memref<1x1x8x128xf32, #tpu.memory_space<vmem>>, vector<1x1x8x128xf32>
    %246 = vector.shape_cast %245 : vector<1x1x8x128xf32> to vector<8x128xf32>
    %247 = arith.truncf %246 : vector<8x128xf32> to vector<8x128xbf16>
    %c0_105 = arith.constant 0 : index
    %c0_106 = arith.constant 0 : index
    %248 = vector.load %arg9[%c0_105, %c0_106] : memref<128x128xbf16, #tpu.memory_space<vmem>>, vector<128x128xbf16>
    %cst_107 = arith.constant dense<0.000000e+00> : vector<8x128xf32>
    %249 = tpu.matmul %247, %248, %cst_107 {dimension_numbers = #tpu.dot_dimension_numbers<[1], [0], [0], [1], [0, 0, 1, 1], [], []>} : vector<8x128xbf16>, vector<128x128xbf16>, vector<8x128xf32> -> vector<8x128xf32>
    %250 = arith.addf %244, %249 : vector<8x128xf32>
    %c0_108 = arith.constant 0 : index
    %c0_109 = arith.constant 0 : index
    %c0_110 = arith.constant 0 : index
    %c0_111 = arith.constant 0 : index
    %251 = vector.load %arg10[%c0_108, %c0_109, %c0_110, %c0_111] : memref<1x1x8x128xf32, #tpu.memory_space<vmem>>, vector<1x1x8x128xf32>
    %252 = vector.shape_cast %251 : vector<1x1x8x128xf32> to vector<8x128xf32>
    %253 = vector.shape_cast %250 : vector<8x128xf32> to vector<1x1x8x128xf32>
    tpu.vector_store %arg10[%c0_108, %c0_109, %c0_110, %c0_111], %253 {strides = array<i32>} : memref<1x1x8x128xf32, #tpu.memory_space<vmem>>, vector<1x1x8x128xf32>,
    return
  }
  func.func @transform_0(%arg0: i32, %arg1: i32) -> (i32, i32, i32, i32) {
    %c1_i32 = arith.constant 1 : i32
    %0 = arith.muli %arg1, %c1_i32 : i32
    %c0_i32 = arith.constant 0 : i32
    %1 = arith.addi %0, %c0_i32 : i32
    %c0_i32_0 = arith.constant 0 : i32
    %c0_i32_1 = arith.constant 0 : i32
    %c0_i32_2 = arith.constant 0 : i32
    return %arg0, %1, %c0_i32_0, %c0_i32_1 : i32, i32, i32, i32
  }
  func.func @transform_1(%arg0: i32, %arg1: i32) -> (i32, i32, i32, i32) {
    %c1_i32 = arith.constant 1 : i32
    %0 = arith.muli %arg1, %c1_i32 : i32
    %c1_i32_0 = arith.constant 1 : i32
    %1 = arith.addi %0, %c1_i32_0 : i32
    %c0_i32 = arith.constant 0 : i32
    %c0_i32_1 = arith.constant 0 : i32
    %c0_i32_2 = arith.constant 0 : i32
    return %arg0, %1, %c0_i32, %c0_i32_1 : i32, i32, i32, i32
  }
  func.func @transform_2(%arg0: i32, %arg1: i32) -> (i32, i32, i32, i32) {
    %c1_i32 = arith.constant 1 : i32
    %0 = arith.muli %arg1, %c1_i32 : i32
    %c2_i32 = arith.constant 2 : i32
    %1 = arith.addi %0, %c2_i32 : i32
    %c0_i32 = arith.constant 0 : i32
    %c0_i32_0 = arith.constant 0 : i32
    %c0_i32_1 = arith.constant 0 : i32
    return %arg0, %1, %c0_i32, %c0_i32_0 : i32, i32, i32, i32
  }
  func.func @transform_3(%arg0: i32, %arg1: i32) -> (i32, i32) {
    %c0_i32 = arith.constant 0 : i32
    %c0_i32_0 = arith.constant 0 : i32
    %c0_i32_1 = arith.constant 0 : i32
    return %c0_i32, %c0_i32_0 : i32, i32
  }
  func.func @transform_4(%arg0: i32, %arg1: i32) -> (i32, i32) {
    %c0_i32 = arith.constant 0 : i32
    %c0_i32_0 = arith.constant 0 : i32
    %c0_i32_1 = arith.constant 0 : i32
    return %c0_i32, %c0_i32_0 : i32, i32
  }
  func.func @transform_5(%arg0: i32, %arg1: i32) -> (i32, i32) {
    %c0_i32 = arith.constant 0 : i32
    %c0_i32_0 = arith.constant 0 : i32
    %c0_i32_1 = arith.constant 0 : i32
    return %c0_i32, %c0_i32_0 : i32, i32
  }
  func.func @transform_6(%arg0: i32, %arg1: i32) -> (i32, i32, i32, i32) {
    %c0_i32 = arith.constant 0 : i32
    %c0_i32_0 = arith.constant 0 : i32
    %c0_i32_1 = arith.constant 0 : i32
    return %arg0, %arg1, %c0_i32, %c0_i32_0 : i32, i32, i32, i32
  }
  func.func @transform_7(%arg0: i32, %arg1: i32) -> (i32, i32) {
    %c0_i32 = arith.constant 0 : i32
    %c0_i32_0 = arith.constant 0 : i32
    %c0_i32_1 = arith.constant 0 : i32
    return %c0_i32, %c0_i32_0 : i32, i32
  }
  func.func @transform_8(%arg0: i32, %arg1: i32) -> (i32, i32, i32, i32) {
    %c0_i32 = arith.constant 0 : i32
    %c0_i32_0 = arith.constant 0 : i32
    %c0_i32_1 = arith.constant 0 : i32
    return %arg0, %arg1, %c0_i32, %c0_i32_0 : i32, i32, i32, i32
  }
}

</mosaic_0001>

<llo_original>
// kernel: residual_block.6
$region0: #{residual_block.6}
  #allocation0 [shape = 'u32[]', space=smem, size = 0x4, offset = 0x4, fixed_abs, tag = 'smem constant byte address 0x4 - core index']
  #allocation1 [shape = 'u32[144,128]{1,0:T(1,128)}', space=vmem, size = 0x12000, scoped, tag = 'internal scratch']
  %s0 = inlined_call_operand.vmem [shape: f32[512,128], index: 0, kind: input, shape index: {}]
  %s1 = inlined_call_operand.vmem [shape: f32[1,128], index: 1, kind: output, shape index: {0}]
  %s2 = inlined_call_operand.vmem [shape: f32[1,128], index: 2, kind: output, shape index: {1}]
  %3 = xla_tuple %s1, %s2
  %s4 = sld [smem:[#allocation0]]
  $region49: #{residual_block.6} parent=0
    _
  %s6 = ssub.s32 1, %s4
  %s7 = scalar_select 0, %s6, %s4
  loop: start=0, step=1, limit=4
  $region2: #{residual_block.6} parent=0 // loop_pre_header
    _
  $region3: #{residual_block.6} parent=0 // loop_header
    %s9 = sphi 0, %s13
    %p10 = scmp.ge.s32.totalorder %s9, 4
    %s19 = sphi 0, %s21
    %s22 = sphi 0, %s19
    %s23 = sphi 0, %s22
    %s39 = sphi 0, %s23
    %s43 = sphi 0, %s43
    %s45 = sphi 0, %s43
    %s46 = sphi 0, %s45
    %s60 = sphi 0, %s46
    %s64 = sphi 0, %s64
    %s66 = sphi 0, %s64
    %s67 = sphi 0, %s66
    %s81 = sphi 0, %s67
  $region4: #{residual_block.6} parent=0 // loop_header_branch
    %12 = sbr.rel (%p10) target = $region8
  $region5: #{residual_block.6} parent=0 // loop_body
    %s14 = ssub.s32 %s9, 1
    %s15 = ssub.s32 %s9, 2
    %s16 = sadd.s32 %s9, 1
    %s17 = ssub.s32 %s9, %s16
    %p18 = scmp.eq.s32.totalorder %s17, 0
    %s20 = sadd.s32 %s19, 1
    %s21 = scalar_select %p18, %s19, %s20
    %p24 = pneg %p18
    %p25 = scmp.eq.s32.totalorder %s9, 1
    %p26 = por %p24, %p25
    %p27 = scmp.ne.s32.totalorder %s19, %s22
    %p28 = scmp.eq.s32.totalorder %s9, 0
    %p29 = por %p27, %p28
    %p30 = scmp.ne.s32.totalorder %s19, %s22
    %p31 = scmp.eq.s32.totalorder %s14, 1
    %p32 = por %p30, %p31
    %p33 = scmp.ne.s32.totalorder %s22, %s23
    %p34 = scmp.eq.s32.totalorder %s14, 0
    %p35 = por %p33, %p34
    %p36 = scmp.ne.s32.totalorder %s22, %s23
    %p37 = scmp.eq.s32.totalorder %s15, 1
    %p38 = por %p36, %p37
    %p40 = scmp.ne.s32.totalorder %s23, %s39
    %p41 = scmp.eq.s32.totalorder %s15, 0
    %p42 = por %p40, %p41
    %s44 = sadd.s32 %s43, 1
    %p47 = scmp.eq.s32.totalorder %s9, 1
    %p48 = scmp.ne.s32.totalorder %s43, %s45
    %p49 = scmp.eq.s32.totalorder %s9, 0
    %p50 = por %p48, %p49
    %p51 = scmp.ne.s32.totalorder %s43, %s45
    %p52 = scmp.eq.s32.totalorder %s14, 1
    %p53 = por %p51, %p52
    %p54 = scmp.ne.s32.totalorder %s45, %s46
    %p55 = scmp.eq.s32.totalorder %s14, 0
    %p56 = por %p54, %p55
    %p57 = scmp.ne.s32.totalorder %s45, %s46
    %p58 = scmp.eq.s32.totalorder %s15, 1
    %p59 = por %p57, %p58
    %p61 = scmp.ne.s32.totalorder %s46, %s60
    %p62 = scmp.eq.s32.totalorder %s15, 0
    %p63 = por %p61, %p62
    %s65 = sadd.s32 %s64, 1
    %p68 = scmp.eq.s32.totalorder %s9, 1
    %p69 = scmp.ne.s32.totalorder %s64, %s66
    %p70 = scmp.eq.s32.totalorder %s9, 0
    %p71 = por %p69, %p70
    %p72 = scmp.ne.s32.totalorder %s64, %s66
    %p73 = scmp.eq.s32.totalorder %s14, 1
    %p74 = por %p72, %p73
    %p75 = scmp.ne.s32.totalorder %s66, %s67
    %p76 = scmp.eq.s32.totalorder %s14, 0
    %p77 = por %p75, %p76
    %p78 = scmp.ne.s32.totalorder %s66, %s67
    %p79 = scmp.eq.s32.totalorder %s15, 1
    %p80 = por %p78, %p79
    %p82 = scmp.ne.s32.totalorder %s67, %s81
    %p83 = scmp.eq.s32.totalorder %s15, 0
    %p84 = por %p82, %p83
    %p85 = scmp.le.s32.totalorder 1, %s9
    %p86 = scmp.lt.s32.totalorder %s9, 3
    %p87 = pnand %p85, %p86
    %p88 = pneg %p87
    // Predicated region
    $region9: #{residual_block.6} parent=5 // pred_check
      _
    $region10: #{residual_block.6} parent=5 // pred_check_branch
      %90 = sbr.rel (%p87) target = $region12
    $region11: #{residual_block.6} parent=5 // pred_region
      %s91 = ssub.s32 %s9, 1
    $region12: #{residual_block.6} parent=5 // pred_fallthru
      _
    %p92 = scmp.lt.s32.totalorder %s9, 2
    // Predicated region
    $region13: #{residual_block.6} parent=5 // pred_check
      %p93 = pneg %p92
    $region14: #{residual_block.6} parent=5 // pred_check_branch
      %95 = sbr.rel (%p93) target = $region16
    $region15: #{residual_block.6} parent=5 // pred_region
      // Predicated region
      $region17: #{residual_block.6} parent=15 // pred_check
        %p96 = pneg %p29
      $region18: #{residual_block.6} parent=15 // pred_check_branch
        %98 = sbr.rel (%p96) target = $region20
      $region19: #{residual_block.6} parent=15 // pred_region
        %s99 = smul.u32 32, %s9
        %p100 = scmp.lt.s32.totalorder %s99, 63
        %s101 = scalar_select %p100, %s99, 63
        %s102 = smul.addr %s101, 8
        %s103 = scalar_lea.vmem %s0, %s102
        %s104 = smul.u32 32, %s9
      $region20: #{residual_block.6} parent=15 // pred_fallthru
        _
    $region16: #{residual_block.6} parent=5 // pred_fallthru
      _
    %p105 = scmp.le.s32.totalorder 1, %s9
    %p106 = scmp.lt.s32.totalorder %s9, 3
    %p107 = pnand %p105, %p106
    %p108 = pneg %p107
    // Predicated region
    $region21: #{residual_block.6} parent=5 // pred_check
      _
    $region22: #{residual_block.6} parent=5 // pred_check_branch
      %110 = sbr.rel (%p107) target = $region24
    $region23: #{residual_block.6} parent=5 // pred_region
      %s111 = ssub.s32 %s9, 1
      %s112 = smul.u32 32, %s14
      %p113 = scmp.lt.s32.totalorder %s112, 63
      %s114 = scalar_select %p113, %s112, 63
      %s115 = smul.addr %s114, 8
      %s116 = scalar_lea.vmem %s0, %s115
      %p117 = pneg %p35
      %p118 = pneg %p32
      %p119 = pneg %p56
      %p120 = pneg %p53
      %p121 = pneg %p77
      %p122 = pneg %p74
      %s123 = smul.u32 32, %s14
      %p124 = scmp.lt.s32.totalorder %s123, 63
      %s125 = scalar_select %p124, %s123, 63
      %s126 = smul.addr %s125, 8
      %s127 = scalar_lea.vmem %s0, %s126
      %s128 = smul.u32 32, %s14
      %p129 = scmp.eq.s32.totalorder %s14, 0
      // Predicated region
      $region25: #{residual_block.6} parent=23 // pred_check
        %p130 = pneg %p129
      $region26: #{residual_block.6} parent=23 // pred_check_branch
        %132 = sbr.rel (%p130) target = $region28
      $region27: #{residual_block.6} parent=23 // pred_region
        %133 = vst [vmem:[%s1] sm:$0x1] 0.0
        %134 = vst [vmem:[%s2] sm:$0x1] 0.0
      $region28: #{residual_block.6} parent=23 // pred_fallthru
        _
      %v135 = vld [vmem:[%s127] sm:$0xff]
      %v136 = vld [vmem:[%s127 + $0x8] sm:$0xff]
      %v137 = vld [vmem:[%s127 + $0x10] sm:$0xff]
      %v138 = vld [vmem:[%s127 + $0x18] sm:$0xff]
      %v139 = vld [vmem:[%s127 + $0x20] sm:$0xff]
      %v140 = vld [vmem:[%s127 + $0x28] sm:$0xff]
      %v141 = vld [vmem:[%s127 + $0x30] sm:$0xff]
      %v142 = vld [vmem:[%s127 + $0x38] sm:$0xff]
      %v143 = vld [vmem:[%s127 + $0x40] sm:$0xff]
      %v144 = vld [vmem:[%s127 + $0x48] sm:$0xff]
      %v145 = vld [vmem:[%s127 + $0x50] sm:$0xff]
      %v146 = vld [vmem:[%s127 + $0x58] sm:$0xff]
      %v147 = vld [vmem:[%s127 + $0x60] sm:$0xff]
      %v148 = vld [vmem:[%s127 + $0x68] sm:$0xff]
      %v149 = vld [vmem:[%s127 + $0x70] sm:$0xff]
      %v150 = vld [vmem:[%s127 + $0x78] sm:$0xff]
      %v151 = vld [vmem:[%s127 + $0x80] sm:$0xff]
      %v152 = vld [vmem:[%s127 + $0x88] sm:$0xff]
      %v153 = vld [vmem:[%s127 + $0x90] sm:$0xff]
      %v154 = vld [vmem:[%s127 + $0x98] sm:$0xff]
      %v155 = vld [vmem:[%s127 + $0xa0] sm:$0xff]
      %v156 = vld [vmem:[%s127 + $0xa8] sm:$0xff]
      %v157 = vld [vmem:[%s127 + $0xb0] sm:$0xff]
      %v158 = vld [vmem:[%s127 + $0xb8] sm:$0xff]
      %v159 = vld [vmem:[%s127 + $0xc0] sm:$0xff]
      %v160 = vld [vmem:[%s127 + $0xc8] sm:$0xff]
      %v161 = vld [vmem:[%s127 + $0xd0] sm:$0xff]
      %v162 = vld [vmem:[%s127 + $0xd8] sm:$0xff]
      %v163 = vld [vmem:[%s127 + $0xe0] sm:$0xff]
      %v164 = vld [vmem:[%s127 + $0xe8] sm:$0xff]
      %v165 = vld [vmem:[%s127 + $0xf0] sm:$0xff]
      %v166 = vld [vmem:[%s127 + $0xf8] sm:$0xff]
      %v167 = vld [vmem:[%s1] sm:$0x1]
      %v168 = vadd.f32 %v135, %v136
      %v169 = vadd.f32 %v168, %v137
      %v170 = vadd.f32 %v169, %v138
      %v171 = vadd.f32 %v170, %v139
      %v172 = vadd.f32 %v171, %v140
      %v173 = vadd.f32 %v172, %v141
      %v174 = vadd.f32 %v173, %v142
      %v175 = vadd.f32 %v174, %v143
      %v176 = vadd.f32 %v175, %v144
      %v177 = vadd.f32 %v176, %v145
      %v178 = vadd.f32 %v177, %v146
      %v179 = vadd.f32 %v178, %v147
      %v180 = vadd.f32 %v179, %v148
      %v181 = vadd.f32 %v180, %v149
      %v182 = vadd.f32 %v181, %v150
      %v183 = vadd.f32 %v182, %v151
      %v184 = vadd.f32 %v183, %v152
      %v185 = vadd.f32 %v184, %v153
      %v186 = vadd.f32 %v185, %v154
      %v187 = vadd.f32 %v186, %v155
      %v188 = vadd.f32 %v187, %v156
      %v189 = vadd.f32 %v188, %v157
      %v190 = vadd.f32 %v189, %v158
      %v191 = vadd.f32 %v190, %v159
      %v192 = vadd.f32 %v191, %v160
      %v193 = vadd.f32 %v192, %v161
      %v194 = vadd.f32 %v193, %v162
      %v195 = vadd.f32 %v194, %v163
      %v196 = vadd.f32 %v195, %v164
      %v197 = vadd.f32 %v196, %v165
      %v198 = vadd.f32 %v197, %v166
      %v199 = vrot.slane %v198, 4
      %v200 = vadd.f32 %v198, %v199
      %v201 = vrot.slane %v200, 2
      %v202 = vadd.f32 %v200, %v201
      %v203 = vrot.slane %v202, 1
      %v204 = vadd.f32 %v202, %v203
      %v205 = vadd.f32 %v167, %v204
      %206 = vst [vmem:[%s1] sm:$0x1] %v205
      %v207 = vld [vmem:[%s2] sm:$0x1]
      %v208 = vmul.f32 %v135, %v135
      %v209 = vmul.f32 %v136, %v136
      %v210 = vmul.f32 %v137, %v137
      %v211 = vmul.f32 %v138, %v138
      %v212 = vmul.f32 %v139, %v139
      %v213 = vmul.f32 %v140, %v140
      %v214 = vmul.f32 %v141, %v141
      %v215 = vmul.f32 %v142, %v142
      %v216 = vmul.f32 %v143, %v143
      %v217 = vmul.f32 %v144, %v144
      %v218 = vmul.f32 %v145, %v145
      %v219 = vmul.f32 %v146, %v146
      %v220 = vmul.f32 %v147, %v147
      %v221 = vmul.f32 %v148, %v148
      %v222 = vmul.f32 %v149, %v149
      %v223 = vmul.f32 %v150, %v150
      %v224 = vmul.f32 %v151, %v151
      %v225 = vmul.f32 %v152, %v152
      %v226 = vmul.f32 %v153, %v153
      %v227 = vmul.f32 %v154, %v154
      %v228 = vmul.f32 %v155, %v155
      %v229 = vmul.f32 %v156, %v156
      %v230 = vmul.f32 %v157, %v157
      %v231 = vmul.f32 %v158, %v158
      %v232 = vmul.f32 %v159, %v159
      %v233 = vmul.f32 %v160, %v160
      %v234 = vmul.f32 %v161, %v161
      %v235 = vmul.f32 %v162, %v162
      %v236 = vmul.f32 %v163, %v163
      %v237 = vmul.f32 %v164, %v164
      %v238 = vmul.f32 %v165, %v165
      %v239 = vmul.f32 %v166, %v166
      %v240 = vadd.f32 %v208, %v209
      %v241 = vadd.f32 %v240, %v210
      %v242 = vadd.f32 %v241, %v211
      %v243 = vadd.f32 %v242, %v212
      %v244 = vadd.f32 %v243, %v213
      %v245 = vadd.f32 %v244, %v214
      %v246 = vadd.f32 %v245, %v215
      %v247 = vadd.f32 %v246, %v216
      %v248 = vadd.f32 %v247, %v217
      %v249 = vadd.f32 %v248, %v218
      %v250 = vadd.f32 %v249, %v219
      %v251 = vadd.f32 %v250, %v220
      %v252 = vadd.f32 %v251, %v221
      %v253 = vadd.f32 %v252, %v222
      %v254 = vadd.f32 %v253, %v223
      %v255 = vadd.f32 %v254, %v224
      %v256 = vadd.f32 %v255, %v225
      %v257 = vadd.f32 %v256, %v226
      %v258 = vadd.f32 %v257, %v227
      %v259 = vadd.f32 %v258, %v228
      %v260 = vadd.f32 %v259, %v229
      %v261 = vadd.f32 %v260, %v230
      %v262 = vadd.f32 %v261, %v231
      %v263 = vadd.f32 %v262, %v232
      %v264 = vadd.f32 %v263, %v233
      %v265 = vadd.f32 %v264, %v234
      %v266 = vadd.f32 %v265, %v235
      %v267 = vadd.f32 %v266, %v236
      %v268 = vadd.f32 %v267, %v237
      %v269 = vadd.f32 %v268, %v238
      %v270 = vadd.f32 %v269, %v239
      %v271 = vrot.slane %v270, 4
      %v272 = vadd.f32 %v270, %v271
      %v273 = vrot.slane %v272, 2
      %v274 = vadd.f32 %v272, %v273
      %v275 = vrot.slane %v274, 1
      %v276 = vadd.f32 %v274, %v275
      %v277 = vadd.f32 %v207, %v276
      %278 = vst [vmem:[%s2] sm:$0x1] %v277
      // Predicated region
      $region29: #{residual_block.6} parent=23 // pred_check
        %p279 = pneg %p53
      $region30: #{residual_block.6} parent=23 // pred_check_branch
        %281 = sbr.rel (%p279) target = $region32
      $region31: #{residual_block.6} parent=23 // pred_region
        _
      $region32: #{residual_block.6} parent=23 // pred_fallthru
        _
      // Predicated region
      $region33: #{residual_block.6} parent=23 // pred_check
        %p282 = pneg %p74
      $region34: #{residual_block.6} parent=23 // pred_check_branch
        %284 = sbr.rel (%p282) target = $region36
      $region35: #{residual_block.6} parent=23 // pred_region
        _
      $region36: #{residual_block.6} parent=23 // pred_fallthru
        _
      // Predicated region
      $region37: #{residual_block.6} parent=23 // pred_check
        %p285 = pneg %p53
      $region38: #{residual_block.6} parent=23 // pred_check_branch
        %287 = sbr.rel (%p285) target = $region40
      $region39: #{residual_block.6} parent=23 // pred_region
        _
      $region40: #{residual_block.6} parent=23 // pred_fallthru
        _
      // Predicated region
      $region41: #{residual_block.6} parent=23 // pred_check
        %p288 = pneg %p74
      $region42: #{residual_block.6} parent=23 // pred_check_branch
        %290 = sbr.rel (%p288) target = $region44
      $region43: #{residual_block.6} parent=23 // pred_region
        _
      $region44: #{residual_block.6} parent=23 // pred_fallthru
        _
    $region24: #{residual_block.6} parent=5 // pred_fallthru
      _
    %p291 = scmp.le.s32.totalorder 2, %s9
    // Predicated region
    $region45: #{residual_block.6} parent=5 // pred_check
      %p292 = pneg %p291
    $region46: #{residual_block.6} parent=5 // pred_check_branch
      %294 = sbr.rel (%p292) target = $region48
    $region47: #{residual_block.6} parent=5 // pred_region
      %s295 = ssub.s32 %s9, 2
    $region48: #{residual_block.6} parent=5 // pred_fallthru
      _
  $region6: #{residual_block.6} parent=0 // loop_footer
    %s13 = sadd.s32 1, %s9
  $region7: #{residual_block.6} parent=0 // loop_footer_branch
    %8 = sbr.rel target = $region3
  $region8: #{residual_block.6} parent=0 // loop_exit
    _

// kernel: residual_block.8
$region0: #{residual_block.8}
  #allocation0 [shape = 'u32[]', space=smem, size = 0x4, offset = 0x4, fixed_abs, tag = 'smem constant byte address 0x4 - core index']
  #allocation1 [shape = 'u32[144,128]{1,0:T(1,128)}', space=vmem, size = 0x12000, scoped, tag = 'internal scratch']
  %s0 = inlined_call_operand.vmem [shape: f32[128,128], index: 0, kind: input, shape index: {}]
  %s1 = inlined_call_operand.vmem [shape: f32[1,128], index: 1, kind: output, shape index: {0}]
  %s2 = inlined_call_operand.vmem [shape: f32[1,128], index: 2, kind: output, shape index: {1}]
  %3 = xla_tuple %s1, %s2
  %s4 = sld [smem:[#allocation0]]
  $region26: #{residual_block.8} parent=0
    _
  %s6 = ssub.s32 1, %s4
  %s7 = scalar_select 0, %s6, %s4
  // Predicated region
  $region2: #{residual_block.8} parent=0 // pred_check
    _
  $region3: #{residual_block.8} parent=0 // pred_check_branch
    %9 = sbr.rel (0) target = $region5
  $region4: #{residual_block.8} parent=0 // pred_region
    _
  $region5: #{residual_block.8} parent=0 // pred_fallthru
    _
  %p10 = scmp.eq.s32.totalorder 0, 0
  // Predicated region
  $region6: #{residual_block.8} parent=0 // pred_check
    %p11 = pneg %p10
  $region7: #{residual_block.8} parent=0 // pred_check_branch
    %13 = sbr.rel (%p11) target = $region9
  $region8: #{residual_block.8} parent=0 // pred_region
    %14 = vst [vmem:[%s1] sm:$0x1] 0.0
    %15 = vst [vmem:[%s2] sm:$0x1] 0.0
  $region9: #{residual_block.8} parent=0 // pred_fallthru
    _
  %v16 = vld [vmem:[%s0] sm:$0xff]
  %v17 = vld [vmem:[%s0 + $0x8] sm:$0xff]
  %v18 = vld [vmem:[%s0 + $0x10] sm:$0xff]
  %v19 = vld [vmem:[%s0 + $0x18] sm:$0xff]
  %v20 = vld [vmem:[%s0 + $0x20] sm:$0xff]
  %v21 = vld [vmem:[%s0 + $0x28] sm:$0xff]
  %v22 = vld [vmem:[%s0 + $0x30] sm:$0xff]
  %v23 = vld [vmem:[%s0 + $0x38] sm:$0xff]
  %v24 = vld [vmem:[%s0 + $0x40] sm:$0xff]
  %v25 = vld [vmem:[%s0 + $0x48] sm:$0xff]
  %v26 = vld [vmem:[%s0 + $0x50] sm:$0xff]
  %v27 = vld [vmem:[%s0 + $0x58] sm:$0xff]
  %v28 = vld [vmem:[%s0 + $0x60] sm:$0xff]
  %v29 = vld [vmem:[%s0 + $0x68] sm:$0xff]
  %v30 = vld [vmem:[%s0 + $0x70] sm:$0xff]
  %v31 = vld [vmem:[%s0 + $0x78] sm:$0xff]
  %v32 = vld [vmem:[%s1] sm:$0x1]
  %v33 = vadd.f32 %v16, %v17
  %v34 = vadd.f32 %v33, %v18
  %v35 = vadd.f32 %v34, %v19
  %v36 = vadd.f32 %v35, %v20
  %v37 = vadd.f32 %v36, %v21
  %v38 = vadd.f32 %v37, %v22
  %v39 = vadd.f32 %v38, %v23
  %v40 = vadd.f32 %v39, %v24
  %v41 = vadd.f32 %v40, %v25
  %v42 = vadd.f32 %v41, %v26
  %v43 = vadd.f32 %v42, %v27
  %v44 = vadd.f32 %v43, %v28
  %v45 = vadd.f32 %v44, %v29
  %v46 = vadd.f32 %v45, %v30
  %v47 = vadd.f32 %v46, %v31
  %v48 = vrot.slane %v47, 4
  %v49 = vadd.f32 %v47, %v48
  %v50 = vrot.slane %v49, 2
  %v51 = vadd.f32 %v49, %v50
  %v52 = vrot.slane %v51, 1
  %v53 = vadd.f32 %v51, %v52
  %v54 = vadd.f32 %v32, %v53
  %55 = vst [vmem:[%s1] sm:$0x1] %v54
  %v56 = vld [vmem:[%s2] sm:$0x1]
  %v57 = vmul.f32 %v16, %v16
  %v58 = vmul.f32 %v17, %v17
  %v59 = vmul.f32 %v18, %v18
  %v60 = vmul.f32 %v19, %v19
  %v61 = vmul.f32 %v20, %v20
  %v62 = vmul.f32 %v21, %v21
  %v63 = vmul.f32 %v22, %v22
  %v64 = vmul.f32 %v23, %v23
  %v65 = vmul.f32 %v24, %v24
  %v66 = vmul.f32 %v25, %v25
  %v67 = vmul.f32 %v26, %v26
  %v68 = vmul.f32 %v27, %v27
  %v69 = vmul.f32 %v28, %v28
  %v70 = vmul.f32 %v29, %v29
  %v71 = vmul.f32 %v30, %v30
  %v72 = vmul.f32 %v31, %v31
  %v73 = vadd.f32 %v57, %v58
  %v74 = vadd.f32 %v73, %v59
  %v75 = vadd.f32 %v74, %v60
  %v76 = vadd.f32 %v75, %v61
  %v77 = vadd.f32 %v76, %v62
  %v78 = vadd.f32 %v77, %v63
  %v79 = vadd.f32 %v78, %v64
  %v80 = vadd.f32 %v79, %v65
  %v81 = vadd.f32 %v80, %v66
  %v82 = vadd.f32 %v81, %v67
  %v83 = vadd.f32 %v82, %v68
  %v84 = vadd.f32 %v83, %v69
  %v85 = vadd.f32 %v84, %v70
  %v86 = vadd.f32 %v85, %v71
  %v87 = vadd.f32 %v86, %v72
  %v88 = vrot.slane %v87, 4
  %v89 = vadd.f32 %v87, %v88
  %v90 = vrot.slane %v89, 2
  %v91 = vadd.f32 %v89, %v90
  %v92 = vrot.slane %v91, 1
  %v93 = vadd.f32 %v91, %v92
  %v94 = vadd.f32 %v56, %v93
  %95 = vst [vmem:[%s2] sm:$0x1] %v94
  // Predicated region
  $region10: #{residual_block.8} parent=0 // pred_check
    _
  $region11: #{residual_block.8} parent=0 // pred_check_branch
    %97 = sbr.rel (0) target = $region13
  $region12: #{residual_block.8} parent=0 // pred_region
    _
  $region13: #{residual_block.8} parent=0 // pred_fallthru
    _
  // Predicated region
  $region14: #{residual_block.8} parent=0 // pred_check
    _
  $region15: #{residual_block.8} parent=0 // pred_check_branch
    %99 = sbr.rel (0) target = $region17
  $region16: #{residual_block.8} parent=0 // pred_region
    _
  $region17: #{residual_block.8} parent=0 // pred_fallthru
    _
  // Predicated region
  $region18: #{residual_block.8} parent=0 // pred_check
    _
  $region19: #{residual_block.8} parent=0 // pred_check_branch
    %101 = sbr.rel (0) target = $region21
  $region20: #{residual_block.8} parent=0 // pred_region
    _
  $region21: #{residual_block.8} parent=0 // pred_fallthru
    _
  // Predicated region
  $region22: #{residual_block.8} parent=0 // pred_check
    _
  $region23: #{residual_block.8} parent=0 // pred_check_branch
    %103 = sbr.rel (0) target = $region25
  $region24: #{residual_block.8} parent=0 // pred_region
    _
  $region25: #{residual_block.8} parent=0 // pred_fallthru
    _

// kernel: residual_block.7
$region0: #{residual_block.7}
  #allocation0 [shape = 'u32[]', space=smem, size = 0x4, offset = 0x4, fixed_abs, tag = 'smem constant byte address 0x4 - core index']
  #allocation1 [shape = 'u32[144,128]{1,0:T(1,128)}', space=vmem, size = 0x12000, scoped, tag = 'internal scratch']
  %s0 = inlined_call_operand.vmem [shape: f32[2,18,9,128], index: 0, kind: input, shape index: {}, may-alias: {0,2,4}]
  %s1 = inlined_call_operand.vmem [shape: f32[2,18,9,128], index: 1, kind: input, shape index: {}, may-alias: {1,3,5}]
  %s2 = inlined_call_operand.vmem [shape: f32[2,18,9,128], index: 2, kind: input, shape index: {}, may-alias: {0,2,4}]
  %s3 = inlined_call_operand.vmem [shape: f32[2,18,9,128], index: 3, kind: input, shape index: {}, may-alias: {1,3,5}]
  %s4 = inlined_call_operand.vmem [shape: f32[2,18,9,128], index: 4, kind: input, shape index: {}, may-alias: {0,2,4}]
  %s5 = inlined_call_operand.vmem [shape: f32[2,18,9,128], index: 5, kind: input, shape index: {}, may-alias: {1,3,5}]
  %s6 = inlined_call_operand.vmem [shape: f32[1,128], index: 6, kind: input, shape index: {}]
  %s7 = inlined_call_operand.vmem [shape: f32[1,128], index: 7, kind: input, shape index: {}]
  %s8 = inlined_call_operand.vmem [shape: bf16[1152,128], index: 8, kind: input, shape index: {}]
  %s9 = inlined_call_operand.vmem [shape: f32[2,8,8,128], index: 9, kind: output, shape index: {}]
  %s10 = sld [smem:[#allocation0]]
  $region69: #{residual_block.7} parent=0
    _
  %s12 = ssub.s32 1, %s10
  %s13 = scalar_select 0, %s12, %s10
  loop: start=0, step=1, limit=18
  $region2: #{residual_block.7} parent=0 // loop_pre_header
    _
  $region3: #{residual_block.7} parent=0 // loop_header
    %s15 = sphi 0, %s19
    %p16 = scmp.ge.s32.totalorder %s15, 18
    %s22 = sphi 0, %s34
    %s23 = sphi 0, %s30
    %s24 = sphi 0, %s22
    %s25 = sphi 0, %s23
    %s26 = sphi 0, %s24
    %s27 = sphi 0, %s25
    %s41 = sphi 0, %s43
    %s44 = sphi 0, %s41
    %s45 = sphi 0, %s44
    %s61 = sphi 0, %s45
    %s71 = sphi 0, %s73
    %s74 = sphi 0, %s71
    %s75 = sphi 0, %s74
    %s91 = sphi 0, %s75
    %s103 = sphi 0, %s105
    %s106 = sphi 0, %s103
    %s107 = sphi 0, %s106
    %s123 = sphi 0, %s107
    %s135 = sphi 0, %s137
    %s138 = sphi 0, %s135
    %s139 = sphi 0, %s138
    %s155 = sphi 0, %s139
    %s167 = sphi 0, %s169
    %s170 = sphi 0, %s167
    %s171 = sphi 0, %s170
    %s187 = sphi 0, %s171
    %s199 = sphi 0, %s201
    %s202 = sphi 0, %s199
    %s203 = sphi 0, %s202
    %s219 = sphi 0, %s203
    %s223 = sphi 0, %s223
    %s225 = sphi 0, %s223
    %s226 = sphi 0, %s225
    %s240 = sphi 0, %s226
    %s244 = sphi 0, %s244
    %s246 = sphi 0, %s244
    %s247 = sphi 0, %s246
    %s261 = sphi 0, %s247
    %s265 = sphi 0, %s265
    %s267 = sphi 0, %s265
    %s268 = sphi 0, %s267
    %s282 = sphi 0, %s268
    %s290 = sphi 0, %s292
    %s293 = sphi 0, %s290
    %s294 = sphi 0, %s293
    %s310 = sphi 0, %s294
  $region4: #{residual_block.7} parent=0 // loop_header_branch
    %18 = sbr.rel (%p16) target = $region8
  $region5: #{residual_block.7} parent=0 // loop_body
    %s20 = ssub.s32 %s15, 1
    %s21 = ssub.s32 %s15, 2
    %s28 = sadd.s32 1, %s23
    %p29 = scmp.ge.s32.totalorder %s28, 8
    %s30 = scalar_select %p29, 0, %s28
    %s31 = sadd.s32 1, %s22
    %s32 = scalar_select %p29, %s31, %s22
    %p33 = scmp.ge.s32.totalorder %s32, 2
    %s34 = scalar_select %p33, 0, %s32
    %s35 = smul.u32 %s23, 2
    %s36 = smul.u32 %s30, 2
    %s37 = ssub.s32 %s22, %s34
    %s38 = ssub.s32 %s35, %s36
    %s39 = sor.u32 %s37, %s38
    %p40 = scmp.eq.s32.totalorder %s39, 0
    %s42 = sadd.s32 %s41, 1
    %s43 = scalar_select %p40, %s41, %s42
    %p46 = pneg %p40
    %p47 = scmp.eq.s32.totalorder %s15, 15
    %p48 = por %p46, %p47
    %p49 = scmp.ne.s32.totalorder %s41, %s44
    %p50 = scmp.eq.s32.totalorder %s15, 0
    %p51 = por %p49, %p50
    %p52 = scmp.ne.s32.totalorder %s41, %s44
    %p53 = scmp.eq.s32.totalorder %s20, 15
    %p54 = por %p52, %p53
    %p55 = scmp.ne.s32.totalorder %s44, %s45
    %p56 = scmp.eq.s32.totalorder %s20, 0
    %p57 = por %p55, %p56
    %p58 = scmp.ne.s32.totalorder %s44, %s45
    %p59 = scmp.eq.s32.totalorder %s21, 15
    %p60 = por %p58, %p59
    %p62 = scmp.ne.s32.totalorder %s45, %s61
    %p63 = scmp.eq.s32.totalorder %s21, 0
    %p64 = por %p62, %p63
    %s65 = smul.u32 %s23, 2
    %s66 = smul.u32 %s30, 2
    %s67 = ssub.s32 %s22, %s34
    %s68 = ssub.s32 %s65, %s66
    %s69 = sor.u32 %s67, %s68
    %p70 = scmp.eq.s32.totalorder %s69, 0
    %s72 = sadd.s32 %s71, 1
    %s73 = scalar_select %p70, %s71, %s72
    %p76 = pneg %p70
    %p77 = scmp.eq.s32.totalorder %s15, 15
    %p78 = por %p76, %p77
    %p79 = scmp.ne.s32.totalorder %s71, %s74
    %p80 = scmp.eq.s32.totalorder %s15, 0
    %p81 = por %p79, %p80
    %p82 = scmp.ne.s32.totalorder %s71, %s74
    %p83 = scmp.eq.s32.totalorder %s20, 15
    %p84 = por %p82, %p83
    %p85 = scmp.ne.s32.totalorder %s74, %s75
    %p86 = scmp.eq.s32.totalorder %s20, 0
    %p87 = por %p85, %p86
    %p88 = scmp.ne.s32.totalorder %s74, %s75
    %p89 = scmp.eq.s32.totalorder %s21, 15
    %p90 = por %p88, %p89
    %p92 = scmp.ne.s32.totalorder %s75, %s91
    %p93 = scmp.eq.s32.totalorder %s21, 0
    %p94 = por %p92, %p93
    %s95 = smul.u32 %s23, 2
    %s96 = sadd.s32 %s95, 1
    %s97 = smul.u32 %s30, 2
    %s98 = sadd.s32 %s97, 1
    %s99 = ssub.s32 %s22, %s34
    %s100 = ssub.s32 %s96, %s98
    %s101 = sor.u32 %s99, %s100
    %p102 = scmp.eq.s32.totalorder %s101, 0
    %s104 = sadd.s32 %s103, 1
    %s105 = scalar_select %p102, %s103, %s104
    %p108 = pneg %p102
    %p109 = scmp.eq.s32.totalorder %s15, 15
    %p110 = por %p108, %p109
    %p111 = scmp.ne.s32.totalorder %s103, %s106
    %p112 = scmp.eq.s32.totalorder %s15, 0
    %p113 = por %p111, %p112
    %p114 = scmp.ne.s32.totalorder %s103, %s106
    %p115 = scmp.eq.s32.totalorder %s20, 15
    %p116 = por %p114, %p115
    %p117 = scmp.ne.s32.totalorder %s106, %s107
    %p118 = scmp.eq.s32.totalorder %s20, 0
    %p119 = por %p117, %p118
    %p120 = scmp.ne.s32.totalorder %s106, %s107
    %p121 = scmp.eq.s32.totalorder %s21, 15
    %p122 = por %p120, %p121
    %p124 = scmp.ne.s32.totalorder %s107, %s123
    %p125 = scmp.eq.s32.totalorder %s21, 0
    %p126 = por %p124, %p125
    %s127 = smul.u32 %s23, 2
    %s128 = sadd.s32 %s127, 1
    %s129 = smul.u32 %s30, 2
    %s130 = sadd.s32 %s129, 1
    %s131 = ssub.s32 %s22, %s34
    %s132 = ssub.s32 %s128, %s130
    %s133 = sor.u32 %s131, %s132
    %p134 = scmp.eq.s32.totalorder %s133, 0
    %s136 = sadd.s32 %s135, 1
    %s137 = scalar_select %p134, %s135, %s136
    %p140 = pneg %p134
    %p141 = scmp.eq.s32.totalorder %s15, 15
    %p142 = por %p140, %p141
    %p143 = scmp.ne.s32.totalorder %s135, %s138
    %p144 = scmp.eq.s32.totalorder %s15, 0
    %p145 = por %p143, %p144
    %p146 = scmp.ne.s32.totalorder %s135, %s138
    %p147 = scmp.eq.s32.totalorder %s20, 15
    %p148 = por %p146, %p147
    %p149 = scmp.ne.s32.totalorder %s138, %s139
    %p150 = scmp.eq.s32.totalorder %s20, 0
    %p151 = por %p149, %p150
    %p152 = scmp.ne.s32.totalorder %s138, %s139
    %p153 = scmp.eq.s32.totalorder %s21, 15
    %p154 = por %p152, %p153
    %p156 = scmp.ne.s32.totalorder %s139, %s155
    %p157 = scmp.eq.s32.totalorder %s21, 0
    %p158 = por %p156, %p157
    %s159 = smul.u32 %s23, 2
    %s160 = sadd.s32 %s159, 2
    %s161 = smul.u32 %s30, 2
    %s162 = sadd.s32 %s161, 2
    %s163 = ssub.s32 %s22, %s34
    %s164 = ssub.s32 %s160, %s162
    %s165 = sor.u32 %s163, %s164
    %p166 = scmp.eq.s32.totalorder %s165, 0
    %s168 = sadd.s32 %s167, 1
    %s169 = scalar_select %p166, %s167, %s168
    %p172 = pneg %p166
    %p173 = scmp.eq.s32.totalorder %s15, 15
    %p174 = por %p172, %p173
    %p175 = scmp.ne.s32.totalorder %s167, %s170
    %p176 = scmp.eq.s32.totalorder %s15, 0
    %p177 = por %p175, %p176
    %p178 = scmp.ne.s32.totalorder %s167, %s170
    %p179 = scmp.eq.s32.totalorder %s20, 15
    %p180 = por %p178, %p179
    %p181 = scmp.ne.s32.totalorder %s170, %s171
    %p182 = scmp.eq.s32.totalorder %s20, 0
    %p183 = por %p181, %p182
    %p184 = scmp.ne.s32.totalorder %s170, %s171
    %p185 = scmp.eq.s32.totalorder %s21, 15
    %p186 = por %p184, %p185
    %p188 = scmp.ne.s32.totalorder %s171, %s187
    %p189 = scmp.eq.s32.totalorder %s21, 0
    %p190 = por %p188, %p189
    %s191 = smul.u32 %s23, 2
    %s192 = sadd.s32 %s191, 2
    %s193 = smul.u32 %s30, 2
    %s194 = sadd.s32 %s193, 2
    %s195 = ssub.s32 %s22, %s34
    %s196 = ssub.s32 %s192, %s194
    %s197 = sor.u32 %s195, %s196
    %p198 = scmp.eq.s32.totalorder %s197, 0
    %s200 = sadd.s32 %s199, 1
    %s201 = scalar_select %p198, %s199, %s200
    %p204 = pneg %p198
    %p205 = scmp.eq.s32.totalorder %s15, 15
    %p206 = por %p204, %p205
    %p207 = scmp.ne.s32.totalorder %s199, %s202
    %p208 = scmp.eq.s32.totalorder %s15, 0
    %p209 = por %p207, %p208
    %p210 = scmp.ne.s32.totalorder %s199, %s202
    %p211 = scmp.eq.s32.totalorder %s20, 15
    %p212 = por %p210, %p211
    %p213 = scmp.ne.s32.totalorder %s202, %s203
    %p214 = scmp.eq.s32.totalorder %s20, 0
    %p215 = por %p213, %p214
    %p216 = scmp.ne.s32.totalorder %s202, %s203
    %p217 = scmp.eq.s32.totalorder %s21, 15
    %p218 = por %p216, %p217
    %p220 = scmp.ne.s32.totalorder %s203, %s219
    %p221 = scmp.eq.s32.totalorder %s21, 0
    %p222 = por %p220, %p221
    %s224 = sadd.s32 %s223, 1
    %p227 = scmp.eq.s32.totalorder %s15, 15
    %p228 = scmp.ne.s32.totalorder %s223, %s225
    %p229 = scmp.eq.s32.totalorder %s15, 0
    %p230 = por %p228, %p229
    %p231 = scmp.ne.s32.totalorder %s223, %s225
    %p232 = scmp.eq.s32.totalorder %s20, 15
    %p233 = por %p231, %p232
    %p234 = scmp.ne.s32.totalorder %s225, %s226
    %p235 = scmp.eq.s32.totalorder %s20, 0
    %p236 = por %p234, %p235
    %p237 = scmp.ne.s32.totalorder %s225, %s226
    %p238 = scmp.eq.s32.totalorder %s21, 15
    %p239 = por %p237, %p238
    %p241 = scmp.ne.s32.totalorder %s226, %s240
    %p242 = scmp.eq.s32.totalorder %s21, 0
    %p243 = por %p241, %p242
    %s245 = sadd.s32 %s244, 1
    %p248 = scmp.eq.s32.totalorder %s15, 15
    %p249 = scmp.ne.s32.totalorder %s244, %s246
    %p250 = scmp.eq.s32.totalorder %s15, 0
    %p251 = por %p249, %p250
    %p252 = scmp.ne.s32.totalorder %s244, %s246
    %p253 = scmp.eq.s32.totalorder %s20, 15
    %p254 = por %p252, %p253
    %p255 = scmp.ne.s32.totalorder %s246, %s247
    %p256 = scmp.eq.s32.totalorder %s20, 0
    %p257 = por %p255, %p256
    %p258 = scmp.ne.s32.totalorder %s246, %s247
    %p259 = scmp.eq.s32.totalorder %s21, 15
    %p260 = por %p258, %p259
    %p262 = scmp.ne.s32.totalorder %s247, %s261
    %p263 = scmp.eq.s32.totalorder %s21, 0
    %p264 = por %p262, %p263
    %s266 = sadd.s32 %s265, 1
    %p269 = scmp.eq.s32.totalorder %s15, 15
    %p270 = scmp.ne.s32.totalorder %s265, %s267
    %p271 = scmp.eq.s32.totalorder %s15, 0
    %p272 = por %p270, %p271
    %p273 = scmp.ne.s32.totalorder %s265, %s267
    %p274 = scmp.eq.s32.totalorder %s20, 15
    %p275 = por %p273, %p274
    %p276 = scmp.ne.s32.totalorder %s267, %s268
    %p277 = scmp.eq.s32.totalorder %s20, 0
    %p278 = por %p276, %p277
    %p279 = scmp.ne.s32.totalorder %s267, %s268
    %p280 = scmp.eq.s32.totalorder %s21, 15
    %p281 = por %p279, %p280
    %p283 = scmp.ne.s32.totalorder %s268, %s282
    %p284 = scmp.eq.s32.totalorder %s21, 0
    %p285 = por %p283, %p284
    %s286 = ssub.s32 %s22, %s34
    %s287 = ssub.s32 %s23, %s30
    %s288 = sor.u32 %s286, %s287
    %p289 = scmp.eq.s32.totalorder %s288, 0
    %s291 = sadd.s32 %s290, 1
    %s292 = scalar_select %p289, %s290, %s291
    %p295 = pneg %p289
    %p296 = scmp.eq.s32.totalorder %s15, 15
    %p297 = por %p295, %p296
    %p298 = scmp.ne.s32.totalorder %s290, %s293
    %p299 = scmp.eq.s32.totalorder %s15, 0
    %p300 = por %p298, %p299
    %p301 = scmp.ne.s32.totalorder %s290, %s293
    %p302 = scmp.eq.s32.totalorder %s20, 15
    %p303 = por %p301, %p302
    %p304 = scmp.ne.s32.totalorder %s293, %s294
    %p305 = scmp.eq.s32.totalorder %s20, 0
    %p306 = por %p304, %p305
    %p307 = scmp.ne.s32.totalorder %s293, %s294
    %p308 = scmp.eq.s32.totalorder %s21, 15
    %p309 = por %p307, %p308
    %p311 = scmp.ne.s32.totalorder %s294, %s310
    %p312 = scmp.eq.s32.totalorder %s21, 0
    %p313 = por %p311, %p312
    %p314 = scmp.le.s32.totalorder 1, %s15
    %p315 = scmp.lt.s32.totalorder %s15, 17
    %p316 = pnand %p314, %p315
    %p317 = pneg %p316
    // Predicated region
    $region9: #{residual_block.7} parent=5 // pred_check
      _
    $region10: #{residual_block.7} parent=5 // pred_check_branch
      %319 = sbr.rel (%p316) target = $region12
    $region11: #{residual_block.7} parent=5 // pred_region
      %s320 = ssub.s32 %s15, 1
      // Predicated region
      $region13: #{residual_block.7} parent=11 // pred_check
        %p321 = pneg %p236
      $region14: #{residual_block.7} parent=11 // pred_check_branch
        %323 = sbr.rel (%p321) target = $region16
      $region15: #{residual_block.7} parent=11 // pred_region
        _
      $region16: #{residual_block.7} parent=11 // pred_fallthru
        _
      // Predicated region
      $region17: #{residual_block.7} parent=11 // pred_check
        %p324 = pneg %p257
      $region18: #{residual_block.7} parent=11 // pred_check_branch
        %326 = sbr.rel (%p324) target = $region20
      $region19: #{residual_block.7} parent=11 // pred_region
        _
      $region20: #{residual_block.7} parent=11 // pred_fallthru
        _
      // Predicated region
      $region21: #{residual_block.7} parent=11 // pred_check
        %p327 = pneg %p278
      $region22: #{residual_block.7} parent=11 // pred_check_branch
        %329 = sbr.rel (%p327) target = $region24
      $region23: #{residual_block.7} parent=11 // pred_region
        _
      $region24: #{residual_block.7} parent=11 // pred_fallthru
        _
    $region12: #{residual_block.7} parent=5 // pred_fallthru
      _
    %p330 = scmp.lt.s32.totalorder %s15, 16
    // Predicated region
    $region25: #{residual_block.7} parent=5 // pred_check
      %p331 = pneg %p330
    $region26: #{residual_block.7} parent=5 // pred_check_branch
      %333 = sbr.rel (%p331) target = $region28
    $region27: #{residual_block.7} parent=5 // pred_region
      // Predicated region
      $region29: #{residual_block.7} parent=27 // pred_check
        %p334 = pneg %p51
      $region30: #{residual_block.7} parent=27 // pred_check_branch
        %336 = sbr.rel (%p334) target = $region32
      $region31: #{residual_block.7} parent=27 // pred_region
        %s337 = smul.u32 %s23, 2
        %p338 = scmp.lt.s32.totalorder %s22, 1
        %s339 = scalar_select %p338, %s22, 1
        %p340 = scmp.lt.s32.totalorder %s337, 17
        %s341 = scalar_select %p340, %s337, 17
        %s342 = smul.addr %s341, 2
        %s343 = smul.addr %s339, 36
        %s344 = sadd.s32 %s342, %s343
        %s345 = smul.addr %s344, 8
        %s346 = scalar_lea.vmem %s0, %s345
        %s347 = smul.u32 %s23, 2
      $region32: #{residual_block.7} parent=27 // pred_fallthru
        _
      // Predicated region
      $region33: #{residual_block.7} parent=27 // pred_check
        %p348 = pneg %p81
      $region34: #{residual_block.7} parent=27 // pred_check_branch
        %350 = sbr.rel (%p348) target = $region36
      $region35: #{residual_block.7} parent=27 // pred_region
        %s351 = smul.u32 %s23, 2
        %p352 = scmp.lt.s32.totalorder %s22, 1
        %s353 = scalar_select %p352, %s22, 1
        %p354 = scmp.lt.s32.totalorder %s351, 17
        %s355 = scalar_select %p354, %s351, 17
        %s356 = smul.addr %s355, 2
        %s357 = smul.addr %s353, 36
        %s358 = sadd.s32 %s356, %s357
        %s359 = smul.addr %s358, 8
        %s360 = scalar_lea.vmem %s1, %s359
        %s361 = smul.u32 %s23, 2
      $region36: #{residual_block.7} parent=27 // pred_fallthru
        _
      // Predicated region
      $region37: #{residual_block.7} parent=27 // pred_check
        %p362 = pneg %p113
      $region38: #{residual_block.7} parent=27 // pred_check_branch
        %364 = sbr.rel (%p362) target = $region40
      $region39: #{residual_block.7} parent=27 // pred_region
        %s365 = smul.u32 %s23, 2
        %s366 = sadd.s32 %s365, 1
        %p367 = scmp.lt.s32.totalorder %s22, 1
        %s368 = scalar_select %p367, %s22, 1
        %p369 = scmp.lt.s32.totalorder %s366, 17
        %s370 = scalar_select %p369, %s366, 17
        %s371 = smul.addr %s370, 2
        %s372 = smul.addr %s368, 36
        %s373 = sadd.s32 %s371, %s372
        %s374 = smul.addr %s373, 8
        %s375 = scalar_lea.vmem %s2, %s374
        %s376 = smul.u32 %s23, 2
        %s377 = sadd.s32 %s376, 1
      $region40: #{residual_block.7} parent=27 // pred_fallthru
        _
      // Predicated region
      $region41: #{residual_block.7} parent=27 // pred_check
        %p378 = pneg %p145
      $region42: #{residual_block.7} parent=27 // pred_check_branch
        %380 = sbr.rel (%p378) target = $region44
      $region43: #{residual_block.7} parent=27 // pred_region
        %s381 = smul.u32 %s23, 2
        %s382 = sadd.s32 %s381, 1
        %p383 = scmp.lt.s32.totalorder %s22, 1
        %s384 = scalar_select %p383, %s22, 1
        %p385 = scmp.lt.s32.totalorder %s382, 17
        %s386 = scalar_select %p385, %s382, 17
        %s387 = smul.addr %s386, 2
        %s388 = smul.addr %s384, 36
        %s389 = sadd.s32 %s387, %s388
        %s390 = smul.addr %s389, 8
        %s391 = scalar_lea.vmem %s3, %s390
        %s392 = smul.u32 %s23, 2
        %s393 = sadd.s32 %s392, 1
      $region44: #{residual_block.7} parent=27 // pred_fallthru
        _
      // Predicated region
      $region45: #{residual_block.7} parent=27 // pred_check
        %p394 = pneg %p177
      $region46: #{residual_block.7} parent=27 // pred_check_branch
        %396 = sbr.rel (%p394) target = $region48
      $region47: #{residual_block.7} parent=27 // pred_region
        %s397 = smul.u32 %s23, 2
        %s398 = sadd.s32 %s397, 2
        %p399 = scmp.lt.s32.totalorder %s22, 1
        %s400 = scalar_select %p399, %s22, 1
        %p401 = scmp.lt.s32.totalorder %s398, 17
        %s402 = scalar_select %p401, %s398, 17
        %s403 = smul.addr %s402, 2
        %s404 = smul.addr %s400, 36
        %s405 = sadd.s32 %s403, %s404
        %s406 = smul.addr %s405, 8
        %s407 = scalar_lea.vmem %s4, %s406
        %s408 = smul.u32 %s23, 2
        %s409 = sadd.s32 %s408, 2
      $region48: #{residual_block.7} parent=27 // pred_fallthru
        _
      // Predicated region
      $region49: #{residual_block.7} parent=27 // pred_check
        %p410 = pneg %p209
      $region50: #{residual_block.7} parent=27 // pred_check_branch
        %412 = sbr.rel (%p410) target = $region52
      $region51: #{residual_block.7} parent=27 // pred_region
        %s413 = smul.u32 %s23, 2
        %s414 = sadd.s32 %s413, 2
        %p415 = scmp.lt.s32.totalorder %s22, 1
        %s416 = scalar_select %p415, %s22, 1
        %p417 = scmp.lt.s32.totalorder %s414, 17
        %s418 = scalar_select %p417, %s414, 17
        %s419 = smul.addr %s418, 2
        %s420 = smul.addr %s416, 36
        %s421 = sadd.s32 %s419, %s420
        %s422 = smul.addr %s421, 8
        %s423 = scalar_lea.vmem %s5, %s422
        %s424 = smul.u32 %s23, 2
        %s425 = sadd.s32 %s424, 2
      $region52: #{residual_block.7} parent=27 // pred_fallthru
        _
    $region28: #{residual_block.7} parent=5 // pred_fallthru
      _
    %p426 = scmp.le.s32.totalorder 1, %s15
    %p427 = scmp.lt.s32.totalorder %s15, 17
    %p428 = pnand %p426, %p427
    %p429 = pneg %p428
    // Predicated region
    $region53: #{residual_block.7} parent=5 // pred_check
      _
    $region54: #{residual_block.7} parent=5 // pred_check_branch
      %431 = sbr.rel (%p428) target = $region56
    $region55: #{residual_block.7} parent=5 // pred_region
      %s432 = ssub.s32 %s15, 1
      %s433 = smul.u32 %s25, 2
      %p434 = scmp.lt.s32.totalorder %s24, 1
      %s435 = scalar_select %p434, %s24, 1
      %p436 = scmp.lt.s32.totalorder %s433, 17
      %s437 = scalar_select %p436, %s433, 17
      %s438 = smul.addr %s437, 2
      %s439 = smul.addr %s435, 36
      %s440 = sadd.s32 %s438, %s439
      %s441 = smul.addr %s440, 8
      %s442 = scalar_lea.vmem %s0, %s441
      %p443 = pneg %p57
      %p444 = pneg %p54
      %s445 = smul.u32 %s25, 2
      %p446 = scmp.lt.s32.totalorder %s24, 1
      %s447 = scalar_select %p446, %s24, 1
      %p448 = scmp.lt.s32.totalorder %s445, 17
      %s449 = scalar_select %p448, %s445, 17
      %s450 = smul.addr %s449, 2
      %s451 = smul.addr %s447, 36
      %s452 = sadd.s32 %s450, %s451
      %s453 = smul.addr %s452, 8
      %s454 = scalar_lea.vmem %s1, %s453
      %p455 = pneg %p87
      %p456 = pneg %p84
      %s457 = smul.u32 %s25, 2
      %s458 = sadd.s32 %s457, 1
      %p459 = scmp.lt.s32.totalorder %s24, 1
      %s460 = scalar_select %p459, %s24, 1
      %p461 = scmp.lt.s32.totalorder %s458, 17
      %s462 = scalar_select %p461, %s458, 17
      %s463 = smul.addr %s462, 2
      %s464 = smul.addr %s460, 36
      %s465 = sadd.s32 %s463, %s464
      %s466 = smul.addr %s465, 8
      %s467 = scalar_lea.vmem %s2, %s466
      %p468 = pneg %p119
      %p469 = pneg %p116
      %s470 = smul.u32 %s25, 2
      %s471 = sadd.s32 %s470, 1
      %p472 = scmp.lt.s32.totalorder %s24, 1
      %s473 = scalar_select %p472, %s24, 1
      %p474 = scmp.lt.s32.totalorder %s471, 17
      %s475 = scalar_select %p474, %s471, 17
      %s476 = smul.addr %s475, 2
      %s477 = smul.addr %s473, 36
      %s478 = sadd.s32 %s476, %s477
      %s479 = smul.addr %s478, 8
      %s480 = scalar_lea.vmem %s3, %s479
      %p481 = pneg %p151
      %p482 = pneg %p148
      %s483 = smul.u32 %s25, 2
      %s484 = sadd.s32 %s483, 2
      %p485 = scmp.lt.s32.totalorder %s24, 1
      %s486 = scalar_select %p485, %s24, 1
      %p487 = scmp.lt.s32.totalorder %s484, 17
      %s488 = scalar_select %p487, %s484, 17
      %s489 = smul.addr %s488, 2
      %s490 = smul.addr %s486, 36
      %s491 = sadd.s32 %s489, %s490
      %s492 = smul.addr %s491, 8
      %s493 = scalar_lea.vmem %s4, %s492
      %p494 = pneg %p183
      %p495 = pneg %p180
      %s496 = smul.u32 %s25, 2
      %s497 = sadd.s32 %s496, 2
      %p498 = scmp.lt.s32.totalorder %s24, 1
      %s499 = scalar_select %p498, %s24, 1
      %p500 = scmp.lt.s32.totalorder %s497, 17
      %s501 = scalar_select %p500, %s497, 17
      %s502 = smul.addr %s501, 2
      %s503 = smul.addr %s499, 36
      %s504 = sadd.s32 %s502, %s503
      %s505 = smul.addr %s504, 8
      %s506 = scalar_lea.vmem %s5, %s505
      %p507 = pneg %p215
      %p508 = pneg %p212
      %p509 = pneg %p236
      %p510 = pneg %p233
      %p511 = pneg %p257
      %p512 = pneg %p254
      %p513 = pneg %p278
      %p514 = pneg %p275
      %p515 = pneg %p306
      %p516 = pneg %p303
      %p517 = scmp.lt.s32.totalorder %s24, 1
      %s518 = scalar_select %p517, %s24, 1
      %p519 = scmp.lt.s32.totalorder %s25, 7
      %s520 = scalar_select %p519, %s25, 7
      %s521 = smul.addr %s518, 8
      %s522 = sadd.s32 %s520, %s521
      %s523 = smul.addr %s522, 8
      %s524 = scalar_lea.vmem %s9, %s523
      %s525 = smul.u32 %s25, 2
      %p526 = scmp.lt.s32.totalorder %s24, 1
      %s527 = scalar_select %p526, %s24, 1
      %p528 = scmp.lt.s32.totalorder %s525, 17
      %s529 = scalar_select %p528, %s525, 17
      %s530 = smul.addr %s529, 2
      %s531 = smul.addr %s527, 36
      %s532 = sadd.s32 %s530, %s531
      %s533 = smul.addr %s532, 8
      %s534 = scalar_lea.vmem %s0, %s533
      %s535 = smul.u32 %s25, 2
      %s536 = smul.u32 %s25, 2
      %p537 = scmp.lt.s32.totalorder %s24, 1
      %s538 = scalar_select %p537, %s24, 1
      %p539 = scmp.lt.s32.totalorder %s536, 17
      %s540 = scalar_select %p539, %s536, 17
      %s541 = smul.addr %s540, 2
      %s542 = smul.addr %s538, 36
      %s543 = sadd.s32 %s541, %s542
      %s544 = smul.addr %s543, 8
      %s545 = scalar_lea.vmem %s1, %s544
      %s546 = smul.u32 %s25, 2
      %s547 = smul.u32 %s25, 2
      %s548 = sadd.s32 %s547, 1
      %p549 = scmp.lt.s32.totalorder %s24, 1
      %s550 = scalar_select %p549, %s24, 1
      %p551 = scmp.lt.s32.totalorder %s548, 17
      %s552 = scalar_select %p551, %s548, 17
      %s553 = smul.addr %s552, 2
      %s554 = smul.addr %s550, 36
      %s555 = sadd.s32 %s553, %s554
      %s556 = smul.addr %s555, 8
      %s557 = scalar_lea.vmem %s2, %s556
      %s558 = smul.u32 %s25, 2
      %s559 = sadd.s32 %s558, 1
      %s560 = smul.u32 %s25, 2
      %s561 = sadd.s32 %s560, 1
      %p562 = scmp.lt.s32.totalorder %s24, 1
      %s563 = scalar_select %p562, %s24, 1
      %p564 = scmp.lt.s32.totalorder %s561, 17
      %s565 = scalar_select %p564, %s561, 17
      %s566 = smul.addr %s565, 2
      %s567 = smul.addr %s563, 36
      %s568 = sadd.s32 %s566, %s567
      %s569 = smul.addr %s568, 8
      %s570 = scalar_lea.vmem %s3, %s569
      %s571 = smul.u32 %s25, 2
      %s572 = sadd.s32 %s571, 1
      %s573 = smul.u32 %s25, 2
      %s574 = sadd.s32 %s573, 2
      %p575 = scmp.lt.s32.totalorder %s24, 1
      %s576 = scalar_select %p575, %s24, 1
      %p577 = scmp.lt.s32.totalorder %s574, 17
      %s578 = scalar_select %p577, %s574, 17
      %s579 = smul.addr %s578, 2
      %s580 = smul.addr %s576, 36
      %s581 = sadd.s32 %s579, %s580
      %s582 = smul.addr %s581, 8
      %s583 = scalar_lea.vmem %s4, %s582
      %s584 = smul.u32 %s25, 2
      %s585 = sadd.s32 %s584, 2
      %s586 = smul.u32 %s25, 2
      %s587 = sadd.s32 %s586, 2
      %p588 = scmp.lt.s32.totalorder %s24, 1
      %s589 = scalar_select %p588, %s24, 1
      %p590 = scmp.lt.s32.totalorder %s587, 17
      %s591 = scalar_select %p590, %s587, 17
      %s592 = smul.addr %s591, 2
      %s593 = smul.addr %s589, 36
      %s594 = sadd.s32 %s592, %s593
      %s595 = smul.addr %s594, 8
      %s596 = scalar_lea.vmem %s5, %s595
      %s597 = smul.u32 %s25, 2
      %s598 = sadd.s32 %s597, 2
      %p599 = scmp.lt.s32.totalorder %s24, 1
      %s600 = scalar_select %p599, %s24, 1
      %p601 = scmp.lt.s32.totalorder %s25, 7
      %s602 = scalar_select %p601, %s25, 7
      %s603 = smul.addr %s600, 8
      %s604 = sadd.s32 %s602, %s603
      %s605 = smul.addr %s604, 8
      %s606 = scalar_lea.vmem %s9, %s605
      %v608 = vld [vmem:[%s6] sm:$0x1]
      %v609 = vld [vmem:[%s7] sm:$0x1]
      %s610 = smul.u32 %s25, 2
      %p611 = scmp.ge.s32.totalorder %s610, 1
      %p612 = scmp.le.s32.totalorder %s610, 16
      %p613 = pnand %p611, %p612
      %p614 = pneg %p613
      %v615 = vld [vmem:[%s534] sm:$0xff]
      %v617 = vlaneseq
      %v618 = vshrl.u32 %v617, 7
      %v619 = vsub.s32 0, %v618
      %v620 = vrot.slane %v608, %v619
      %v622 = vmul.f32 %v615, %v620
      %v624 = vlaneseq
      %v625 = vshrl.u32 %v624, 7
      %v626 = vsub.s32 0, %v625
      %v627 = vrot.slane %v609, %v626
      %v629 = vadd.f32 %v622, %v627
      %v630 = vmax.f32 %v629, 0.0
      %v631 = vlaneseq
      %v632 = vshrl.u32 %v631, 7
      %v633 = vmul.u32 %v632, 2
      %vm634 = vcmp.ge.s32.totalorder %v633, 1
      %vm635 = vcmp.le.s32.totalorder %v633, 16
      %vm636 = vmand %vm634, %vm635
      %s637 = scalar_select %p614, 1, 0
      %v638 = vstv %s637
      %vm639 = vcmp.eq.s32.totalorder %v638, 1
      %vm640 = vmand %vm636, %vm639
      %v641 = vsel %vm640, 1, 0
      %vm642 = vcmp.eq.s32.totalorder %v641, 1
      %v643 = vsel %vm642, %v630, 0.0
      %v644 = vpack.c.bf16 %v643, %v643
      %v645 = vld [vmem:[%s545] sm:$0xff]
      %v646 = vmul.f32 %v645, %v620
      %v647 = vadd.f32 %v646, %v627
      %v648 = vmax.f32 %v647, 0.0
      %v649 = vadd.s32 %v633, 1
      %vm650 = vcmp.ge.s32.totalorder %v649, 1
      %vm651 = vcmp.le.s32.totalorder %v649, 16
      %vm652 = vmand %vm650, %vm651
      %vm653 = vmand %vm652, %vm639
      %v654 = vsel %vm653, 1, 0
      %vm655 = vcmp.eq.s32.totalorder %v654, 1
      %v656 = vsel %vm655, %v648, 0.0
      %v657 = vpack.c.bf16 %v656, %v656
      %v658 = vld [vmem:[%s534 + $0x1] sm:$0xff]
      %v659 = vmul.f32 %v658, %v620
      %v660 = vadd.f32 %v659, %v627
      %v661 = vmax.f32 %v660, 0.0
      %v662 = vadd.s32 %v633, 2
      %vm663 = vcmp.ge.s32.totalorder %v662, 1
      %vm664 = vcmp.le.s32.totalorder %v662, 16
      %vm665 = vmand %vm663, %vm664
      %vm666 = vmand %vm665, %vm639
      %v667 = vsel %vm666, 1, 0
      %vm668 = vcmp.eq.s32.totalorder %v667, 1
      %v669 = vsel %vm668, %v661, 0.0
      %v670 = vpack.c.bf16 %v669, %v669
      %s671 = sadd.s32 %s610, 1
      %p672 = scmp.ge.s32.totalorder %s671, 1
      %p673 = scmp.le.s32.totalorder %s671, 16
      %p674 = pnand %p672, %p673
      %p675 = pneg %p674
      %v676 = vld [vmem:[%s557] sm:$0xff]
      %v677 = vmul.f32 %v676, %v620
      %v678 = vadd.f32 %v677, %v627
      %v679 = vmax.f32 %v678, 0.0
      %s680 = scalar_select %p675, 1, 0
      %v681 = vstv %s680
      %vm682 = vcmp.eq.s32.totalorder %v681, 1
      %vm683 = vmand %vm636, %vm682
      %v684 = vsel %vm683, 1, 0
      %vm685 = vcmp.eq.s32.totalorder %v684, 1
      %v686 = vsel %vm685, %v679, 0.0
      %v687 = vpack.c.bf16 %v686, %v686
      %v688 = vld [vmem:[%s570] sm:$0xff]
      %v689 = vmul.f32 %v688, %v620
      %v690 = vadd.f32 %v689, %v627
      %v691 = vmax.f32 %v690, 0.0
      %vm692 = vmand %vm652, %vm682
      %v693 = vsel %vm692, 1, 0
      %vm694 = vcmp.eq.s32.totalorder %v693, 1
      %v695 = vsel %vm694, %v691, 0.0
      %v696 = vpack.c.bf16 %v695, %v695
      %v697 = vld [vmem:[%s557 + $0x1] sm:$0xff]
      %v698 = vmul.f32 %v697, %v620
      %v699 = vadd.f32 %v698, %v627
      %v700 = vmax.f32 %v699, 0.0
      %vm701 = vmand %vm665, %vm682
      %v702 = vsel %vm701, 1, 0
      %vm703 = vcmp.eq.s32.totalorder %v702, 1
      %v704 = vsel %vm703, %v700, 0.0
      %v705 = vpack.c.bf16 %v704, %v704
      %s706 = sadd.s32 %s610, 2
      %p707 = scmp.ge.s32.totalorder %s706, 1
      %p708 = scmp.le.s32.totalorder %s706, 16
      %p709 = pnand %p707, %p708
      %p710 = pneg %p709
      %v711 = vld [vmem:[%s583] sm:$0xff]
      %v712 = vmul.f32 %v711, %v620
      %v713 = vadd.f32 %v712, %v627
      %v714 = vmax.f32 %v713, 0.0
      %s715 = scalar_select %p710, 1, 0
      %v716 = vstv %s715
      %vm717 = vcmp.eq.s32.totalorder %v716, 1
      %vm718 = vmand %vm636, %vm717
      %v719 = vsel %vm718, 1, 0
      %vm720 = vcmp.eq.s32.totalorder %v719, 1
      %v721 = vsel %vm720, %v714, 0.0
      %v722 = vpack.c.bf16 %v721, %v721
      %v723 = vld [vmem:[%s596] sm:$0xff]
      %v724 = vmul.f32 %v723, %v620
      %v725 = vadd.f32 %v724, %v627
      %v726 = vmax.f32 %v725, 0.0
      %vm727 = vmand %vm652, %vm717
      %v728 = vsel %vm727, 1, 0
      %vm729 = vcmp.eq.s32.totalorder %v728, 1
      %v730 = vsel %vm729, %v726, 0.0
      %v731 = vpack.c.bf16 %v730, %v730
      %v732 = vld [vmem:[%s583 + $0x1] sm:$0xff]
      %v733 = vmul.f32 %v732, %v620
      %v734 = vadd.f32 %v733, %v627
      %v735 = vmax.f32 %v734, 0.0
      %vm736 = vmand %vm665, %vm717
      %v737 = vsel %vm736, 1, 0
      %vm738 = vcmp.eq.s32.totalorder %v737, 1
      %v739 = vsel %vm738, %v735, 0.0
      %v740 = vpack.c.bf16 %v739, %v739
      %v741 = vld [vmem:[%s8] sm:$0xf]
      %v742 = vld [vmem:[%s8 + $0x4] sm:$0xf]
      %v743 = vld [vmem:[%s8 + $0x8] sm:$0xf]
      %v744 = vld [vmem:[%s8 + $0xc] sm:$0xf]
      %v745 = vld [vmem:[%s8 + $0x10] sm:$0xf]
      %v746 = vld [vmem:[%s8 + $0x14] sm:$0xf]
      %v747 = vld [vmem:[%s8 + $0x18] sm:$0xf]
      %v748 = vld [vmem:[%s8 + $0x1c] sm:$0xf]
      %v749 = vld [vmem:[%s8 + $0x20] sm:$0xf]
      %v750 = vld [vmem:[%s8 + $0x24] sm:$0xf]
      %v751 = vld [vmem:[%s8 + $0x28] sm:$0xf]
      %v752 = vld [vmem:[%s8 + $0x2c] sm:$0xf]
      %v753 = vld [vmem:[%s8 + $0x30] sm:$0xf]
      %v754 = vld [vmem:[%s8 + $0x34] sm:$0xf]
      %v755 = vld [vmem:[%s8 + $0x38] sm:$0xf]
      %v756 = vld [vmem:[%s8 + $0x3c] sm:$0xf]
      %v757 = vld [vmem:[%s8 + $0x40] sm:$0xf]
      %v758 = vld [vmem:[%s8 + $0x44] sm:$0xf]
      %v759 = vld [vmem:[%s8 + $0x48] sm:$0xf]
      %v760 = vld [vmem:[%s8 + $0x4c] sm:$0xf]
      %v761 = vld [vmem:[%s8 + $0x50] sm:$0xf]
      %v762 = vld [vmem:[%s8 + $0x54] sm:$0xf]
      %v763 = vld [vmem:[%s8 + $0x58] sm:$0xf]
      %v764 = vld [vmem:[%s8 + $0x5c] sm:$0xf]
      %v765 = vld [vmem:[%s8 + $0x60] sm:$0xf]
      %v766 = vld [vmem:[%s8 + $0x64] sm:$0xf]
      %v767 = vld [vmem:[%s8 + $0x68] sm:$0xf]
      %v768 = vld [vmem:[%s8 + $0x6c] sm:$0xf]
      %v769 = vld [vmem:[%s8 + $0x70] sm:$0xf]
      %v770 = vld [vmem:[%s8 + $0x74] sm:$0xf]
      %v771 = vld [vmem:[%s8 + $0x78] sm:$0xf]
      %v772 = vld [vmem:[%s8 + $0x7c] sm:$0xf]
      %v773 = vld [vmem:[%s8 + $0x80] sm:$0xf]
      %v774 = vld [vmem:[%s8 + $0x84] sm:$0xf]
      %v775 = vld [vmem:[%s8 + $0x88] sm:$0xf]
      %v776 = vld [vmem:[%s8 + $0x8c] sm:$0xf]
      %v777 = vld [vmem:[%s8 + $0x90] sm:$0xf]
      %v778 = vld [vmem:[%s8 + $0x94] sm:$0xf]
      %v779 = vld [vmem:[%s8 + $0x98] sm:$0xf]
      %v780 = vld [vmem:[%s8 + $0x9c] sm:$0xf]
      %v781 = vld [vmem:[%s8 + $0xa0] sm:$0xf]
      %v782 = vld [vmem:[%s8 + $0xa4] sm:$0xf]
      %v783 = vld [vmem:[%s8 + $0xa8] sm:$0xf]
      %v784 = vld [vmem:[%s8 + $0xac] sm:$0xf]
      %v785 = vld [vmem:[%s8 + $0xb0] sm:$0xf]
      %v786 = vld [vmem:[%s8 + $0xb4] sm:$0xf]
      %v787 = vld [vmem:[%s8 + $0xb8] sm:$0xf]
      %v788 = vld [vmem:[%s8 + $0xbc] sm:$0xf]
      %v789 = vld [vmem:[%s8 + $0xc0] sm:$0xf]
      %v790 = vld [vmem:[%s8 + $0xc4] sm:$0xf]
      %v791 = vld [vmem:[%s8 + $0xc8] sm:$0xf]
      %v792 = vld [vmem:[%s8 + $0xcc] sm:$0xf]
      %v793 = vld [vmem:[%s8 + $0xd0] sm:$0xf]
      %v794 = vld [vmem:[%s8 + $0xd4] sm:$0xf]
      %v795 = vld [vmem:[%s8 + $0xd8] sm:$0xf]
      %v796 = vld [vmem:[%s8 + $0xdc] sm:$0xf]
      %v797 = vld [vmem:[%s8 + $0xe0] sm:$0xf]
      %v798 = vld [vmem:[%s8 + $0xe4] sm:$0xf]
      %v799 = vld [vmem:[%s8 + $0xe8] sm:$0xf]
      %v800 = vld [vmem:[%s8 + $0xec] sm:$0xf]
      %v801 = vld [vmem:[%s8 + $0xf0] sm:$0xf]
      %v802 = vld [vmem:[%s8 + $0xf4] sm:$0xf]
      %v803 = vld [vmem:[%s8 + $0xf8] sm:$0xf]
      %v804 = vld [vmem:[%s8 + $0xfc] sm:$0xf]
      %v805 = vld [vmem:[%s8 + $0x100] sm:$0xf]
      %v806 = vld [vmem:[%s8 + $0x104] sm:$0xf]
      %v807 = vld [vmem:[%s8 + $0x108] sm:$0xf]
      %v808 = vld [vmem:[%s8 + $0x10c] sm:$0xf]
      %v809 = vld [vmem:[%s8 + $0x110] sm:$0xf]
      %v810 = vld [vmem:[%s8 + $0x114] sm:$0xf]
      %v811 = vld [vmem:[%s8 + $0x118] sm:$0xf]
      %v812 = vld [vmem:[%s8 + $0x11c] sm:$0xf]
      %v813 = vld [vmem:[%s8 + $0x120] sm:$0xf]
      %v814 = vld [vmem:[%s8 + $0x124] sm:$0xf]
      %v815 = vld [vmem:[%s8 + $0x128] sm:$0xf]
      %v816 = vld [vmem:[%s8 + $0x12c] sm:$0xf]
      %v817 = vld [vmem:[%s8 + $0x130] sm:$0xf]
      %v818 = vld [vmem:[%s8 + $0x134] sm:$0xf]
      %v819 = vld [vmem:[%s8 + $0x138] sm:$0xf]
      %v820 = vld [vmem:[%s8 + $0x13c] sm:$0xf]
      %v821 = vld [vmem:[%s8 + $0x140] sm:$0xf]
      %v822 = vld [vmem:[%s8 + $0x144] sm:$0xf]
      %v823 = vld [vmem:[%s8 + $0x148] sm:$0xf]
      %v824 = vld [vmem:[%s8 + $0x14c] sm:$0xf]
      %v825 = vld [vmem:[%s8 + $0x150] sm:$0xf]
      %v826 = vld [vmem:[%s8 + $0x154] sm:$0xf]
      %v827 = vld [vmem:[%s8 + $0x158] sm:$0xf]
      %v828 = vld [vmem:[%s8 + $0x15c] sm:$0xf]
      %v829 = vld [vmem:[%s8 + $0x160] sm:$0xf]
      %v830 = vld [vmem:[%s8 + $0x164] sm:$0xf]
      %v831 = vld [vmem:[%s8 + $0x168] sm:$0xf]
      %v832 = vld [vmem:[%s8 + $0x16c] sm:$0xf]
      %v833 = vld [vmem:[%s8 + $0x170] sm:$0xf]
      %v834 = vld [vmem:[%s8 + $0x174] sm:$0xf]
      %v835 = vld [vmem:[%s8 + $0x178] sm:$0xf]
      %v836 = vld [vmem:[%s8 + $0x17c] sm:$0xf]
      %v837 = vld [vmem:[%s8 + $0x180] sm:$0xf]
      %v838 = vld [vmem:[%s8 + $0x184] sm:$0xf]
      %v839 = vld [vmem:[%s8 + $0x188] sm:$0xf]
      %v840 = vld [vmem:[%s8 + $0x18c] sm:$0xf]
      %v841 = vld [vmem:[%s8 + $0x190] sm:$0xf]
      %v842 = vld [vmem:[%s8 + $0x194] sm:$0xf]
      %v843 = vld [vmem:[%s8 + $0x198] sm:$0xf]
      %v844 = vld [vmem:[%s8 + $0x19c] sm:$0xf]
      %v845 = vld [vmem:[%s8 + $0x1a0] sm:$0xf]
      %v846 = vld [vmem:[%s8 + $0x1a4] sm:$0xf]
      %v847 = vld [vmem:[%s8 + $0x1a8] sm:$0xf]
      %v848 = vld [vmem:[%s8 + $0x1ac] sm:$0xf]
      %v849 = vld [vmem:[%s8 + $0x1b0] sm:$0xf]
      %v850 = vld [vmem:[%s8 + $0x1b4] sm:$0xf]
      %v851 = vld [vmem:[%s8 + $0x1b8] sm:$0xf]
      %v852 = vld [vmem:[%s8 + $0x1bc] sm:$0xf]
      %v853 = vld [vmem:[%s8 + $0x1c0] sm:$0xf]
      %v854 = vld [vmem:[%s8 + $0x1c4] sm:$0xf]
      %v855 = vld [vmem:[%s8 + $0x1c8] sm:$0xf]
      %v856 = vld [vmem:[%s8 + $0x1cc] sm:$0xf]
      %v857 = vld [vmem:[%s8 + $0x1d0] sm:$0xf]
      %v858 = vld [vmem:[%s8 + $0x1d4] sm:$0xf]
      %v859 = vld [vmem:[%s8 + $0x1d8] sm:$0xf]
      %v860 = vld [vmem:[%s8 + $0x1dc] sm:$0xf]
      %v861 = vld [vmem:[%s8 + $0x1e0] sm:$0xf]
      %v862 = vld [vmem:[%s8 + $0x1e4] sm:$0xf]
      %v863 = vld [vmem:[%s8 + $0x1e8] sm:$0xf]
      %v864 = vld [vmem:[%s8 + $0x1ec] sm:$0xf]
      %v865 = vld [vmem:[%s8 + $0x1f0] sm:$0xf]
      %v866 = vld [vmem:[%s8 + $0x1f4] sm:$0xf]
      %v867 = vld [vmem:[%s8 + $0x1f8] sm:$0xf]
      %v868 = vld [vmem:[%s8 + $0x1fc] sm:$0xf]
      %v869 = vld [vmem:[%s8 + $0x200] sm:$0xf]
      %v870 = vld [vmem:[%s8 + $0x204] sm:$0xf]
      %v871 = vld [vmem:[%s8 + $0x208] sm:$0xf]
      %v872 = vld [vmem:[%s8 + $0x20c] sm:$0xf]
      %v873 = vld [vmem:[%s8 + $0x210] sm:$0xf]
      %v874 = vld [vmem:[%s8 + $0x214] sm:$0xf]
      %v875 = vld [vmem:[%s8 + $0x218] sm:$0xf]
      %v876 = vld [vmem:[%s8 + $0x21c] sm:$0xf]
      %v877 = vld [vmem:[%s8 + $0x220] sm:$0xf]
      %v878 = vld [vmem:[%s8 + $0x224] sm:$0xf]
      %v879 = vld [vmem:[%s8 + $0x228] sm:$0xf]
      %v880 = vld [vmem:[%s8 + $0x22c] sm:$0xf]
      %v881 = vld [vmem:[%s8 + $0x230] sm:$0xf]
      %v882 = vld [vmem:[%s8 + $0x234] sm:$0xf]
      %v883 = vld [vmem:[%s8 + $0x238] sm:$0xf]
      %v884 = vld [vmem:[%s8 + $0x23c] sm:$0xf]
      %v1029 = vunpack.c.l.b16 %v741
      %v1030 = vunpack.c.l.b16 %v742
      %v1031 = vunpack.c.l.b16 %v743
      %v1032 = vunpack.c.l.b16 %v744
      %v1033 = vunpack.c.l.b16 %v745
      %v1034 = vunpack.c.l.b16 %v746
      %v1035 = vunpack.c.l.b16 %v747
      %v1036 = vunpack.c.l.b16 %v748
      %v1037 = vunpack.c.l.b16 %v749
      %v1038 = vunpack.c.l.b16 %v750
      %v1039 = vunpack.c.l.b16 %v751
      %v1040 = vunpack.c.l.b16 %v752
      %v1041 = vunpack.c.l.b16 %v753
      %v1042 = vunpack.c.l.b16 %v754
      %v1043 = vunpack.c.l.b16 %v755
      %v1044 = vunpack.c.l.b16 %v756
      %v1045 = vunpack.c.l.b16 %v757
      %v1046 = vunpack.c.l.b16 %v758
      %v1047 = vunpack.c.l.b16 %v759
      %v1048 = vunpack.c.l.b16 %v760
      %v1049 = vunpack.c.l.b16 %v761
      %v1050 = vunpack.c.l.b16 %v762
      %v1051 = vunpack.c.l.b16 %v763
      %v1052 = vunpack.c.l.b16 %v764
      %v1053 = vunpack.c.l.b16 %v765
      %v1054 = vunpack.c.l.b16 %v766
      %v1055 = vunpack.c.l.b16 %v767
      %v1056 = vunpack.c.l.b16 %v768
      %v1057 = vunpack.c.l.b16 %v769
      %v1058 = vunpack.c.l.b16 %v770
      %v1059 = vunpack.c.l.b16 %v771
      %v1060 = vunpack.c.l.b16 %v772
      %v1061 = vunpack.c.l.b16 %v773
      %v1062 = vunpack.c.l.b16 %v774
      %v1063 = vunpack.c.l.b16 %v775
      %v1064 = vunpack.c.l.b16 %v776
      %v1065 = vunpack.c.l.b16 %v777
      %v1066 = vunpack.c.l.b16 %v778
      %v1067 = vunpack.c.l.b16 %v779
      %v1068 = vunpack.c.l.b16 %v780
      %v1069 = vunpack.c.l.b16 %v781
      %v1070 = vunpack.c.l.b16 %v782
      %v1071 = vunpack.c.l.b16 %v783
      %v1072 = vunpack.c.l.b16 %v784
      %v1073 = vunpack.c.l.b16 %v785
      %v1074 = vunpack.c.l.b16 %v786
      %v1075 = vunpack.c.l.b16 %v787
      %v1076 = vunpack.c.l.b16 %v788
      %v1077 = vunpack.c.l.b16 %v789
      %v1078 = vunpack.c.l.b16 %v790
      %v1079 = vunpack.c.l.b16 %v791
      %v1080 = vunpack.c.l.b16 %v792
      %v1081 = vunpack.c.l.b16 %v793
      %v1082 = vunpack.c.l.b16 %v794
      %v1083 = vunpack.c.l.b16 %v795
      %v1084 = vunpack.c.l.b16 %v796
      %v1085 = vunpack.c.l.b16 %v797
      %v1086 = vunpack.c.l.b16 %v798
      %v1087 = vunpack.c.l.b16 %v799
      %v1088 = vunpack.c.l.b16 %v800
      %v1089 = vunpack.c.l.b16 %v801
      %v1090 = vunpack.c.l.b16 %v802
      %v1091 = vunpack.c.l.b16 %v803
      %v1092 = vunpack.c.l.b16 %v804
      %v1093 = vunpack.c.l.b16 %v805
      %v1094 = vunpack.c.l.b16 %v806
      %v1095 = vunpack.c.l.b16 %v807
      %v1096 = vunpack.c.l.b16 %v808
      %v1097 = vunpack.c.l.b16 %v809
      %v1098 = vunpack.c.l.b16 %v810
      %v1099 = vunpack.c.l.b16 %v811
      %v1100 = vunpack.c.l.b16 %v812
      %v1101 = vunpack.c.l.b16 %v813
      %v1102 = vunpack.c.l.b16 %v814
      %v1103 = vunpack.c.l.b16 %v815
      %v1104 = vunpack.c.l.b16 %v816
      %v1105 = vunpack.c.l.b16 %v817
      %v1106 = vunpack.c.l.b16 %v818
      %v1107 = vunpack.c.l.b16 %v819
      %v1108 = vunpack.c.l.b16 %v820
      %v1109 = vunpack.c.l.b16 %v821
      %v1110 = vunpack.c.l.b16 %v822
      %v1111 = vunpack.c.l.b16 %v823
      %v1112 = vunpack.c.l.b16 %v824
      %v1113 = vunpack.c.l.b16 %v825
      %v1114 = vunpack.c.l.b16 %v826
      %v1115 = vunpack.c.l.b16 %v827
      %v1116 = vunpack.c.l.b16 %v828
      %v1117 = vunpack.c.l.b16 %v829
      %v1118 = vunpack.c.l.b16 %v830
      %v1119 = vunpack.c.l.b16 %v831
      %v1120 = vunpack.c.l.b16 %v832
      %v1121 = vunpack.c.l.b16 %v833
      %v1122 = vunpack.c.l.b16 %v834
      %v1123 = vunpack.c.l.b16 %v835
      %v1124 = vunpack.c.l.b16 %v836
      %v1125 = vunpack.c.l.b16 %v837
      %v1126 = vunpack.c.l.b16 %v838
      %v1127 = vunpack.c.l.b16 %v839
      %v1128 = vunpack.c.l.b16 %v840
      %v1129 = vunpack.c.l.b16 %v841
      %v1130 = vunpack.c.l.b16 %v842
      %v1131 = vunpack.c.l.b16 %v843
      %v1132 = vunpack.c.l.b16 %v844
      %v1133 = vunpack.c.l.b16 %v845
      %v1134 = vunpack.c.l.b16 %v846
      %v1135 = vunpack.c.l.b16 %v847
      %v1136 = vunpack.c.l.b16 %v848
      %v1137 = vunpack.c.l.b16 %v849
      %v1138 = vunpack.c.l.b16 %v850
      %v1139 = vunpack.c.l.b16 %v851
      %v1140 = vunpack.c.l.b16 %v852
      %v1141 = vunpack.c.l.b16 %v853
      %v1142 = vunpack.c.l.b16 %v854
      %v1143 = vunpack.c.l.b16 %v855
      %v1144 = vunpack.c.l.b16 %v856
      %v1145 = vunpack.c.l.b16 %v857
      %v1146 = vunpack.c.l.b16 %v858
      %v1147 = vunpack.c.l.b16 %v859
      %v1148 = vunpack.c.l.b16 %v860
      %v1149 = vunpack.c.l.b16 %v861
      %v1150 = vunpack.c.l.b16 %v862
      %v1151 = vunpack.c.l.b16 %v863
      %v1152 = vunpack.c.l.b16 %v864
      %v1153 = vunpack.c.l.b16 %v865
      %v1154 = vunpack.c.l.b16 %v866
      %v1155 = vunpack.c.l.b16 %v867
      %v1156 = vunpack.c.l.b16 %v868
      %v1157 = vunpack.c.l.b16 %v869
      %v1158 = vunpack.c.l.b16 %v870
      %v1159 = vunpack.c.l.b16 %v871
      %v1160 = vunpack.c.l.b16 %v872
      %v1161 = vunpack.c.l.b16 %v873
      %v1162 = vunpack.c.l.b16 %v874
      %v1163 = vunpack.c.l.b16 %v875
      %v1164 = vunpack.c.l.b16 %v876
      %v1165 = vunpack.c.l.b16 %v877
      %v1166 = vunpack.c.l.b16 %v878
      %v1167 = vunpack.c.l.b16 %v879
      %v1168 = vunpack.c.l.b16 %v880
      %v1169 = vunpack.c.l.b16 %v881
      %v1170 = vunpack.c.l.b16 %v882
      %v1171 = vunpack.c.l.b16 %v883
      %v1172 = vunpack.c.l.b16 %v884
      %v1173 = vpack.c.b16 %v1030, %v1029
      %v1174 = vpack.c.b16 %v1032, %v1031
      %v1175 = vpack.c.b16 %v1034, %v1033
      %v1176 = vpack.c.b16 %v1036, %v1035
      %v1177 = vpack.c.b16 %v1038, %v1037
      %v1178 = vpack.c.b16 %v1040, %v1039
      %v1179 = vpack.c.b16 %v1042, %v1041
      %v1180 = vpack.c.b16 %v1044, %v1043
      %v1181 = vpack.c.b16 %v1046, %v1045
      %v1182 = vpack.c.b16 %v1048, %v1047
      %v1183 = vpack.c.b16 %v1050, %v1049
      %v1184 = vpack.c.b16 %v1052, %v1051
      %v1185 = vpack.c.b16 %v1054, %v1053
      %v1186 = vpack.c.b16 %v1056, %v1055
      %v1187 = vpack.c.b16 %v1058, %v1057
      %v1188 = vpack.c.b16 %v1060, %v1059
      %v1189 = vpack.c.b16 %v1062, %v1061
      %v1190 = vpack.c.b16 %v1064, %v1063
      %v1191 = vpack.c.b16 %v1066, %v1065
      %v1192 = vpack.c.b16 %v1068, %v1067
      %v1193 = vpack.c.b16 %v1070, %v1069
      %v1194 = vpack.c.b16 %v1072, %v1071
      %v1195 = vpack.c.b16 %v1074, %v1073
      %v1196 = vpack.c.b16 %v1076, %v1075
      %v1197 = vpack.c.b16 %v1078, %v1077
      %v1198 = vpack.c.b16 %v1080, %v1079
      %v1199 = vpack.c.b16 %v1082, %v1081
      %v1200 = vpack.c.b16 %v1084, %v1083
      %v1201 = vpack.c.b16 %v1086, %v1085
      %v1202 = vpack.c.b16 %v1088, %v1087
      %v1203 = vpack.c.b16 %v1090, %v1089
      %v1204 = vpack.c.b16 %v1092, %v1091
      %v1205 = vpack.c.b16 %v1094, %v1093
      %v1206 = vpack.c.b16 %v1096, %v1095
      %v1207 = vpack.c.b16 %v1098, %v1097
      %v1208 = vpack.c.b16 %v1100, %v1099
      %v1209 = vpack.c.b16 %v1102, %v1101
      %v1210 = vpack.c.b16 %v1104, %v1103
      %v1211 = vpack.c.b16 %v1106, %v1105
      %v1212 = vpack.c.b16 %v1108, %v1107
      %v1213 = vpack.c.b16 %v1110, %v1109
      %v1214 = vpack.c.b16 %v1112, %v1111
      %v1215 = vpack.c.b16 %v1114, %v1113
      %v1216 = vpack.c.b16 %v1116, %v1115
      %v1217 = vpack.c.b16 %v1118, %v1117
      %v1218 = vpack.c.b16 %v1120, %v1119
      %v1219 = vpack.c.b16 %v1122, %v1121
      %v1220 = vpack.c.b16 %v1124, %v1123
      %v1221 = vpack.c.b16 %v1126, %v1125
      %v1222 = vpack.c.b16 %v1128, %v1127
      %v1223 = vpack.c.b16 %v1130, %v1129
      %v1224 = vpack.c.b16 %v1132, %v1131
      %v1225 = vpack.c.b16 %v1134, %v1133
      %v1226 = vpack.c.b16 %v1136, %v1135
      %v1227 = vpack.c.b16 %v1138, %v1137
      %v1228 = vpack.c.b16 %v1140, %v1139
      %v1229 = vpack.c.b16 %v1142, %v1141
      %v1230 = vpack.c.b16 %v1144, %v1143
      %v1231 = vpack.c.b16 %v1146, %v1145
      %v1232 = vpack.c.b16 %v1148, %v1147
      %v1233 = vpack.c.b16 %v1150, %v1149
      %v1234 = vpack.c.b16 %v1152, %v1151
      %v1235 = vpack.c.b16 %v1154, %v1153
      %v1236 = vpack.c.b16 %v1156, %v1155
      %v1237 = vpack.c.b16 %v1158, %v1157
      %v1238 = vpack.c.b16 %v1160, %v1159
      %v1239 = vpack.c.b16 %v1162, %v1161
      %v1240 = vpack.c.b16 %v1164, %v1163
      %v1241 = vpack.c.b16 %v1166, %v1165
      %v1242 = vpack.c.b16 %v1168, %v1167
      %v1243 = vpack.c.b16 %v1170, %v1169
      %v1244 = vpack.c.b16 %v1172, %v1171
      %1317 = vmatprep.subr.bf16.mxu0 0
      %1318 = vmatpush1.bf16.msra.mxu0 %v1180
      %1319 = vmatprep.subr.bf16.mxu0 0
      %1320 = vmatpush1.bf16.msra.mxu0 %v1179
      %1321 = vmatprep.subr.bf16.mxu0 0
      %1322 = vmatpush1.bf16.msra.mxu0 %v1178
      %1323 = vmatprep.subr.bf16.mxu0 0
      %1324 = vmatpush1.bf16.msra.mxu0 %v1177
      %1325 = vmatprep.subr.bf16.mxu0 0
      %1326 = vmatpush1.bf16.msra.mxu0 %v1176
      %1327 = vmatprep.subr.bf16.mxu0 0
      %1328 = vmatpush1.bf16.msra.mxu0 %v1175
      %1329 = vmatprep.subr.bf16.mxu0 0
      %1330 = vmatpush1.bf16.msra.mxu0 %v1174
      %1331 = vmatprep.subr.bf16.mxu0 0
      %1332 = vmatpush1.bf16.msra.mxu0 %v1173
      %1333 = vmatprep.subr.bf16.mxu0 0
      %1334 = vmatpush2.bf16.msra.mxu0 %v1188
      %1335 = vmatprep.subr.bf16.mxu0 0
      %1336 = vmatpush2.bf16.msra.mxu0 %v1187
      %1337 = vmatprep.subr.bf16.mxu0 0
      %1338 = vmatpush2.bf16.msra.mxu0 %v1186
      %1339 = vmatprep.subr.bf16.mxu0 0
      %1340 = vmatpush2.bf16.msra.mxu0 %v1185
      %1341 = vmatprep.subr.bf16.mxu0 0
      %1342 = vmatpush2.bf16.msra.mxu0 %v1184
      %1343 = vmatprep.subr.bf16.mxu0 0
      %1344 = vmatpush2.bf16.msra.mxu0 %v1183
      %1345 = vmatprep.subr.bf16.mxu0 0
      %1346 = vmatpush2.bf16.msra.mxu0 %v1182
      %1347 = vmatprep.subr.bf16.mxu0 0
      %1348 = vmatpush2.bf16.msra.mxu0 %v1181
      %1349 = vmatprep.mubr.bf16.mxu0 %v657
      %1350 = vmatmul.mubr.bf16.gmra.mxu0 %v644
      %v1351 = vpop.f32.mrf.mxu0
      %v1352 = vadd.f32 0.0, %v1351
      %v1353 = vpop.f32.mrf.mxu0
      %v1354 = vpop.f32.mrf.mxu0
      %v1355 = vpop.f32.mrf.mxu0
      %1356 = vdwg.mxu0
      %1357 = vmatprep.subr.bf16.mxu0 0
      %1358 = vmatpush1.bf16.msra.mxu0 %v1196
      %1359 = vmatprep.subr.bf16.mxu0 0
      %1360 = vmatpush1.bf16.msra.mxu0 %v1195
      %1361 = vmatprep.subr.bf16.mxu0 0
      %1362 = vmatpush1.bf16.msra.mxu0 %v1194
      %1363 = vmatprep.subr.bf16.mxu0 0
      %1364 = vmatpush1.bf16.msra.mxu0 %v1193
      %1365 = vmatprep.subr.bf16.mxu0 0
      %1366 = vmatpush1.bf16.msra.mxu0 %v1192
      %1367 = vmatprep.subr.bf16.mxu0 0
      %1368 = vmatpush1.bf16.msra.mxu0 %v1191
      %1369 = vmatprep.subr.bf16.mxu0 0
      %1370 = vmatpush1.bf16.msra.mxu0 %v1190
      %1371 = vmatprep.subr.bf16.mxu0 0
      %1372 = vmatpush1.bf16.msra.mxu0 %v1189
      %1373 = vmatprep.subr.bf16.mxu0 0
      %1374 = vmatpush2.bf16.msra.mxu0 %v1204
      %1375 = vmatprep.subr.bf16.mxu0 0
      %1376 = vmatpush2.bf16.msra.mxu0 %v1203
      %1377 = vmatprep.subr.bf16.mxu0 0
      %1378 = vmatpush2.bf16.msra.mxu0 %v1202
      %1379 = vmatprep.subr.bf16.mxu0 0
      %1380 = vmatpush2.bf16.msra.mxu0 %v1201
      %1381 = vmatprep.subr.bf16.mxu0 0
      %1382 = vmatpush2.bf16.msra.mxu0 %v1200
      %1383 = vmatprep.subr.bf16.mxu0 0
      %1384 = vmatpush2.bf16.msra.mxu0 %v1199
      %1385 = vmatprep.subr.bf16.mxu0 0
      %1386 = vmatpush2.bf16.msra.mxu0 %v1198
      %1387 = vmatprep.subr.bf16.mxu0 0
      %1388 = vmatpush2.bf16.msra.mxu0 %v1197
      %1389 = vmatprep.mubr.bf16.mxu0 %v687
      %1390 = vmatmul.mubr.bf16.gmra.mxu0 %v670
      %v1391 = vpop.f32.mrf.mxu0
      %v1392 = vadd.f32 %v1352, %v1391
      %v1393 = vpop.f32.mrf.mxu0
      %v1394 = vpop.f32.mrf.mxu0
      %v1395 = vpop.f32.mrf.mxu0
      %1396 = vdwg.mxu0
      %1397 = vmatprep.subr.bf16.mxu0 0
      %1398 = vmatpush1.bf16.msra.mxu0 %v1212
      %1399 = vmatprep.subr.bf16.mxu0 0
      %1400 = vmatpush1.bf16.msra.mxu0 %v1211
      %1401 = vmatprep.subr.bf16.mxu0 0
      %1402 = vmatpush1.bf16.msra.mxu0 %v1210
      %1403 = vmatprep.subr.bf16.mxu0 0
      %1404 = vmatpush1.bf16.msra.mxu0 %v1209
      %1405 = vmatprep.subr.bf16.mxu0 0
      %1406 = vmatpush1.bf16.msra.mxu0 %v1208
      %1407 = vmatprep.subr.bf16.mxu0 0
      %1408 = vmatpush1.bf16.msra.mxu0 %v1207
      %1409 = vmatprep.subr.bf16.mxu0 0
      %1410 = vmatpush1.bf16.msra.mxu0 %v1206
      %1411 = vmatprep.subr.bf16.mxu0 0
      %1412 = vmatpush1.bf16.msra.mxu0 %v1205
      %1413 = vmatprep.subr.bf16.mxu0 0
      %1414 = vmatpush2.bf16.msra.mxu0 %v1220
      %1415 = vmatprep.subr.bf16.mxu0 0
      %1416 = vmatpush2.bf16.msra.mxu0 %v1219
      %1417 = vmatprep.subr.bf16.mxu0 0
      %1418 = vmatpush2.bf16.msra.mxu0 %v1218
      %1419 = vmatprep.subr.bf16.mxu0 0
      %1420 = vmatpush2.bf16.msra.mxu0 %v1217
      %1421 = vmatprep.subr.bf16.mxu0 0
      %1422 = vmatpush2.bf16.msra.mxu0 %v1216
      %1423 = vmatprep.subr.bf16.mxu0 0
      %1424 = vmatpush2.bf16.msra.mxu0 %v1215
      %1425 = vmatprep.subr.bf16.mxu0 0
      %1426 = vmatpush2.bf16.msra.mxu0 %v1214
      %1427 = vmatprep.subr.bf16.mxu0 0
      %1428 = vmatpush2.bf16.msra.mxu0 %v1213
      %1429 = vmatprep.mubr.bf16.mxu0 %v705
      %1430 = vmatmul.mubr.bf16.gmra.mxu0 %v696
      %v1431 = vpop.f32.mrf.mxu0
      %v1432 = vadd.f32 %v1392, %v1431
      %v1433 = vpop.f32.mrf.mxu0
      %v1434 = vpop.f32.mrf.mxu0
      %v1435 = vpop.f32.mrf.mxu0
      %1436 = vdwg.mxu0
      %1437 = vmatprep.subr.bf16.mxu0 0
      %1438 = vmatpush1.bf16.msra.mxu0 %v1228
      %1439 = vmatprep.subr.bf16.mxu0 0
      %1440 = vmatpush1.bf16.msra.mxu0 %v1227
      %1441 = vmatprep.subr.bf16.mxu0 0
      %1442 = vmatpush1.bf16.msra.mxu0 %v1226
      %1443 = vmatprep.subr.bf16.mxu0 0
      %1444 = vmatpush1.bf16.msra.mxu0 %v1225
      %1445 = vmatprep.subr.bf16.mxu0 0
      %1446 = vmatpush1.bf16.msra.mxu0 %v1224
      %1447 = vmatprep.subr.bf16.mxu0 0
      %1448 = vmatpush1.bf16.msra.mxu0 %v1223
      %1449 = vmatprep.subr.bf16.mxu0 0
      %1450 = vmatpush1.bf16.msra.mxu0 %v1222
      %1451 = vmatprep.subr.bf16.mxu0 0
      %1452 = vmatpush1.bf16.msra.mxu0 %v1221
      %1453 = vmatprep.subr.bf16.mxu0 0
      %1454 = vmatpush2.bf16.msra.mxu0 %v1236
      %1455 = vmatprep.subr.bf16.mxu0 0
      %1456 = vmatpush2.bf16.msra.mxu0 %v1235
      %1457 = vmatprep.subr.bf16.mxu0 0
      %1458 = vmatpush2.bf16.msra.mxu0 %v1234
      %1459 = vmatprep.subr.bf16.mxu0 0
      %1460 = vmatpush2.bf16.msra.mxu0 %v1233
      %1461 = vmatprep.subr.bf16.mxu0 0
      %1462 = vmatpush2.bf16.msra.mxu0 %v1232
      %1463 = vmatprep.subr.bf16.mxu0 0
      %1464 = vmatpush2.bf16.msra.mxu0 %v1231
      %1465 = vmatprep.subr.bf16.mxu0 0
      %1466 = vmatpush2.bf16.msra.mxu0 %v1230
      %1467 = vmatprep.subr.bf16.mxu0 0
      %1468 = vmatpush2.bf16.msra.mxu0 %v1229
      %1469 = vmatprep.mubr.bf16.mxu0 %v731
      %1470 = vmatmul.mubr.bf16.gmra.mxu0 %v722
      %v1471 = vpop.f32.mrf.mxu0
      %v1472 = vadd.f32 %v1432, %v1471
      %v1473 = vpop.f32.mrf.mxu0
      %v1474 = vpop.f32.mrf.mxu0
      %v1475 = vpop.f32.mrf.mxu0
      %1476 = vdwg.mxu0
      %1477 = vmatprep.subr.bf16.mxu0 0
      %1478 = vmatpush1.bf16.msra.mxu0 %v1244
      %1479 = vmatprep.subr.bf16.mxu0 0
      %1480 = vmatpush1.bf16.msra.mxu0 %v1243
      %1481 = vmatprep.subr.bf16.mxu0 0
      %1482 = vmatpush1.bf16.msra.mxu0 %v1242
      %1483 = vmatprep.subr.bf16.mxu0 0
      %1484 = vmatpush1.bf16.msra.mxu0 %v1241
      %1485 = vmatprep.subr.bf16.mxu0 0
      %1486 = vmatpush1.bf16.msra.mxu0 %v1240
      %1487 = vmatprep.subr.bf16.mxu0 0
      %1488 = vmatpush1.bf16.msra.mxu0 %v1239
      %1489 = vmatprep.subr.bf16.mxu0 0
      %1490 = vmatpush1.bf16.msra.mxu0 %v1238
      %1491 = vmatprep.subr.bf16.mxu0 0
      %1492 = vmatpush1.bf16.msra.mxu0 %v1237
      %1493 = vmatprep.subr.bf16.mxu0 0
      %1494 = vmatpush2.bf16.msra.mxu0 0
      %1495 = vmatprep.subr.bf16.mxu0 0
      %1496 = vmatpush2.bf16.msra.mxu0 0
      %1497 = vmatprep.subr.bf16.mxu0 0
      %1498 = vmatpush2.bf16.msra.mxu0 0
      %1499 = vmatprep.subr.bf16.mxu0 0
      %1500 = vmatpush2.bf16.msra.mxu0 0
      %1501 = vmatprep.subr.bf16.mxu0 0
      %1502 = vmatpush2.bf16.msra.mxu0 0
      %1503 = vmatprep.subr.bf16.mxu0 0
      %1504 = vmatpush2.bf16.msra.mxu0 0
      %1505 = vmatprep.subr.bf16.mxu0 0
      %1506 = vmatpush2.bf16.msra.mxu0 0
      %1507 = vmatprep.subr.bf16.mxu0 0
      %1508 = vmatpush2.bf16.msra.mxu0 0
      %1509 = vmatprep.mubr.bf16.mxu0 0
      %1510 = vmatmul.mubr.bf16.gmra.mxu0 %v740
      %v1511 = vpop.f32.mrf.mxu0
      %v1512 = vadd.f32 %v1472, %v1511
      %v1513 = vpop.f32.mrf.mxu0
      %v1514 = vpop.f32.mrf.mxu0
      %v1515 = vpop.f32.mrf.mxu0
      %1516 = vdwg.mxu0
      %1517 = vst [vmem:[%s606] sm:$0xff] %v1512
      %p1518 = scmp.lt.s32.totalorder %s24, 1
      %s1519 = scalar_select %p1518, %s24, 1
      %p1520 = scmp.lt.s32.totalorder %s25, 7
      %s1521 = scalar_select %p1520, %s25, 7
      %s1522 = smul.addr %s1519, 8
      %s1523 = sadd.s32 %s1521, %s1522
      %s1524 = smul.addr %s1523, 8
      %s1525 = scalar_lea.vmem %s9, %s1524
      // Predicated region
      $region57: #{residual_block.7} parent=55 // pred_check
        %p1526 = pneg %p303
      $region58: #{residual_block.7} parent=55 // pred_check_branch
        %1528 = sbr.rel (%p1526) target = $region60
      $region59: #{residual_block.7} parent=55 // pred_region
        _
      $region60: #{residual_block.7} parent=55 // pred_fallthru
        _
    $region56: #{residual_block.7} parent=5 // pred_fallthru
      _
    %p1529 = scmp.le.s32.totalorder 2, %s15
    // Predicated region
    $region61: #{residual_block.7} parent=5 // pred_check
      %p1530 = pneg %p1529
    $region62: #{residual_block.7} parent=5 // pred_check_branch
      %1532 = sbr.rel (%p1530) target = $region64
    $region63: #{residual_block.7} parent=5 // pred_region
      %s1533 = ssub.s32 %s15, 2
      // Predicated region
      $region65: #{residual_block.7} parent=63 // pred_check
        %p1534 = pneg %p309
      $region66: #{residual_block.7} parent=63 // pred_check_branch
        %1536 = sbr.rel (%p1534) target = $region68
      $region67: #{residual_block.7} parent=63 // pred_region
        %p1537 = scmp.lt.s32.totalorder %s26, 1
        %s1538 = scalar_select %p1537, %s26, 1
        %p1539 = scmp.lt.s32.totalorder %s27, 7
        %s1540 = scalar_select %p1539, %s27, 7
        %s1541 = smul.addr %s1538, 8
        %s1542 = sadd.s32 %s1540, %s1541
        %s1543 = smul.addr %s1542, 8
        %s1544 = scalar_lea.vmem %s9, %s1543
      $region68: #{residual_block.7} parent=63 // pred_fallthru
        _
    $region64: #{residual_block.7} parent=5 // pred_fallthru
      _
  $region6: #{residual_block.7} parent=0 // loop_footer
    %s19 = sadd.s32 1, %s15
  $region7: #{residual_block.7} parent=0 // loop_footer_branch
    %14 = sbr.rel target = $region3
  $region8: #{residual_block.7} parent=0 // loop_exit
    _

// kernel: residual_block.9
$region0: #{residual_block.9}
  #allocation0 [shape = 'u32[]', space=smem, size = 0x4, offset = 0x4, fixed_abs, tag = 'smem constant byte address 0x4 - core index']
  #allocation1 [shape = 'u32[144,128]{1,0:T(1,128)}', space=vmem, size = 0x12000, scoped, tag = 'internal scratch']
  %s0 = inlined_call_operand.vmem [shape: f32[2,10,10,128], index: 0, kind: input, shape index: {}, may-alias: {0,1,2}]
  %s1 = inlined_call_operand.vmem [shape: f32[2,10,10,128], index: 1, kind: input, shape index: {}, may-alias: {0,1,2}]
  %s2 = inlined_call_operand.vmem [shape: f32[2,10,10,128], index: 2, kind: input, shape index: {}, may-alias: {0,1,2}]
  %s3 = inlined_call_operand.vmem [shape: f32[1,128], index: 3, kind: input, shape index: {}]
  %s4 = inlined_call_operand.vmem [shape: f32[1,128], index: 4, kind: input, shape index: {}]
  %s5 = inlined_call_operand.vmem [shape: bf16[1152,128], index: 5, kind: input, shape index: {}]
  %s6 = inlined_call_operand.vmem [shape: f32[2,8,8,128], index: 6, kind: output, shape index: {}]
  %s7 = sld [smem:[#allocation0]]
  $region57: #{residual_block.9} parent=0
    _
  %s9 = ssub.s32 1, %s7
  %s10 = scalar_select 0, %s9, %s7
  loop: start=0, step=1, limit=18
  $region2: #{residual_block.9} parent=0 // loop_pre_header
    _
  $region3: #{residual_block.9} parent=0 // loop_header
    %s12 = sphi 0, %s16
    %p13 = scmp.ge.s32.totalorder %s12, 18
    %s19 = sphi 0, %s31
    %s20 = sphi 0, %s27
    %s21 = sphi 0, %s19
    %s22 = sphi 0, %s20
    %s23 = sphi 0, %s21
    %s24 = sphi 0, %s22
    %s36 = sphi 0, %s38
    %s39 = sphi 0, %s36
    %s40 = sphi 0, %s39
    %s56 = sphi 0, %s40
    %s66 = sphi 0, %s68
    %s69 = sphi 0, %s66
    %s70 = sphi 0, %s69
    %s86 = sphi 0, %s70
    %s96 = sphi 0, %s98
    %s99 = sphi 0, %s96
    %s100 = sphi 0, %s99
    %s116 = sphi 0, %s100
    %s120 = sphi 0, %s120
    %s122 = sphi 0, %s120
    %s123 = sphi 0, %s122
    %s137 = sphi 0, %s123
    %s141 = sphi 0, %s141
    %s143 = sphi 0, %s141
    %s144 = sphi 0, %s143
    %s158 = sphi 0, %s144
    %s162 = sphi 0, %s162
    %s164 = sphi 0, %s162
    %s165 = sphi 0, %s164
    %s179 = sphi 0, %s165
    %s187 = sphi 0, %s189
    %s190 = sphi 0, %s187
    %s191 = sphi 0, %s190
    %s207 = sphi 0, %s191
  $region4: #{residual_block.9} parent=0 // loop_header_branch
    %15 = sbr.rel (%p13) target = $region8
  $region5: #{residual_block.9} parent=0 // loop_body
    %s17 = ssub.s32 %s12, 1
    %s18 = ssub.s32 %s12, 2
    %s25 = sadd.s32 1, %s20
    %p26 = scmp.ge.s32.totalorder %s25, 8
    %s27 = scalar_select %p26, 0, %s25
    %s28 = sadd.s32 1, %s19
    %s29 = scalar_select %p26, %s28, %s19
    %p30 = scmp.ge.s32.totalorder %s29, 2
    %s31 = scalar_select %p30, 0, %s29
    %s32 = ssub.s32 %s19, %s31
    %s33 = ssub.s32 %s20, %s27
    %s34 = sor.u32 %s32, %s33
    %p35 = scmp.eq.s32.totalorder %s34, 0
    %s37 = sadd.s32 %s36, 1
    %s38 = scalar_select %p35, %s36, %s37
    %p41 = pneg %p35
    %p42 = scmp.eq.s32.totalorder %s12, 15
    %p43 = por %p41, %p42
    %p44 = scmp.ne.s32.totalorder %s36, %s39
    %p45 = scmp.eq.s32.totalorder %s12, 0
    %p46 = por %p44, %p45
    %p47 = scmp.ne.s32.totalorder %s36, %s39
    %p48 = scmp.eq.s32.totalorder %s17, 15
    %p49 = por %p47, %p48
    %p50 = scmp.ne.s32.totalorder %s39, %s40
    %p51 = scmp.eq.s32.totalorder %s17, 0
    %p52 = por %p50, %p51
    %p53 = scmp.ne.s32.totalorder %s39, %s40
    %p54 = scmp.eq.s32.totalorder %s18, 15
    %p55 = por %p53, %p54
    %p57 = scmp.ne.s32.totalorder %s40, %s56
    %p58 = scmp.eq.s32.totalorder %s18, 0
    %p59 = por %p57, %p58
    %s60 = sadd.s32 %s20, 1
    %s61 = sadd.s32 %s27, 1
    %s62 = ssub.s32 %s19, %s31
    %s63 = ssub.s32 %s60, %s61
    %s64 = sor.u32 %s62, %s63
    %p65 = scmp.eq.s32.totalorder %s64, 0
    %s67 = sadd.s32 %s66, 1
    %s68 = scalar_select %p65, %s66, %s67
    %p71 = pneg %p65
    %p72 = scmp.eq.s32.totalorder %s12, 15
    %p73 = por %p71, %p72
    %p74 = scmp.ne.s32.totalorder %s66, %s69
    %p75 = scmp.eq.s32.totalorder %s12, 0
    %p76 = por %p74, %p75
    %p77 = scmp.ne.s32.totalorder %s66, %s69
    %p78 = scmp.eq.s32.totalorder %s17, 15
    %p79 = por %p77, %p78
    %p80 = scmp.ne.s32.totalorder %s69, %s70
    %p81 = scmp.eq.s32.totalorder %s17, 0
    %p82 = por %p80, %p81
    %p83 = scmp.ne.s32.totalorder %s69, %s70
    %p84 = scmp.eq.s32.totalorder %s18, 15
    %p85 = por %p83, %p84
    %p87 = scmp.ne.s32.totalorder %s70, %s86
    %p88 = scmp.eq.s32.totalorder %s18, 0
    %p89 = por %p87, %p88
    %s90 = sadd.s32 %s20, 2
    %s91 = sadd.s32 %s27, 2
    %s92 = ssub.s32 %s19, %s31
    %s93 = ssub.s32 %s90, %s91
    %s94 = sor.u32 %s92, %s93
    %p95 = scmp.eq.s32.totalorder %s94, 0
    %s97 = sadd.s32 %s96, 1
    %s98 = scalar_select %p95, %s96, %s97
    %p101 = pneg %p95
    %p102 = scmp.eq.s32.totalorder %s12, 15
    %p103 = por %p101, %p102
    %p104 = scmp.ne.s32.totalorder %s96, %s99
    %p105 = scmp.eq.s32.totalorder %s12, 0
    %p106 = por %p104, %p105
    %p107 = scmp.ne.s32.totalorder %s96, %s99
    %p108 = scmp.eq.s32.totalorder %s17, 15
    %p109 = por %p107, %p108
    %p110 = scmp.ne.s32.totalorder %s99, %s100
    %p111 = scmp.eq.s32.totalorder %s17, 0
    %p112 = por %p110, %p111
    %p113 = scmp.ne.s32.totalorder %s99, %s100
    %p114 = scmp.eq.s32.totalorder %s18, 15
    %p115 = por %p113, %p114
    %p117 = scmp.ne.s32.totalorder %s100, %s116
    %p118 = scmp.eq.s32.totalorder %s18, 0
    %p119 = por %p117, %p118
    %s121 = sadd.s32 %s120, 1
    %p124 = scmp.eq.s32.totalorder %s12, 15
    %p125 = scmp.ne.s32.totalorder %s120, %s122
    %p126 = scmp.eq.s32.totalorder %s12, 0
    %p127 = por %p125, %p126
    %p128 = scmp.ne.s32.totalorder %s120, %s122
    %p129 = scmp.eq.s32.totalorder %s17, 15
    %p130 = por %p128, %p129
    %p131 = scmp.ne.s32.totalorder %s122, %s123
    %p132 = scmp.eq.s32.totalorder %s17, 0
    %p133 = por %p131, %p132
    %p134 = scmp.ne.s32.totalorder %s122, %s123
    %p135 = scmp.eq.s32.totalorder %s18, 15
    %p136 = por %p134, %p135
    %p138 = scmp.ne.s32.totalorder %s123, %s137
    %p139 = scmp.eq.s32.totalorder %s18, 0
    %p140 = por %p138, %p139
    %s142 = sadd.s32 %s141, 1
    %p145 = scmp.eq.s32.totalorder %s12, 15
    %p146 = scmp.ne.s32.totalorder %s141, %s143
    %p147 = scmp.eq.s32.totalorder %s12, 0
    %p148 = por %p146, %p147
    %p149 = scmp.ne.s32.totalorder %s141, %s143
    %p150 = scmp.eq.s32.totalorder %s17, 15
    %p151 = por %p149, %p150
    %p152 = scmp.ne.s32.totalorder %s143, %s144
    %p153 = scmp.eq.s32.totalorder %s17, 0
    %p154 = por %p152, %p153
    %p155 = scmp.ne.s32.totalorder %s143, %s144
    %p156 = scmp.eq.s32.totalorder %s18, 15
    %p157 = por %p155, %p156
    %p159 = scmp.ne.s32.totalorder %s144, %s158
    %p160 = scmp.eq.s32.totalorder %s18, 0
    %p161 = por %p159, %p160
    %s163 = sadd.s32 %s162, 1
    %p166 = scmp.eq.s32.totalorder %s12, 15
    %p167 = scmp.ne.s32.totalorder %s162, %s164
    %p168 = scmp.eq.s32.totalorder %s12, 0
    %p169 = por %p167, %p168
    %p170 = scmp.ne.s32.totalorder %s162, %s164
    %p171 = scmp.eq.s32.totalorder %s17, 15
    %p172 = por %p170, %p171
    %p173 = scmp.ne.s32.totalorder %s164, %s165
    %p174 = scmp.eq.s32.totalorder %s17, 0
    %p175 = por %p173, %p174
    %p176 = scmp.ne.s32.totalorder %s164, %s165
    %p177 = scmp.eq.s32.totalorder %s18, 15
    %p178 = por %p176, %p177
    %p180 = scmp.ne.s32.totalorder %s165, %s179
    %p181 = scmp.eq.s32.totalorder %s18, 0
    %p182 = por %p180, %p181
    %s183 = ssub.s32 %s19, %s31
    %s184 = ssub.s32 %s20, %s27
    %s185 = sor.u32 %s183, %s184
    %p186 = scmp.eq.s32.totalorder %s185, 0
    %s188 = sadd.s32 %s187, 1
    %s189 = scalar_select %p186, %s187, %s188
    %p192 = pneg %p186
    %p193 = scmp.eq.s32.totalorder %s12, 15
    %p194 = por %p192, %p193
    %p195 = scmp.ne.s32.totalorder %s187, %s190
    %p196 = scmp.eq.s32.totalorder %s12, 0
    %p197 = por %p195, %p196
    %p198 = scmp.ne.s32.totalorder %s187, %s190
    %p199 = scmp.eq.s32.totalorder %s17, 15
    %p200 = por %p198, %p199
    %p201 = scmp.ne.s32.totalorder %s190, %s191
    %p202 = scmp.eq.s32.totalorder %s17, 0
    %p203 = por %p201, %p202
    %p204 = scmp.ne.s32.totalorder %s190, %s191
    %p205 = scmp.eq.s32.totalorder %s18, 15
    %p206 = por %p204, %p205
    %p208 = scmp.ne.s32.totalorder %s191, %s207
    %p209 = scmp.eq.s32.totalorder %s18, 0
    %p210 = por %p208, %p209
    %p211 = scmp.le.s32.totalorder 1, %s12
    %p212 = scmp.lt.s32.totalorder %s12, 17
    %p213 = pnand %p211, %p212
    %p214 = pneg %p213
    // Predicated region
    $region9: #{residual_block.9} parent=5 // pred_check
      _
    $region10: #{residual_block.9} parent=5 // pred_check_branch
      %216 = sbr.rel (%p213) target = $region12
    $region11: #{residual_block.9} parent=5 // pred_region
      %s217 = ssub.s32 %s12, 1
      // Predicated region
      $region13: #{residual_block.9} parent=11 // pred_check
        %p218 = pneg %p133
      $region14: #{residual_block.9} parent=11 // pred_check_branch
        %220 = sbr.rel (%p218) target = $region16
      $region15: #{residual_block.9} parent=11 // pred_region
        _
      $region16: #{residual_block.9} parent=11 // pred_fallthru
        _
      // Predicated region
      $region17: #{residual_block.9} parent=11 // pred_check
        %p221 = pneg %p154
      $region18: #{residual_block.9} parent=11 // pred_check_branch
        %223 = sbr.rel (%p221) target = $region20
      $region19: #{residual_block.9} parent=11 // pred_region
        _
      $region20: #{residual_block.9} parent=11 // pred_fallthru
        _
      // Predicated region
      $region21: #{residual_block.9} parent=11 // pred_check
        %p224 = pneg %p175
      $region22: #{residual_block.9} parent=11 // pred_check_branch
        %226 = sbr.rel (%p224) target = $region24
      $region23: #{residual_block.9} parent=11 // pred_region
        _
      $region24: #{residual_block.9} parent=11 // pred_fallthru
        _
    $region12: #{residual_block.9} parent=5 // pred_fallthru
      _
    %p227 = scmp.lt.s32.totalorder %s12, 16
    // Predicated region
    $region25: #{residual_block.9} parent=5 // pred_check
      %p228 = pneg %p227
    $region26: #{residual_block.9} parent=5 // pred_check_branch
      %230 = sbr.rel (%p228) target = $region28
    $region27: #{residual_block.9} parent=5 // pred_region
      // Predicated region
      $region29: #{residual_block.9} parent=27 // pred_check
        %p231 = pneg %p46
      $region30: #{residual_block.9} parent=27 // pred_check_branch
        %233 = sbr.rel (%p231) target = $region32
      $region31: #{residual_block.9} parent=27 // pred_region
        %p234 = scmp.lt.s32.totalorder %s19, 1
        %s235 = scalar_select %p234, %s19, 1
        %p236 = scmp.lt.s32.totalorder %s20, 9
        %s237 = scalar_select %p236, %s20, 9
        %s238 = smul.addr %s237, 2
        %s239 = smul.addr %s235, 20
        %s240 = sadd.s32 %s238, %s239
        %s241 = smul.addr %s240, 8
        %s242 = scalar_lea.vmem %s0, %s241
      $region32: #{residual_block.9} parent=27 // pred_fallthru
        _
      // Predicated region
      $region33: #{residual_block.9} parent=27 // pred_check
        %p243 = pneg %p76
      $region34: #{residual_block.9} parent=27 // pred_check_branch
        %245 = sbr.rel (%p243) target = $region36
      $region35: #{residual_block.9} parent=27 // pred_region
        %s246 = sadd.s32 %s20, 1
        %p247 = scmp.lt.s32.totalorder %s19, 1
        %s248 = scalar_select %p247, %s19, 1
        %p249 = scmp.lt.s32.totalorder %s246, 9
        %s250 = scalar_select %p249, %s246, 9
        %s251 = smul.addr %s250, 2
        %s252 = smul.addr %s248, 20
        %s253 = sadd.s32 %s251, %s252
        %s254 = smul.addr %s253, 8
        %s255 = scalar_lea.vmem %s1, %s254
        %s256 = sadd.s32 %s20, 1
      $region36: #{residual_block.9} parent=27 // pred_fallthru
        _
      // Predicated region
      $region37: #{residual_block.9} parent=27 // pred_check
        %p257 = pneg %p106
      $region38: #{residual_block.9} parent=27 // pred_check_branch
        %259 = sbr.rel (%p257) target = $region40
      $region39: #{residual_block.9} parent=27 // pred_region
        %s260 = sadd.s32 %s20, 2
        %p261 = scmp.lt.s32.totalorder %s19, 1
        %s262 = scalar_select %p261, %s19, 1
        %p263 = scmp.lt.s32.totalorder %s260, 9
        %s264 = scalar_select %p263, %s260, 9
        %s265 = smul.addr %s264, 2
        %s266 = smul.addr %s262, 20
        %s267 = sadd.s32 %s265, %s266
        %s268 = smul.addr %s267, 8
        %s269 = scalar_lea.vmem %s2, %s268
        %s270 = sadd.s32 %s20, 2
      $region40: #{residual_block.9} parent=27 // pred_fallthru
        _
    $region28: #{residual_block.9} parent=5 // pred_fallthru
      _
    %p271 = scmp.le.s32.totalorder 1, %s12
    %p272 = scmp.lt.s32.totalorder %s12, 17
    %p273 = pnand %p271, %p272
    %p274 = pneg %p273
    // Predicated region
    $region41: #{residual_block.9} parent=5 // pred_check
      _
    $region42: #{residual_block.9} parent=5 // pred_check_branch
      %276 = sbr.rel (%p273) target = $region44
    $region43: #{residual_block.9} parent=5 // pred_region
      %s277 = ssub.s32 %s12, 1
      %p278 = scmp.lt.s32.totalorder %s21, 1
      %s279 = scalar_select %p278, %s21, 1
      %p280 = scmp.lt.s32.totalorder %s22, 9
      %s281 = scalar_select %p280, %s22, 9
      %s282 = smul.addr %s281, 2
      %s283 = smul.addr %s279, 20
      %s284 = sadd.s32 %s282, %s283
      %s285 = smul.addr %s284, 8
      %s286 = scalar_lea.vmem %s0, %s285
      %p287 = pneg %p52
      %p288 = pneg %p49
      %s289 = sadd.s32 %s22, 1
      %p290 = scmp.lt.s32.totalorder %s21, 1
      %s291 = scalar_select %p290, %s21, 1
      %p292 = scmp.lt.s32.totalorder %s289, 9
      %s293 = scalar_select %p292, %s289, 9
      %s294 = smul.addr %s293, 2
      %s295 = smul.addr %s291, 20
      %s296 = sadd.s32 %s294, %s295
      %s297 = smul.addr %s296, 8
      %s298 = scalar_lea.vmem %s1, %s297
      %p299 = pneg %p82
      %p300 = pneg %p79
      %s301 = sadd.s32 %s22, 2
      %p302 = scmp.lt.s32.totalorder %s21, 1
      %s303 = scalar_select %p302, %s21, 1
      %p304 = scmp.lt.s32.totalorder %s301, 9
      %s305 = scalar_select %p304, %s301, 9
      %s306 = smul.addr %s305, 2
      %s307 = smul.addr %s303, 20
      %s308 = sadd.s32 %s306, %s307
      %s309 = smul.addr %s308, 8
      %s310 = scalar_lea.vmem %s2, %s309
      %p311 = pneg %p112
      %p312 = pneg %p109
      %p313 = pneg %p133
      %p314 = pneg %p130
      %p315 = pneg %p154
      %p316 = pneg %p151
      %p317 = pneg %p175
      %p318 = pneg %p172
      %p319 = pneg %p203
      %p320 = pneg %p200
      %p321 = scmp.lt.s32.totalorder %s21, 1
      %s322 = scalar_select %p321, %s21, 1
      %p323 = scmp.lt.s32.totalorder %s22, 7
      %s324 = scalar_select %p323, %s22, 7
      %s325 = smul.addr %s322, 8
      %s326 = sadd.s32 %s324, %s325
      %s327 = smul.addr %s326, 8
      %s328 = scalar_lea.vmem %s6, %s327
      %p329 = scmp.lt.s32.totalorder %s21, 1
      %s330 = scalar_select %p329, %s21, 1
      %p331 = scmp.lt.s32.totalorder %s22, 9
      %s332 = scalar_select %p331, %s22, 9
      %s333 = smul.addr %s332, 2
      %s334 = smul.addr %s330, 20
      %s335 = sadd.s32 %s333, %s334
      %s336 = smul.addr %s335, 8
      %s337 = scalar_lea.vmem %s0, %s336
      %s338 = sadd.s32 %s22, 1
      %p339 = scmp.lt.s32.totalorder %s21, 1
      %s340 = scalar_select %p339, %s21, 1
      %p341 = scmp.lt.s32.totalorder %s338, 9
      %s342 = scalar_select %p341, %s338, 9
      %s343 = smul.addr %s342, 2
      %s344 = smul.addr %s340, 20
      %s345 = sadd.s32 %s343, %s344
      %s346 = smul.addr %s345, 8
      %s347 = scalar_lea.vmem %s1, %s346
      %s348 = sadd.s32 %s22, 1
      %s349 = sadd.s32 %s22, 2
      %p350 = scmp.lt.s32.totalorder %s21, 1
      %s351 = scalar_select %p350, %s21, 1
      %p352 = scmp.lt.s32.totalorder %s349, 9
      %s353 = scalar_select %p352, %s349, 9
      %s354 = smul.addr %s353, 2
      %s355 = smul.addr %s351, 20
      %s356 = sadd.s32 %s354, %s355
      %s357 = smul.addr %s356, 8
      %s358 = scalar_lea.vmem %s2, %s357
      %s359 = sadd.s32 %s22, 2
      %p360 = scmp.lt.s32.totalorder %s21, 1
      %s361 = scalar_select %p360, %s21, 1
      %p362 = scmp.lt.s32.totalorder %s22, 7
      %s363 = scalar_select %p362, %s22, 7
      %s364 = smul.addr %s361, 8
      %s365 = sadd.s32 %s363, %s364
      %s366 = smul.addr %s365, 8
      %s367 = scalar_lea.vmem %s6, %s366
      %v369 = vld [vmem:[%s3] sm:$0x1]
      %v370 = vld [vmem:[%s4] sm:$0x1]
      %p371 = scmp.ge.s32.totalorder %s22, 1
      %p372 = scmp.le.s32.totalorder %s22, 8
      %p373 = pnand %p371, %p372
      %p374 = pneg %p373
      %v375 = vld [vmem:[%s337] sm:$0xff]
      %v377 = vlaneseq
      %v378 = vshrl.u32 %v377, 7
      %v379 = vsub.s32 0, %v378
      %v380 = vrot.slane %v369, %v379
      %v382 = vmul.f32 %v375, %v380
      %v384 = vlaneseq
      %v385 = vshrl.u32 %v384, 7
      %v386 = vsub.s32 0, %v385
      %v387 = vrot.slane %v370, %v386
      %v389 = vadd.f32 %v382, %v387
      %v390 = vmax.f32 %v389, 0.0
      %v391 = vlaneseq
      %v392 = vshrl.u32 %v391, 7
      %vm393 = vcmp.ge.s32.totalorder %v392, 1
      %vm394 = vcmp.le.s32.totalorder %v392, 8
      %vm395 = vmand %vm393, %vm394
      %s396 = scalar_select %p374, 1, 0
      %v397 = vstv %s396
      %vm398 = vcmp.eq.s32.totalorder %v397, 1
      %vm399 = vmand %vm395, %vm398
      %v400 = vsel %vm399, 1, 0
      %vm401 = vcmp.eq.s32.totalorder %v400, 1
      %v402 = vsel %vm401, %v390, 0.0
      %v403 = vpack.c.bf16 %v402, %v402
      %v404 = vld [vmem:[%s337 + $0x1] sm:$0xff]
      %v405 = vmul.f32 %v404, %v380
      %v406 = vadd.f32 %v405, %v387
      %v407 = vmax.f32 %v406, 0.0
      %v408 = vadd.s32 %v392, 1
      %vm409 = vcmp.ge.s32.totalorder %v408, 1
      %vm410 = vcmp.le.s32.totalorder %v408, 8
      %vm411 = vmand %vm409, %vm410
      %vm412 = vmand %vm411, %vm398
      %v413 = vsel %vm412, 1, 0
      %vm414 = vcmp.eq.s32.totalorder %v413, 1
      %v415 = vsel %vm414, %v407, 0.0
      %v416 = vpack.c.bf16 %v415, %v415
      %v417 = vld [vmem:[%s337 + $0x2] sm:$0xff]
      %v418 = vmul.f32 %v417, %v380
      %v419 = vadd.f32 %v418, %v387
      %v420 = vmax.f32 %v419, 0.0
      %v421 = vadd.s32 %v392, 2
      %vm422 = vcmp.ge.s32.totalorder %v421, 1
      %vm423 = vcmp.le.s32.totalorder %v421, 8
      %vm424 = vmand %vm422, %vm423
      %vm425 = vmand %vm424, %vm398
      %v426 = vsel %vm425, 1, 0
      %vm427 = vcmp.eq.s32.totalorder %v426, 1
      %v428 = vsel %vm427, %v420, 0.0
      %v429 = vpack.c.bf16 %v428, %v428
      %s430 = sadd.s32 %s22, 1
      %p431 = scmp.ge.s32.totalorder %s430, 1
      %p432 = scmp.le.s32.totalorder %s430, 8
      %p433 = pnand %p431, %p432
      %p434 = pneg %p433
      %v435 = vld [vmem:[%s347] sm:$0xff]
      %v436 = vmul.f32 %v435, %v380
      %v437 = vadd.f32 %v436, %v387
      %v438 = vmax.f32 %v437, 0.0
      %s439 = scalar_select %p434, 1, 0
      %v440 = vstv %s439
      %vm441 = vcmp.eq.s32.totalorder %v440, 1
      %vm442 = vmand %vm395, %vm441
      %v443 = vsel %vm442, 1, 0
      %vm444 = vcmp.eq.s32.totalorder %v443, 1
      %v445 = vsel %vm444, %v438, 0.0
      %v446 = vpack.c.bf16 %v445, %v445
      %v447 = vld [vmem:[%s347 + $0x1] sm:$0xff]
      %v448 = vmul.f32 %v447, %v380
      %v449 = vadd.f32 %v448, %v387
      %v450 = vmax.f32 %v449, 0.0
      %vm451 = vmand %vm411, %vm441
      %v452 = vsel %vm451, 1, 0
      %vm453 = vcmp.eq.s32.totalorder %v452, 1
      %v454 = vsel %vm453, %v450, 0.0
      %v455 = vpack.c.bf16 %v454, %v454
      %v456 = vld [vmem:[%s347 + $0x2] sm:$0xff]
      %v457 = vmul.f32 %v456, %v380
      %v458 = vadd.f32 %v457, %v387
      %v459 = vmax.f32 %v458, 0.0
      %vm460 = vmand %vm424, %vm441
      %v461 = vsel %vm460, 1, 0
      %vm462 = vcmp.eq.s32.totalorder %v461, 1
      %v463 = vsel %vm462, %v459, 0.0
      %v464 = vpack.c.bf16 %v463, %v463
      %s465 = sadd.s32 %s22, 2
      %p466 = scmp.ge.s32.totalorder %s465, 1
      %p467 = scmp.le.s32.totalorder %s465, 8
      %p468 = pnand %p466, %p467
      %p469 = pneg %p468
      %v470 = vld [vmem:[%s358] sm:$0xff]
      %v471 = vmul.f32 %v470, %v380
      %v472 = vadd.f32 %v471, %v387
      %v473 = vmax.f32 %v472, 0.0
      %s474 = scalar_select %p469, 1, 0
      %v475 = vstv %s474
      %vm476 = vcmp.eq.s32.totalorder %v475, 1
      %vm477 = vmand %vm395, %vm476
      %v478 = vsel %vm477, 1, 0
      %vm479 = vcmp.eq.s32.totalorder %v478, 1
      %v480 = vsel %vm479, %v473, 0.0
      %v481 = vpack.c.bf16 %v480, %v480
      %v482 = vld [vmem:[%s358 + $0x1] sm:$0xff]
      %v483 = vmul.f32 %v482, %v380
      %v484 = vadd.f32 %v483, %v387
      %v485 = vmax.f32 %v484, 0.0
      %vm486 = vmand %vm411, %vm476
      %v487 = vsel %vm486, 1, 0
      %vm488 = vcmp.eq.s32.totalorder %v487, 1
      %v489 = vsel %vm488, %v485, 0.0
      %v490 = vpack.c.bf16 %v489, %v489
      %v491 = vld [vmem:[%s358 + $0x2] sm:$0xff]
      %v492 = vmul.f32 %v491, %v380
      %v493 = vadd.f32 %v492, %v387
      %v494 = vmax.f32 %v493, 0.0
      %vm495 = vmand %vm424, %vm476
      %v496 = vsel %vm495, 1, 0
      %vm497 = vcmp.eq.s32.totalorder %v496, 1
      %v498 = vsel %vm497, %v494, 0.0
      %v499 = vpack.c.bf16 %v498, %v498
      %v500 = vld [vmem:[%s5] sm:$0xf]
      %v501 = vld [vmem:[%s5 + $0x4] sm:$0xf]
      %v502 = vld [vmem:[%s5 + $0x8] sm:$0xf]
      %v503 = vld [vmem:[%s5 + $0xc] sm:$0xf]
      %v504 = vld [vmem:[%s5 + $0x10] sm:$0xf]
      %v505 = vld [vmem:[%s5 + $0x14] sm:$0xf]
      %v506 = vld [vmem:[%s5 + $0x18] sm:$0xf]
      %v507 = vld [vmem:[%s5 + $0x1c] sm:$0xf]
      %v508 = vld [vmem:[%s5 + $0x20] sm:$0xf]
      %v509 = vld [vmem:[%s5 + $0x24] sm:$0xf]
      %v510 = vld [vmem:[%s5 + $0x28] sm:$0xf]
      %v511 = vld [vmem:[%s5 + $0x2c] sm:$0xf]
      %v512 = vld [vmem:[%s5 + $0x30] sm:$0xf]
      %v513 = vld [vmem:[%s5 + $0x34] sm:$0xf]
      %v514 = vld [vmem:[%s5 + $0x38] sm:$0xf]
      %v515 = vld [vmem:[%s5 + $0x3c] sm:$0xf]
      %v516 = vld [vmem:[%s5 + $0x40] sm:$0xf]
      %v517 = vld [vmem:[%s5 + $0x44] sm:$0xf]
      %v518 = vld [vmem:[%s5 + $0x48] sm:$0xf]
      %v519 = vld [vmem:[%s5 + $0x4c] sm:$0xf]
      %v520 = vld [vmem:[%s5 + $0x50] sm:$0xf]
      %v521 = vld [vmem:[%s5 + $0x54] sm:$0xf]
      %v522 = vld [vmem:[%s5 + $0x58] sm:$0xf]
      %v523 = vld [vmem:[%s5 + $0x5c] sm:$0xf]
      %v524 = vld [vmem:[%s5 + $0x60] sm:$0xf]
      %v525 = vld [vmem:[%s5 + $0x64] sm:$0xf]
      %v526 = vld [vmem:[%s5 + $0x68] sm:$0xf]
      %v527 = vld [vmem:[%s5 + $0x6c] sm:$0xf]
      %v528 = vld [vmem:[%s5 + $0x70] sm:$0xf]
      %v529 = vld [vmem:[%s5 + $0x74] sm:$0xf]
      %v530 = vld [vmem:[%s5 + $0x78] sm:$0xf]
      %v531 = vld [vmem:[%s5 + $0x7c] sm:$0xf]
      %v532 = vld [vmem:[%s5 + $0x80] sm:$0xf]
      %v533 = vld [vmem:[%s5 + $0x84] sm:$0xf]
      %v534 = vld [vmem:[%s5 + $0x88] sm:$0xf]
      %v535 = vld [vmem:[%s5 + $0x8c] sm:$0xf]
      %v536 = vld [vmem:[%s5 + $0x90] sm:$0xf]
      %v537 = vld [vmem:[%s5 + $0x94] sm:$0xf]
      %v538 = vld [vmem:[%s5 + $0x98] sm:$0xf]
      %v539 = vld [vmem:[%s5 + $0x9c] sm:$0xf]
      %v540 = vld [vmem:[%s5 + $0xa0] sm:$0xf]
      %v541 = vld [vmem:[%s5 + $0xa4] sm:$0xf]
      %v542 = vld [vmem:[%s5 + $0xa8] sm:$0xf]
      %v543 = vld [vmem:[%s5 + $0xac] sm:$0xf]
      %v544 = vld [vmem:[%s5 + $0xb0] sm:$0xf]
      %v545 = vld [vmem:[%s5 + $0xb4] sm:$0xf]
      %v546 = vld [vmem:[%s5 + $0xb8] sm:$0xf]
      %v547 = vld [vmem:[%s5 + $0xbc] sm:$0xf]
      %v548 = vld [vmem:[%s5 + $0xc0] sm:$0xf]
      %v549 = vld [vmem:[%s5 + $0xc4] sm:$0xf]
      %v550 = vld [vmem:[%s5 + $0xc8] sm:$0xf]
      %v551 = vld [vmem:[%s5 + $0xcc] sm:$0xf]
      %v552 = vld [vmem:[%s5 + $0xd0] sm:$0xf]
      %v553 = vld [vmem:[%s5 + $0xd4] sm:$0xf]
      %v554 = vld [vmem:[%s5 + $0xd8] sm:$0xf]
      %v555 = vld [vmem:[%s5 + $0xdc] sm:$0xf]
      %v556 = vld [vmem:[%s5 + $0xe0] sm:$0xf]
      %v557 = vld [vmem:[%s5 + $0xe4] sm:$0xf]
      %v558 = vld [vmem:[%s5 + $0xe8] sm:$0xf]
      %v559 = vld [vmem:[%s5 + $0xec] sm:$0xf]
      %v560 = vld [vmem:[%s5 + $0xf0] sm:$0xf]
      %v561 = vld [vmem:[%s5 + $0xf4] sm:$0xf]
      %v562 = vld [vmem:[%s5 + $0xf8] sm:$0xf]
      %v563 = vld [vmem:[%s5 + $0xfc] sm:$0xf]
      %v564 = vld [vmem:[%s5 + $0x100] sm:$0xf]
      %v565 = vld [vmem:[%s5 + $0x104] sm:$0xf]
      %v566 = vld [vmem:[%s5 + $0x108] sm:$0xf]
      %v567 = vld [vmem:[%s5 + $0x10c] sm:$0xf]
      %v568 = vld [vmem:[%s5 + $0x110] sm:$0xf]
      %v569 = vld [vmem:[%s5 + $0x114] sm:$0xf]
      %v570 = vld [vmem:[%s5 + $0x118] sm:$0xf]
      %v571 = vld [vmem:[%s5 + $0x11c] sm:$0xf]
      %v572 = vld [vmem:[%s5 + $0x120] sm:$0xf]
      %v573 = vld [vmem:[%s5 + $0x124] sm:$0xf]
      %v574 = vld [vmem:[%s5 + $0x128] sm:$0xf]
      %v575 = vld [vmem:[%s5 + $0x12c] sm:$0xf]
      %v576 = vld [vmem:[%s5 + $0x130] sm:$0xf]
      %v577 = vld [vmem:[%s5 + $0x134] sm:$0xf]
      %v578 = vld [vmem:[%s5 + $0x138] sm:$0xf]
      %v579 = vld [vmem:[%s5 + $0x13c] sm:$0xf]
      %v580 = vld [vmem:[%s5 + $0x140] sm:$0xf]
      %v581 = vld [vmem:[%s5 + $0x144] sm:$0xf]
      %v582 = vld [vmem:[%s5 + $0x148] sm:$0xf]
      %v583 = vld [vmem:[%s5 + $0x14c] sm:$0xf]
      %v584 = vld [vmem:[%s5 + $0x150] sm:$0xf]
      %v585 = vld [vmem:[%s5 + $0x154] sm:$0xf]
      %v586 = vld [vmem:[%s5 + $0x158] sm:$0xf]
      %v587 = vld [vmem:[%s5 + $0x15c] sm:$0xf]
      %v588 = vld [vmem:[%s5 + $0x160] sm:$0xf]
      %v589 = vld [vmem:[%s5 + $0x164] sm:$0xf]
      %v590 = vld [vmem:[%s5 + $0x168] sm:$0xf]
      %v591 = vld [vmem:[%s5 + $0x16c] sm:$0xf]
      %v592 = vld [vmem:[%s5 + $0x170] sm:$0xf]
      %v593 = vld [vmem:[%s5 + $0x174] sm:$0xf]
      %v594 = vld [vmem:[%s5 + $0x178] sm:$0xf]
      %v595 = vld [vmem:[%s5 + $0x17c] sm:$0xf]
      %v596 = vld [vmem:[%s5 + $0x180] sm:$0xf]
      %v597 = vld [vmem:[%s5 + $0x184] sm:$0xf]
      %v598 = vld [vmem:[%s5 + $0x188] sm:$0xf]
      %v599 = vld [vmem:[%s5 + $0x18c] sm:$0xf]
      %v600 = vld [vmem:[%s5 + $0x190] sm:$0xf]
      %v601 = vld [vmem:[%s5 + $0x194] sm:$0xf]
      %v602 = vld [vmem:[%s5 + $0x198] sm:$0xf]
      %v603 = vld [vmem:[%s5 + $0x19c] sm:$0xf]
      %v604 = vld [vmem:[%s5 + $0x1a0] sm:$0xf]
      %v605 = vld [vmem:[%s5 + $0x1a4] sm:$0xf]
      %v606 = vld [vmem:[%s5 + $0x1a8] sm:$0xf]
      %v607 = vld [vmem:[%s5 + $0x1ac] sm:$0xf]
      %v608 = vld [vmem:[%s5 + $0x1b0] sm:$0xf]
      %v609 = vld [vmem:[%s5 + $0x1b4] sm:$0xf]
      %v610 = vld [vmem:[%s5 + $0x1b8] sm:$0xf]
      %v611 = vld [vmem:[%s5 + $0x1bc] sm:$0xf]
      %v612 = vld [vmem:[%s5 + $0x1c0] sm:$0xf]
      %v613 = vld [vmem:[%s5 + $0x1c4] sm:$0xf]
      %v614 = vld [vmem:[%s5 + $0x1c8] sm:$0xf]
      %v615 = vld [vmem:[%s5 + $0x1cc] sm:$0xf]
      %v616 = vld [vmem:[%s5 + $0x1d0] sm:$0xf]
      %v617 = vld [vmem:[%s5 + $0x1d4] sm:$0xf]
      %v618 = vld [vmem:[%s5 + $0x1d8] sm:$0xf]
      %v619 = vld [vmem:[%s5 + $0x1dc] sm:$0xf]
      %v620 = vld [vmem:[%s5 + $0x1e0] sm:$0xf]
      %v621 = vld [vmem:[%s5 + $0x1e4] sm:$0xf]
      %v622 = vld [vmem:[%s5 + $0x1e8] sm:$0xf]
      %v623 = vld [vmem:[%s5 + $0x1ec] sm:$0xf]
      %v624 = vld [vmem:[%s5 + $0x1f0] sm:$0xf]
      %v625 = vld [vmem:[%s5 + $0x1f4] sm:$0xf]
      %v626 = vld [vmem:[%s5 + $0x1f8] sm:$0xf]
      %v627 = vld [vmem:[%s5 + $0x1fc] sm:$0xf]
      %v628 = vld [vmem:[%s5 + $0x200] sm:$0xf]
      %v629 = vld [vmem:[%s5 + $0x204] sm:$0xf]
      %v630 = vld [vmem:[%s5 + $0x208] sm:$0xf]
      %v631 = vld [vmem:[%s5 + $0x20c] sm:$0xf]
      %v632 = vld [vmem:[%s5 + $0x210] sm:$0xf]
      %v633 = vld [vmem:[%s5 + $0x214] sm:$0xf]
      %v634 = vld [vmem:[%s5 + $0x218] sm:$0xf]
      %v635 = vld [vmem:[%s5 + $0x21c] sm:$0xf]
      %v636 = vld [vmem:[%s5 + $0x220] sm:$0xf]
      %v637 = vld [vmem:[%s5 + $0x224] sm:$0xf]
      %v638 = vld [vmem:[%s5 + $0x228] sm:$0xf]
      %v639 = vld [vmem:[%s5 + $0x22c] sm:$0xf]
      %v640 = vld [vmem:[%s5 + $0x230] sm:$0xf]
      %v641 = vld [vmem:[%s5 + $0x234] sm:$0xf]
      %v642 = vld [vmem:[%s5 + $0x238] sm:$0xf]
      %v643 = vld [vmem:[%s5 + $0x23c] sm:$0xf]
      %v788 = vunpack.c.l.b16 %v500
      %v789 = vunpack.c.l.b16 %v501
      %v790 = vunpack.c.l.b16 %v502
      %v791 = vunpack.c.l.b16 %v503
      %v792 = vunpack.c.l.b16 %v504
      %v793 = vunpack.c.l.b16 %v505
      %v794 = vunpack.c.l.b16 %v506
      %v795 = vunpack.c.l.b16 %v507
      %v796 = vunpack.c.l.b16 %v508
      %v797 = vunpack.c.l.b16 %v509
      %v798 = vunpack.c.l.b16 %v510
      %v799 = vunpack.c.l.b16 %v511
      %v800 = vunpack.c.l.b16 %v512
      %v801 = vunpack.c.l.b16 %v513
      %v802 = vunpack.c.l.b16 %v514
      %v803 = vunpack.c.l.b16 %v515
      %v804 = vunpack.c.l.b16 %v516
      %v805 = vunpack.c.l.b16 %v517
      %v806 = vunpack.c.l.b16 %v518
      %v807 = vunpack.c.l.b16 %v519
      %v808 = vunpack.c.l.b16 %v520
      %v809 = vunpack.c.l.b16 %v521
      %v810 = vunpack.c.l.b16 %v522
      %v811 = vunpack.c.l.b16 %v523
      %v812 = vunpack.c.l.b16 %v524
      %v813 = vunpack.c.l.b16 %v525
      %v814 = vunpack.c.l.b16 %v526
      %v815 = vunpack.c.l.b16 %v527
      %v816 = vunpack.c.l.b16 %v528
      %v817 = vunpack.c.l.b16 %v529
      %v818 = vunpack.c.l.b16 %v530
      %v819 = vunpack.c.l.b16 %v531
      %v820 = vunpack.c.l.b16 %v532
      %v821 = vunpack.c.l.b16 %v533
      %v822 = vunpack.c.l.b16 %v534
      %v823 = vunpack.c.l.b16 %v535
      %v824 = vunpack.c.l.b16 %v536
      %v825 = vunpack.c.l.b16 %v537
      %v826 = vunpack.c.l.b16 %v538
      %v827 = vunpack.c.l.b16 %v539
      %v828 = vunpack.c.l.b16 %v540
      %v829 = vunpack.c.l.b16 %v541
      %v830 = vunpack.c.l.b16 %v542
      %v831 = vunpack.c.l.b16 %v543
      %v832 = vunpack.c.l.b16 %v544
      %v833 = vunpack.c.l.b16 %v545
      %v834 = vunpack.c.l.b16 %v546
      %v835 = vunpack.c.l.b16 %v547
      %v836 = vunpack.c.l.b16 %v548
      %v837 = vunpack.c.l.b16 %v549
      %v838 = vunpack.c.l.b16 %v550
      %v839 = vunpack.c.l.b16 %v551
      %v840 = vunpack.c.l.b16 %v552
      %v841 = vunpack.c.l.b16 %v553
      %v842 = vunpack.c.l.b16 %v554
      %v843 = vunpack.c.l.b16 %v555
      %v844 = vunpack.c.l.b16 %v556
      %v845 = vunpack.c.l.b16 %v557
      %v846 = vunpack.c.l.b16 %v558
      %v847 = vunpack.c.l.b16 %v559
      %v848 = vunpack.c.l.b16 %v560
      %v849 = vunpack.c.l.b16 %v561
      %v850 = vunpack.c.l.b16 %v562
      %v851 = vunpack.c.l.b16 %v563
      %v852 = vunpack.c.l.b16 %v564
      %v853 = vunpack.c.l.b16 %v565
      %v854 = vunpack.c.l.b16 %v566
      %v855 = vunpack.c.l.b16 %v567
      %v856 = vunpack.c.l.b16 %v568
      %v857 = vunpack.c.l.b16 %v569
      %v858 = vunpack.c.l.b16 %v570
      %v859 = vunpack.c.l.b16 %v571
      %v860 = vunpack.c.l.b16 %v572
      %v861 = vunpack.c.l.b16 %v573
      %v862 = vunpack.c.l.b16 %v574
      %v863 = vunpack.c.l.b16 %v575
      %v864 = vunpack.c.l.b16 %v576
      %v865 = vunpack.c.l.b16 %v577
      %v866 = vunpack.c.l.b16 %v578
      %v867 = vunpack.c.l.b16 %v579
      %v868 = vunpack.c.l.b16 %v580
      %v869 = vunpack.c.l.b16 %v581
      %v870 = vunpack.c.l.b16 %v582
      %v871 = vunpack.c.l.b16 %v583
      %v872 = vunpack.c.l.b16 %v584
      %v873 = vunpack.c.l.b16 %v585
      %v874 = vunpack.c.l.b16 %v586
      %v875 = vunpack.c.l.b16 %v587
      %v876 = vunpack.c.l.b16 %v588
      %v877 = vunpack.c.l.b16 %v589
      %v878 = vunpack.c.l.b16 %v590
      %v879 = vunpack.c.l.b16 %v591
      %v880 = vunpack.c.l.b16 %v592
      %v881 = vunpack.c.l.b16 %v593
      %v882 = vunpack.c.l.b16 %v594
      %v883 = vunpack.c.l.b16 %v595
      %v884 = vunpack.c.l.b16 %v596
      %v885 = vunpack.c.l.b16 %v597
      %v886 = vunpack.c.l.b16 %v598
      %v887 = vunpack.c.l.b16 %v599
      %v888 = vunpack.c.l.b16 %v600
      %v889 = vunpack.c.l.b16 %v601
      %v890 = vunpack.c.l.b16 %v602
      %v891 = vunpack.c.l.b16 %v603
      %v892 = vunpack.c.l.b16 %v604
      %v893 = vunpack.c.l.b16 %v605
      %v894 = vunpack.c.l.b16 %v606
      %v895 = vunpack.c.l.b16 %v607
      %v896 = vunpack.c.l.b16 %v608
      %v897 = vunpack.c.l.b16 %v609
      %v898 = vunpack.c.l.b16 %v610
      %v899 = vunpack.c.l.b16 %v611
      %v900 = vunpack.c.l.b16 %v612
      %v901 = vunpack.c.l.b16 %v613
      %v902 = vunpack.c.l.b16 %v614
      %v903 = vunpack.c.l.b16 %v615
      %v904 = vunpack.c.l.b16 %v616
      %v905 = vunpack.c.l.b16 %v617
      %v906 = vunpack.c.l.b16 %v618
      %v907 = vunpack.c.l.b16 %v619
      %v908 = vunpack.c.l.b16 %v620
      %v909 = vunpack.c.l.b16 %v621
      %v910 = vunpack.c.l.b16 %v622
      %v911 = vunpack.c.l.b16 %v623
      %v912 = vunpack.c.l.b16 %v624
      %v913 = vunpack.c.l.b16 %v625
      %v914 = vunpack.c.l.b16 %v626
      %v915 = vunpack.c.l.b16 %v627
      %v916 = vunpack.c.l.b16 %v628
      %v917 = vunpack.c.l.b16 %v629
      %v918 = vunpack.c.l.b16 %v630
      %v919 = vunpack.c.l.b16 %v631
      %v920 = vunpack.c.l.b16 %v632
      %v921 = vunpack.c.l.b16 %v633
      %v922 = vunpack.c.l.b16 %v634
      %v923 = vunpack.c.l.b16 %v635
      %v924 = vunpack.c.l.b16 %v636
      %v925 = vunpack.c.l.b16 %v637
      %v926 = vunpack.c.l.b16 %v638
      %v927 = vunpack.c.l.b16 %v639
      %v928 = vunpack.c.l.b16 %v640
      %v929 = vunpack.c.l.b16 %v641
      %v930 = vunpack.c.l.b16 %v642
      %v931 = vunpack.c.l.b16 %v643
      %v932 = vpack.c.b16 %v789, %v788
      %v933 = vpack.c.b16 %v791, %v790
      %v934 = vpack.c.b16 %v793, %v792
      %v935 = vpack.c.b16 %v795, %v794
      %v936 = vpack.c.b16 %v797, %v796
      %v937 = vpack.c.b16 %v799, %v798
      %v938 = vpack.c.b16 %v801, %v800
      %v939 = vpack.c.b16 %v803, %v802
      %v940 = vpack.c.b16 %v805, %v804
      %v941 = vpack.c.b16 %v807, %v806
      %v942 = vpack.c.b16 %v809, %v808
      %v943 = vpack.c.b16 %v811, %v810
      %v944 = vpack.c.b16 %v813, %v812
      %v945 = vpack.c.b16 %v815, %v814
      %v946 = vpack.c.b16 %v817, %v816
      %v947 = vpack.c.b16 %v819, %v818
      %v948 = vpack.c.b16 %v821, %v820
      %v949 = vpack.c.b16 %v823, %v822
      %v950 = vpack.c.b16 %v825, %v824
      %v951 = vpack.c.b16 %v827, %v826
      %v952 = vpack.c.b16 %v829, %v828
      %v953 = vpack.c.b16 %v831, %v830
      %v954 = vpack.c.b16 %v833, %v832
      %v955 = vpack.c.b16 %v835, %v834
      %v956 = vpack.c.b16 %v837, %v836
      %v957 = vpack.c.b16 %v839, %v838
      %v958 = vpack.c.b16 %v841, %v840
      %v959 = vpack.c.b16 %v843, %v842
      %v960 = vpack.c.b16 %v845, %v844
      %v961 = vpack.c.b16 %v847, %v846
      %v962 = vpack.c.b16 %v849, %v848
      %v963 = vpack.c.b16 %v851, %v850
      %v964 = vpack.c.b16 %v853, %v852
      %v965 = vpack.c.b16 %v855, %v854
      %v966 = vpack.c.b16 %v857, %v856
      %v967 = vpack.c.b16 %v859, %v858
      %v968 = vpack.c.b16 %v861, %v860
      %v969 = vpack.c.b16 %v863, %v862
      %v970 = vpack.c.b16 %v865, %v864
      %v971 = vpack.c.b16 %v867, %v866
      %v972 = vpack.c.b16 %v869, %v868
      %v973 = vpack.c.b16 %v871, %v870
      %v974 = vpack.c.b16 %v873, %v872
      %v975 = vpack.c.b16 %v875, %v874
      %v976 = vpack.c.b16 %v877, %v876
      %v977 = vpack.c.b16 %v879, %v878
      %v978 = vpack.c.b16 %v881, %v880
      %v979 = vpack.c.b16 %v883, %v882
      %v980 = vpack.c.b16 %v885, %v884
      %v981 = vpack.c.b16 %v887, %v886
      %v982 = vpack.c.b16 %v889, %v888
      %v983 = vpack.c.b16 %v891, %v890
      %v984 = vpack.c.b16 %v893, %v892
      %v985 = vpack.c.b16 %v895, %v894
      %v986 = vpack.c.b16 %v897, %v896
      %v987 = vpack.c.b16 %v899, %v898
      %v988 = vpack.c.b16 %v901, %v900
      %v989 = vpack.c.b16 %v903, %v902
      %v990 = vpack.c.b16 %v905, %v904
      %v991 = vpack.c.b16 %v907, %v906
      %v992 = vpack.c.b16 %v909, %v908
      %v993 = vpack.c.b16 %v911, %v910
      %v994 = vpack.c.b16 %v913, %v912
      %v995 = vpack.c.b16 %v915, %v914
      %v996 = vpack.c.b16 %v917, %v916
      %v997 = vpack.c.b16 %v919, %v918
      %v998 = vpack.c.b16 %v921, %v920
      %v999 = vpack.c.b16 %v923, %v922
      %v1000 = vpack.c.b16 %v925, %v924
      %v1001 = vpack.c.b16 %v927, %v926
      %v1002 = vpack.c.b16 %v929, %v928
      %v1003 = vpack.c.b16 %v931, %v930
      %1076 = vmatprep.subr.bf16.mxu0 0
      %1077 = vmatpush1.bf16.msra.mxu0 %v939
      %1078 = vmatprep.subr.bf16.mxu0 0
      %1079 = vmatpush1.bf16.msra.mxu0 %v938
      %1080 = vmatprep.subr.bf16.mxu0 0
      %1081 = vmatpush1.bf16.msra.mxu0 %v937
      %1082 = vmatprep.subr.bf16.mxu0 0
      %1083 = vmatpush1.bf16.msra.mxu0 %v936
      %1084 = vmatprep.subr.bf16.mxu0 0
      %1085 = vmatpush1.bf16.msra.mxu0 %v935
      %1086 = vmatprep.subr.bf16.mxu0 0
      %1087 = vmatpush1.bf16.msra.mxu0 %v934
      %1088 = vmatprep.subr.bf16.mxu0 0
      %1089 = vmatpush1.bf16.msra.mxu0 %v933
      %1090 = vmatprep.subr.bf16.mxu0 0
      %1091 = vmatpush1.bf16.msra.mxu0 %v932
      %1092 = vmatprep.subr.bf16.mxu0 0
      %1093 = vmatpush2.bf16.msra.mxu0 %v947
      %1094 = vmatprep.subr.bf16.mxu0 0
      %1095 = vmatpush2.bf16.msra.mxu0 %v946
      %1096 = vmatprep.subr.bf16.mxu0 0
      %1097 = vmatpush2.bf16.msra.mxu0 %v945
      %1098 = vmatprep.subr.bf16.mxu0 0
      %1099 = vmatpush2.bf16.msra.mxu0 %v944
      %1100 = vmatprep.subr.bf16.mxu0 0
      %1101 = vmatpush2.bf16.msra.mxu0 %v943
      %1102 = vmatprep.subr.bf16.mxu0 0
      %1103 = vmatpush2.bf16.msra.mxu0 %v942
      %1104 = vmatprep.subr.bf16.mxu0 0
      %1105 = vmatpush2.bf16.msra.mxu0 %v941
      %1106 = vmatprep.subr.bf16.mxu0 0
      %1107 = vmatpush2.bf16.msra.mxu0 %v940
      %1108 = vmatprep.mubr.bf16.mxu0 %v416
      %1109 = vmatmul.mubr.bf16.gmra.mxu0 %v403
      %v1110 = vpop.f32.mrf.mxu0
      %v1111 = vadd.f32 0.0, %v1110
      %v1112 = vpop.f32.mrf.mxu0
      %v1113 = vpop.f32.mrf.mxu0
      %v1114 = vpop.f32.mrf.mxu0
      %1115 = vdwg.mxu0
      %1116 = vmatprep.subr.bf16.mxu0 0
      %1117 = vmatpush1.bf16.msra.mxu0 %v955
      %1118 = vmatprep.subr.bf16.mxu0 0
      %1119 = vmatpush1.bf16.msra.mxu0 %v954
      %1120 = vmatprep.subr.bf16.mxu0 0
      %1121 = vmatpush1.bf16.msra.mxu0 %v953
      %1122 = vmatprep.subr.bf16.mxu0 0
      %1123 = vmatpush1.bf16.msra.mxu0 %v952
      %1124 = vmatprep.subr.bf16.mxu0 0
      %1125 = vmatpush1.bf16.msra.mxu0 %v951
      %1126 = vmatprep.subr.bf16.mxu0 0
      %1127 = vmatpush1.bf16.msra.mxu0 %v950
      %1128 = vmatprep.subr.bf16.mxu0 0
      %1129 = vmatpush1.bf16.msra.mxu0 %v949
      %1130 = vmatprep.subr.bf16.mxu0 0
      %1131 = vmatpush1.bf16.msra.mxu0 %v948
      %1132 = vmatprep.subr.bf16.mxu0 0
      %1133 = vmatpush2.bf16.msra.mxu0 %v963
      %1134 = vmatprep.subr.bf16.mxu0 0
      %1135 = vmatpush2.bf16.msra.mxu0 %v962
      %1136 = vmatprep.subr.bf16.mxu0 0
      %1137 = vmatpush2.bf16.msra.mxu0 %v961
      %1138 = vmatprep.subr.bf16.mxu0 0
      %1139 = vmatpush2.bf16.msra.mxu0 %v960
      %1140 = vmatprep.subr.bf16.mxu0 0
      %1141 = vmatpush2.bf16.msra.mxu0 %v959
      %1142 = vmatprep.subr.bf16.mxu0 0
      %1143 = vmatpush2.bf16.msra.mxu0 %v958
      %1144 = vmatprep.subr.bf16.mxu0 0
      %1145 = vmatpush2.bf16.msra.mxu0 %v957
      %1146 = vmatprep.subr.bf16.mxu0 0
      %1147 = vmatpush2.bf16.msra.mxu0 %v956
      %1148 = vmatprep.mubr.bf16.mxu0 %v446
      %1149 = vmatmul.mubr.bf16.gmra.mxu0 %v429
      %v1150 = vpop.f32.mrf.mxu0
      %v1151 = vadd.f32 %v1111, %v1150
      %v1152 = vpop.f32.mrf.mxu0
      %v1153 = vpop.f32.mrf.mxu0
      %v1154 = vpop.f32.mrf.mxu0
      %1155 = vdwg.mxu0
      %1156 = vmatprep.subr.bf16.mxu0 0
      %1157 = vmatpush1.bf16.msra.mxu0 %v971
      %1158 = vmatprep.subr.bf16.mxu0 0
      %1159 = vmatpush1.bf16.msra.mxu0 %v970
      %1160 = vmatprep.subr.bf16.mxu0 0
      %1161 = vmatpush1.bf16.msra.mxu0 %v969
      %1162 = vmatprep.subr.bf16.mxu0 0
      %1163 = vmatpush1.bf16.msra.mxu0 %v968
      %1164 = vmatprep.subr.bf16.mxu0 0
      %1165 = vmatpush1.bf16.msra.mxu0 %v967
      %1166 = vmatprep.subr.bf16.mxu0 0
      %1167 = vmatpush1.bf16.msra.mxu0 %v966
      %1168 = vmatprep.subr.bf16.mxu0 0
      %1169 = vmatpush1.bf16.msra.mxu0 %v965
      %1170 = vmatprep.subr.bf16.mxu0 0
      %1171 = vmatpush1.bf16.msra.mxu0 %v964
      %1172 = vmatprep.subr.bf16.mxu0 0
      %1173 = vmatpush2.bf16.msra.mxu0 %v979
      %1174 = vmatprep.subr.bf16.mxu0 0
      %1175 = vmatpush2.bf16.msra.mxu0 %v978
      %1176 = vmatprep.subr.bf16.mxu0 0
      %1177 = vmatpush2.bf16.msra.mxu0 %v977
      %1178 = vmatprep.subr.bf16.mxu0 0
      %1179 = vmatpush2.bf16.msra.mxu0 %v976
      %1180 = vmatprep.subr.bf16.mxu0 0
      %1181 = vmatpush2.bf16.msra.mxu0 %v975
      %1182 = vmatprep.subr.bf16.mxu0 0
      %1183 = vmatpush2.bf16.msra.mxu0 %v974
      %1184 = vmatprep.subr.bf16.mxu0 0
      %1185 = vmatpush2.bf16.msra.mxu0 %v973
      %1186 = vmatprep.subr.bf16.mxu0 0
      %1187 = vmatpush2.bf16.msra.mxu0 %v972
      %1188 = vmatprep.mubr.bf16.mxu0 %v464
      %1189 = vmatmul.mubr.bf16.gmra.mxu0 %v455
      %v1190 = vpop.f32.mrf.mxu0
      %v1191 = vadd.f32 %v1151, %v1190
      %v1192 = vpop.f32.mrf.mxu0
      %v1193 = vpop.f32.mrf.mxu0
      %v1194 = vpop.f32.mrf.mxu0
      %1195 = vdwg.mxu0
      %1196 = vmatprep.subr.bf16.mxu0 0
      %1197 = vmatpush1.bf16.msra.mxu0 %v987
      %1198 = vmatprep.subr.bf16.mxu0 0
      %1199 = vmatpush1.bf16.msra.mxu0 %v986
      %1200 = vmatprep.subr.bf16.mxu0 0
      %1201 = vmatpush1.bf16.msra.mxu0 %v985
      %1202 = vmatprep.subr.bf16.mxu0 0
      %1203 = vmatpush1.bf16.msra.mxu0 %v984
      %1204 = vmatprep.subr.bf16.mxu0 0
      %1205 = vmatpush1.bf16.msra.mxu0 %v983
      %1206 = vmatprep.subr.bf16.mxu0 0
      %1207 = vmatpush1.bf16.msra.mxu0 %v982
      %1208 = vmatprep.subr.bf16.mxu0 0
      %1209 = vmatpush1.bf16.msra.mxu0 %v981
      %1210 = vmatprep.subr.bf16.mxu0 0
      %1211 = vmatpush1.bf16.msra.mxu0 %v980
      %1212 = vmatprep.subr.bf16.mxu0 0
      %1213 = vmatpush2.bf16.msra.mxu0 %v995
      %1214 = vmatprep.subr.bf16.mxu0 0
      %1215 = vmatpush2.bf16.msra.mxu0 %v994
      %1216 = vmatprep.subr.bf16.mxu0 0
      %1217 = vmatpush2.bf16.msra.mxu0 %v993
      %1218 = vmatprep.subr.bf16.mxu0 0
      %1219 = vmatpush2.bf16.msra.mxu0 %v992
      %1220 = vmatprep.subr.bf16.mxu0 0
      %1221 = vmatpush2.bf16.msra.mxu0 %v991
      %1222 = vmatprep.subr.bf16.mxu0 0
      %1223 = vmatpush2.bf16.msra.mxu0 %v990
      %1224 = vmatprep.subr.bf16.mxu0 0
      %1225 = vmatpush2.bf16.msra.mxu0 %v989
      %1226 = vmatprep.subr.bf16.mxu0 0
      %1227 = vmatpush2.bf16.msra.mxu0 %v988
      %1228 = vmatprep.mubr.bf16.mxu0 %v490
      %1229 = vmatmul.mubr.bf16.gmra.mxu0 %v481
      %v1230 = vpop.f32.mrf.mxu0
      %v1231 = vadd.f32 %v1191, %v1230
      %v1232 = vpop.f32.mrf.mxu0
      %v1233 = vpop.f32.mrf.mxu0
      %v1234 = vpop.f32.mrf.mxu0
      %1235 = vdwg.mxu0
      %1236 = vmatprep.subr.bf16.mxu0 0
      %1237 = vmatpush1.bf16.msra.mxu0 %v1003
      %1238 = vmatprep.subr.bf16.mxu0 0
      %1239 = vmatpush1.bf16.msra.mxu0 %v1002
      %1240 = vmatprep.subr.bf16.mxu0 0
      %1241 = vmatpush1.bf16.msra.mxu0 %v1001
      %1242 = vmatprep.subr.bf16.mxu0 0
      %1243 = vmatpush1.bf16.msra.mxu0 %v1000
      %1244 = vmatprep.subr.bf16.mxu0 0
      %1245 = vmatpush1.bf16.msra.mxu0 %v999
      %1246 = vmatprep.subr.bf16.mxu0 0
      %1247 = vmatpush1.bf16.msra.mxu0 %v998
      %1248 = vmatprep.subr.bf16.mxu0 0
      %1249 = vmatpush1.bf16.msra.mxu0 %v997
      %1250 = vmatprep.subr.bf16.mxu0 0
      %1251 = vmatpush1.bf16.msra.mxu0 %v996
      %1252 = vmatprep.subr.bf16.mxu0 0
      %1253 = vmatpush2.bf16.msra.mxu0 0
      %1254 = vmatprep.subr.bf16.mxu0 0
      %1255 = vmatpush2.bf16.msra.mxu0 0
      %1256 = vmatprep.subr.bf16.mxu0 0
      %1257 = vmatpush2.bf16.msra.mxu0 0
      %1258 = vmatprep.subr.bf16.mxu0 0
      %1259 = vmatpush2.bf16.msra.mxu0 0
      %1260 = vmatprep.subr.bf16.mxu0 0
      %1261 = vmatpush2.bf16.msra.mxu0 0
      %1262 = vmatprep.subr.bf16.mxu0 0
      %1263 = vmatpush2.bf16.msra.mxu0 0
      %1264 = vmatprep.subr.bf16.mxu0 0
      %1265 = vmatpush2.bf16.msra.mxu0 0
      %1266 = vmatprep.subr.bf16.mxu0 0
      %1267 = vmatpush2.bf16.msra.mxu0 0
      %1268 = vmatprep.mubr.bf16.mxu0 0
      %1269 = vmatmul.mubr.bf16.gmra.mxu0 %v499
      %v1270 = vpop.f32.mrf.mxu0
      %v1271 = vadd.f32 %v1231, %v1270
      %v1272 = vpop.f32.mrf.mxu0
      %v1273 = vpop.f32.mrf.mxu0
      %v1274 = vpop.f32.mrf.mxu0
      %1275 = vdwg.mxu0
      %1276 = vst [vmem:[%s367] sm:$0xff] %v1271
      %p1277 = scmp.lt.s32.totalorder %s21, 1
      %s1278 = scalar_select %p1277, %s21, 1
      %p1279 = scmp.lt.s32.totalorder %s22, 7
      %s1280 = scalar_select %p1279, %s22, 7
      %s1281 = smul.addr %s1278, 8
      %s1282 = sadd.s32 %s1280, %s1281
      %s1283 = smul.addr %s1282, 8
      %s1284 = scalar_lea.vmem %s6, %s1283
      // Predicated region
      $region45: #{residual_block.9} parent=43 // pred_check
        %p1285 = pneg %p200
      $region46: #{residual_block.9} parent=43 // pred_check_branch
        %1287 = sbr.rel (%p1285) target = $region48
      $region47: #{residual_block.9} parent=43 // pred_region
        _
      $region48: #{residual_block.9} parent=43 // pred_fallthru
        _
    $region44: #{residual_block.9} parent=5 // pred_fallthru
      _
    %p1288 = scmp.le.s32.totalorder 2, %s12
    // Predicated region
    $region49: #{residual_block.9} parent=5 // pred_check
      %p1289 = pneg %p1288
    $region50: #{residual_block.9} parent=5 // pred_check_branch
      %1291 = sbr.rel (%p1289) target = $region52
    $region51: #{residual_block.9} parent=5 // pred_region
      %s1292 = ssub.s32 %s12, 2
      // Predicated region
      $region53: #{residual_block.9} parent=51 // pred_check
        %p1293 = pneg %p206
      $region54: #{residual_block.9} parent=51 // pred_check_branch
        %1295 = sbr.rel (%p1293) target = $region56
      $region55: #{residual_block.9} parent=51 // pred_region
        %p1296 = scmp.lt.s32.totalorder %s23, 1
        %s1297 = scalar_select %p1296, %s23, 1
        %p1298 = scmp.lt.s32.totalorder %s24, 7
        %s1299 = scalar_select %p1298, %s24, 7
        %s1300 = smul.addr %s1297, 8
        %s1301 = sadd.s32 %s1299, %s1300
        %s1302 = smul.addr %s1301, 8
        %s1303 = scalar_lea.vmem %s6, %s1302
      $region56: #{residual_block.9} parent=51 // pred_fallthru
        _
    $region52: #{residual_block.9} parent=5 // pred_fallthru
      _
  $region6: #{residual_block.9} parent=0 // loop_footer
    %s16 = sadd.s32 1, %s12
  $region7: #{residual_block.9} parent=0 // loop_footer_branch
    %11 = sbr.rel target = $region3
  $region8: #{residual_block.9} parent=0 // loop_exit
    _

// kernel: residual_block.11
$region0: #{residual_block.11}
  #allocation0 [shape = 'u32[]', space=smem, size = 0x4, offset = 0x4, fixed_abs, tag = 'smem constant byte address 0x4 - core index']
  #allocation1 [shape = 'u32[144,128]{1,0:T(1,128)}', space=vmem, size = 0x12000, scoped, tag = 'internal scratch']
  %s0 = inlined_call_operand.vmem [shape: f32[2,10,10,128], index: 0, kind: input, shape index: {}, may-alias: {0,1,2}]
  %s1 = inlined_call_operand.vmem [shape: f32[2,10,10,128], index: 1, kind: input, shape index: {}, may-alias: {0,1,2}]
  %s2 = inlined_call_operand.vmem [shape: f32[2,10,10,128], index: 2, kind: input, shape index: {}, may-alias: {0,1,2}]
  %s3 = inlined_call_operand.vmem [shape: f32[1,128], index: 3, kind: input, shape index: {}]
  %s4 = inlined_call_operand.vmem [shape: f32[1,128], index: 4, kind: input, shape index: {}]
  %s5 = inlined_call_operand.vmem [shape: bf16[1152,128], index: 5, kind: input, shape index: {}]
  %s6 = inlined_call_operand.vmem [shape: f32[2,8,8,128], index: 6, kind: input, shape index: {}]
  %s7 = inlined_call_operand.vmem [shape: bf16[128,128], index: 7, kind: input, shape index: {}]
  %s8 = inlined_call_operand.vmem [shape: f32[2,8,8,128], index: 8, kind: output, shape index: {}]
  %s9 = sld [smem:[#allocation0]]
  $region65: #{residual_block.11} parent=0
    _
  %s11 = ssub.s32 1, %s9
  %s12 = scalar_select 0, %s11, %s9
  loop: start=0, step=1, limit=18
  $region2: #{residual_block.11} parent=0 // loop_pre_header
    _
  $region3: #{residual_block.11} parent=0 // loop_header
    %s14 = sphi 0, %s18
    %p15 = scmp.ge.s32.totalorder %s14, 18
    %s21 = sphi 0, %s33
    %s22 = sphi 0, %s29
    %s23 = sphi 0, %s21
    %s24 = sphi 0, %s22
    %s25 = sphi 0, %s23
    %s26 = sphi 0, %s24
    %s38 = sphi 0, %s40
    %s41 = sphi 0, %s38
    %s42 = sphi 0, %s41
    %s58 = sphi 0, %s42
    %s68 = sphi 0, %s70
    %s71 = sphi 0, %s68
    %s72 = sphi 0, %s71
    %s88 = sphi 0, %s72
    %s98 = sphi 0, %s100
    %s101 = sphi 0, %s98
    %s102 = sphi 0, %s101
    %s118 = sphi 0, %s102
    %s122 = sphi 0, %s122
    %s124 = sphi 0, %s122
    %s125 = sphi 0, %s124
    %s139 = sphi 0, %s125
    %s143 = sphi 0, %s143
    %s145 = sphi 0, %s143
    %s146 = sphi 0, %s145
    %s160 = sphi 0, %s146
    %s164 = sphi 0, %s164
    %s166 = sphi 0, %s164
    %s167 = sphi 0, %s166
    %s181 = sphi 0, %s167
    %s189 = sphi 0, %s191
    %s192 = sphi 0, %s189
    %s193 = sphi 0, %s192
    %s209 = sphi 0, %s193
    %s213 = sphi 0, %s213
    %s215 = sphi 0, %s213
    %s216 = sphi 0, %s215
    %s230 = sphi 0, %s216
    %s238 = sphi 0, %s240
    %s241 = sphi 0, %s238
    %s242 = sphi 0, %s241
    %s258 = sphi 0, %s242
  $region4: #{residual_block.11} parent=0 // loop_header_branch
    %17 = sbr.rel (%p15) target = $region8
  $region5: #{residual_block.11} parent=0 // loop_body
    %s19 = ssub.s32 %s14, 1
    %s20 = ssub.s32 %s14, 2
    %s27 = sadd.s32 1, %s22
    %p28 = scmp.ge.s32.totalorder %s27, 8
    %s29 = scalar_select %p28, 0, %s27
    %s30 = sadd.s32 1, %s21
    %s31 = scalar_select %p28, %s30, %s21
    %p32 = scmp.ge.s32.totalorder %s31, 2
    %s33 = scalar_select %p32, 0, %s31
    %s34 = ssub.s32 %s21, %s33
    %s35 = ssub.s32 %s22, %s29
    %s36 = sor.u32 %s34, %s35
    %p37 = scmp.eq.s32.totalorder %s36, 0
    %s39 = sadd.s32 %s38, 1
    %s40 = scalar_select %p37, %s38, %s39
    %p43 = pneg %p37
    %p44 = scmp.eq.s32.totalorder %s14, 15
    %p45 = por %p43, %p44
    %p46 = scmp.ne.s32.totalorder %s38, %s41
    %p47 = scmp.eq.s32.totalorder %s14, 0
    %p48 = por %p46, %p47
    %p49 = scmp.ne.s32.totalorder %s38, %s41
    %p50 = scmp.eq.s32.totalorder %s19, 15
    %p51 = por %p49, %p50
    %p52 = scmp.ne.s32.totalorder %s41, %s42
    %p53 = scmp.eq.s32.totalorder %s19, 0
    %p54 = por %p52, %p53
    %p55 = scmp.ne.s32.totalorder %s41, %s42
    %p56 = scmp.eq.s32.totalorder %s20, 15
    %p57 = por %p55, %p56
    %p59 = scmp.ne.s32.totalorder %s42, %s58
    %p60 = scmp.eq.s32.totalorder %s20, 0
    %p61 = por %p59, %p60
    %s62 = sadd.s32 %s22, 1
    %s63 = sadd.s32 %s29, 1
    %s64 = ssub.s32 %s21, %s33
    %s65 = ssub.s32 %s62, %s63
    %s66 = sor.u32 %s64, %s65
    %p67 = scmp.eq.s32.totalorder %s66, 0
    %s69 = sadd.s32 %s68, 1
    %s70 = scalar_select %p67, %s68, %s69
    %p73 = pneg %p67
    %p74 = scmp.eq.s32.totalorder %s14, 15
    %p75 = por %p73, %p74
    %p76 = scmp.ne.s32.totalorder %s68, %s71
    %p77 = scmp.eq.s32.totalorder %s14, 0
    %p78 = por %p76, %p77
    %p79 = scmp.ne.s32.totalorder %s68, %s71
    %p80 = scmp.eq.s32.totalorder %s19, 15
    %p81 = por %p79, %p80
    %p82 = scmp.ne.s32.totalorder %s71, %s72
    %p83 = scmp.eq.s32.totalorder %s19, 0
    %p84 = por %p82, %p83
    %p85 = scmp.ne.s32.totalorder %s71, %s72
    %p86 = scmp.eq.s32.totalorder %s20, 15
    %p87 = por %p85, %p86
    %p89 = scmp.ne.s32.totalorder %s72, %s88
    %p90 = scmp.eq.s32.totalorder %s20, 0
    %p91 = por %p89, %p90
    %s92 = sadd.s32 %s22, 2
    %s93 = sadd.s32 %s29, 2
    %s94 = ssub.s32 %s21, %s33
    %s95 = ssub.s32 %s92, %s93
    %s96 = sor.u32 %s94, %s95
    %p97 = scmp.eq.s32.totalorder %s96, 0
    %s99 = sadd.s32 %s98, 1
    %s100 = scalar_select %p97, %s98, %s99
    %p103 = pneg %p97
    %p104 = scmp.eq.s32.totalorder %s14, 15
    %p105 = por %p103, %p104
    %p106 = scmp.ne.s32.totalorder %s98, %s101
    %p107 = scmp.eq.s32.totalorder %s14, 0
    %p108 = por %p106, %p107
    %p109 = scmp.ne.s32.totalorder %s98, %s101
    %p110 = scmp.eq.s32.totalorder %s19, 15
    %p111 = por %p109, %p110
    %p112 = scmp.ne.s32.totalorder %s101, %s102
    %p113 = scmp.eq.s32.totalorder %s19, 0
    %p114 = por %p112, %p113
    %p115 = scmp.ne.s32.totalorder %s101, %s102
    %p116 = scmp.eq.s32.totalorder %s20, 15
    %p117 = por %p115, %p116
    %p119 = scmp.ne.s32.totalorder %s102, %s118
    %p120 = scmp.eq.s32.totalorder %s20, 0
    %p121 = por %p119, %p120
    %s123 = sadd.s32 %s122, 1
    %p126 = scmp.eq.s32.totalorder %s14, 15
    %p127 = scmp.ne.s32.totalorder %s122, %s124
    %p128 = scmp.eq.s32.totalorder %s14, 0
    %p129 = por %p127, %p128
    %p130 = scmp.ne.s32.totalorder %s122, %s124
    %p131 = scmp.eq.s32.totalorder %s19, 15
    %p132 = por %p130, %p131
    %p133 = scmp.ne.s32.totalorder %s124, %s125
    %p134 = scmp.eq.s32.totalorder %s19, 0
    %p135 = por %p133, %p134
    %p136 = scmp.ne.s32.totalorder %s124, %s125
    %p137 = scmp.eq.s32.totalorder %s20, 15
    %p138 = por %p136, %p137
    %p140 = scmp.ne.s32.totalorder %s125, %s139
    %p141 = scmp.eq.s32.totalorder %s20, 0
    %p142 = por %p140, %p141
    %s144 = sadd.s32 %s143, 1
    %p147 = scmp.eq.s32.totalorder %s14, 15
    %p148 = scmp.ne.s32.totalorder %s143, %s145
    %p149 = scmp.eq.s32.totalorder %s14, 0
    %p150 = por %p148, %p149
    %p151 = scmp.ne.s32.totalorder %s143, %s145
    %p152 = scmp.eq.s32.totalorder %s19, 15
    %p153 = por %p151, %p152
    %p154 = scmp.ne.s32.totalorder %s145, %s146
    %p155 = scmp.eq.s32.totalorder %s19, 0
    %p156 = por %p154, %p155
    %p157 = scmp.ne.s32.totalorder %s145, %s146
    %p158 = scmp.eq.s32.totalorder %s20, 15
    %p159 = por %p157, %p158
    %p161 = scmp.ne.s32.totalorder %s146, %s160
    %p162 = scmp.eq.s32.totalorder %s20, 0
    %p163 = por %p161, %p162
    %s165 = sadd.s32 %s164, 1
    %p168 = scmp.eq.s32.totalorder %s14, 15
    %p169 = scmp.ne.s32.totalorder %s164, %s166
    %p170 = scmp.eq.s32.totalorder %s14, 0
    %p171 = por %p169, %p170
    %p172 = scmp.ne.s32.totalorder %s164, %s166
    %p173 = scmp.eq.s32.totalorder %s19, 15
    %p174 = por %p172, %p173
    %p175 = scmp.ne.s32.totalorder %s166, %s167
    %p176 = scmp.eq.s32.totalorder %s19, 0
    %p177 = por %p175, %p176
    %p178 = scmp.ne.s32.totalorder %s166, %s167
    %p179 = scmp.eq.s32.totalorder %s20, 15
    %p180 = por %p178, %p179
    %p182 = scmp.ne.s32.totalorder %s167, %s181
    %p183 = scmp.eq.s32.totalorder %s20, 0
    %p184 = por %p182, %p183
    %s185 = ssub.s32 %s21, %s33
    %s186 = ssub.s32 %s22, %s29
    %s187 = sor.u32 %s185, %s186
    %p188 = scmp.eq.s32.totalorder %s187, 0
    %s190 = sadd.s32 %s189, 1
    %s191 = scalar_select %p188, %s189, %s190
    %p194 = pneg %p188
    %p195 = scmp.eq.s32.totalorder %s14, 15
    %p196 = por %p194, %p195
    %p197 = scmp.ne.s32.totalorder %s189, %s192
    %p198 = scmp.eq.s32.totalorder %s14, 0
    %p199 = por %p197, %p198
    %p200 = scmp.ne.s32.totalorder %s189, %s192
    %p201 = scmp.eq.s32.totalorder %s19, 15
    %p202 = por %p200, %p201
    %p203 = scmp.ne.s32.totalorder %s192, %s193
    %p204 = scmp.eq.s32.totalorder %s19, 0
    %p205 = por %p203, %p204
    %p206 = scmp.ne.s32.totalorder %s192, %s193
    %p207 = scmp.eq.s32.totalorder %s20, 15
    %p208 = por %p206, %p207
    %p210 = scmp.ne.s32.totalorder %s193, %s209
    %p211 = scmp.eq.s32.totalorder %s20, 0
    %p212 = por %p210, %p211
    %s214 = sadd.s32 %s213, 1
    %p217 = scmp.eq.s32.totalorder %s14, 15
    %p218 = scmp.ne.s32.totalorder %s213, %s215
    %p219 = scmp.eq.s32.totalorder %s14, 0
    %p220 = por %p218, %p219
    %p221 = scmp.ne.s32.totalorder %s213, %s215
    %p222 = scmp.eq.s32.totalorder %s19, 15
    %p223 = por %p221, %p222
    %p224 = scmp.ne.s32.totalorder %s215, %s216
    %p225 = scmp.eq.s32.totalorder %s19, 0
    %p226 = por %p224, %p225
    %p227 = scmp.ne.s32.totalorder %s215, %s216
    %p228 = scmp.eq.s32.totalorder %s20, 15
    %p229 = por %p227, %p228
    %p231 = scmp.ne.s32.totalorder %s216, %s230
    %p232 = scmp.eq.s32.totalorder %s20, 0
    %p233 = por %p231, %p232
    %s234 = ssub.s32 %s21, %s33
    %s235 = ssub.s32 %s22, %s29
    %s236 = sor.u32 %s234, %s235
    %p237 = scmp.eq.s32.totalorder %s236, 0
    %s239 = sadd.s32 %s238, 1
    %s240 = scalar_select %p237, %s238, %s239
    %p243 = pneg %p237
    %p244 = scmp.eq.s32.totalorder %s14, 15
    %p245 = por %p243, %p244
    %p246 = scmp.ne.s32.totalorder %s238, %s241
    %p247 = scmp.eq.s32.totalorder %s14, 0
    %p248 = por %p246, %p247
    %p249 = scmp.ne.s32.totalorder %s238, %s241
    %p250 = scmp.eq.s32.totalorder %s19, 15
    %p251 = por %p249, %p250
    %p252 = scmp.ne.s32.totalorder %s241, %s242
    %p253 = scmp.eq.s32.totalorder %s19, 0
    %p254 = por %p252, %p253
    %p255 = scmp.ne.s32.totalorder %s241, %s242
    %p256 = scmp.eq.s32.totalorder %s20, 15
    %p257 = por %p255, %p256
    %p259 = scmp.ne.s32.totalorder %s242, %s258
    %p260 = scmp.eq.s32.totalorder %s20, 0
    %p261 = por %p259, %p260
    %p262 = scmp.le.s32.totalorder 1, %s14
    %p263 = scmp.lt.s32.totalorder %s14, 17
    %p264 = pnand %p262, %p263
    %p265 = pneg %p264
    // Predicated region
    $region9: #{residual_block.11} parent=5 // pred_check
      _
    $region10: #{residual_block.11} parent=5 // pred_check_branch
      %267 = sbr.rel (%p264) target = $region12
    $region11: #{residual_block.11} parent=5 // pred_region
      %s268 = ssub.s32 %s14, 1
      // Predicated region
      $region13: #{residual_block.11} parent=11 // pred_check
        %p269 = pneg %p135
      $region14: #{residual_block.11} parent=11 // pred_check_branch
        %271 = sbr.rel (%p269) target = $region16
      $region15: #{residual_block.11} parent=11 // pred_region
        _
      $region16: #{residual_block.11} parent=11 // pred_fallthru
        _
      // Predicated region
      $region17: #{residual_block.11} parent=11 // pred_check
        %p272 = pneg %p156
      $region18: #{residual_block.11} parent=11 // pred_check_branch
        %274 = sbr.rel (%p272) target = $region20
      $region19: #{residual_block.11} parent=11 // pred_region
        _
      $region20: #{residual_block.11} parent=11 // pred_fallthru
        _
      // Predicated region
      $region21: #{residual_block.11} parent=11 // pred_check
        %p275 = pneg %p177
      $region22: #{residual_block.11} parent=11 // pred_check_branch
        %277 = sbr.rel (%p275) target = $region24
      $region23: #{residual_block.11} parent=11 // pred_region
        _
      $region24: #{residual_block.11} parent=11 // pred_fallthru
        _
      // Predicated region
      $region25: #{residual_block.11} parent=11 // pred_check
        %p278 = pneg %p226
      $region26: #{residual_block.11} parent=11 // pred_check_branch
        %280 = sbr.rel (%p278) target = $region28
      $region27: #{residual_block.11} parent=11 // pred_region
        _
      $region28: #{residual_block.11} parent=11 // pred_fallthru
        _
    $region12: #{residual_block.11} parent=5 // pred_fallthru
      _
    %p281 = scmp.lt.s32.totalorder %s14, 16
    // Predicated region
    $region29: #{residual_block.11} parent=5 // pred_check
      %p282 = pneg %p281
    $region30: #{residual_block.11} parent=5 // pred_check_branch
      %284 = sbr.rel (%p282) target = $region32
    $region31: #{residual_block.11} parent=5 // pred_region
      // Predicated region
      $region33: #{residual_block.11} parent=31 // pred_check
        %p285 = pneg %p48
      $region34: #{residual_block.11} parent=31 // pred_check_branch
        %287 = sbr.rel (%p285) target = $region36
      $region35: #{residual_block.11} parent=31 // pred_region
        %p288 = scmp.lt.s32.totalorder %s21, 1
        %s289 = scalar_select %p288, %s21, 1
        %p290 = scmp.lt.s32.totalorder %s22, 9
        %s291 = scalar_select %p290, %s22, 9
        %s292 = smul.addr %s291, 2
        %s293 = smul.addr %s289, 20
        %s294 = sadd.s32 %s292, %s293
        %s295 = smul.addr %s294, 8
        %s296 = scalar_lea.vmem %s0, %s295
      $region36: #{residual_block.11} parent=31 // pred_fallthru
        _
      // Predicated region
      $region37: #{residual_block.11} parent=31 // pred_check
        %p297 = pneg %p78
      $region38: #{residual_block.11} parent=31 // pred_check_branch
        %299 = sbr.rel (%p297) target = $region40
      $region39: #{residual_block.11} parent=31 // pred_region
        %s300 = sadd.s32 %s22, 1
        %p301 = scmp.lt.s32.totalorder %s21, 1
        %s302 = scalar_select %p301, %s21, 1
        %p303 = scmp.lt.s32.totalorder %s300, 9
        %s304 = scalar_select %p303, %s300, 9
        %s305 = smul.addr %s304, 2
        %s306 = smul.addr %s302, 20
        %s307 = sadd.s32 %s305, %s306
        %s308 = smul.addr %s307, 8
        %s309 = scalar_lea.vmem %s1, %s308
        %s310 = sadd.s32 %s22, 1
      $region40: #{residual_block.11} parent=31 // pred_fallthru
        _
      // Predicated region
      $region41: #{residual_block.11} parent=31 // pred_check
        %p311 = pneg %p108
      $region42: #{residual_block.11} parent=31 // pred_check_branch
        %313 = sbr.rel (%p311) target = $region44
      $region43: #{residual_block.11} parent=31 // pred_region
        %s314 = sadd.s32 %s22, 2
        %p315 = scmp.lt.s32.totalorder %s21, 1
        %s316 = scalar_select %p315, %s21, 1
        %p317 = scmp.lt.s32.totalorder %s314, 9
        %s318 = scalar_select %p317, %s314, 9
        %s319 = smul.addr %s318, 2
        %s320 = smul.addr %s316, 20
        %s321 = sadd.s32 %s319, %s320
        %s322 = smul.addr %s321, 8
        %s323 = scalar_lea.vmem %s2, %s322
        %s324 = sadd.s32 %s22, 2
      $region44: #{residual_block.11} parent=31 // pred_fallthru
        _
      // Predicated region
      $region45: #{residual_block.11} parent=31 // pred_check
        %p325 = pneg %p199
      $region46: #{residual_block.11} parent=31 // pred_check_branch
        %327 = sbr.rel (%p325) target = $region48
      $region47: #{residual_block.11} parent=31 // pred_region
        %p328 = scmp.lt.s32.totalorder %s21, 1
        %s329 = scalar_select %p328, %s21, 1
        %p330 = scmp.lt.s32.totalorder %s22, 7
        %s331 = scalar_select %p330, %s22, 7
        %s332 = smul.addr %s329, 8
        %s333 = sadd.s32 %s331, %s332
        %s334 = smul.addr %s333, 8
        %s335 = scalar_lea.vmem %s6, %s334
      $region48: #{residual_block.11} parent=31 // pred_fallthru
        _
    $region32: #{residual_block.11} parent=5 // pred_fallthru
      _
    %p336 = scmp.le.s32.totalorder 1, %s14
    %p337 = scmp.lt.s32.totalorder %s14, 17
    %p338 = pnand %p336, %p337
    %p339 = pneg %p338
    // Predicated region
    $region49: #{residual_block.11} parent=5 // pred_check
      _
    $region50: #{residual_block.11} parent=5 // pred_check_branch
      %341 = sbr.rel (%p338) target = $region52
    $region51: #{residual_block.11} parent=5 // pred_region
      %s342 = ssub.s32 %s14, 1
      %p343 = scmp.lt.s32.totalorder %s23, 1
      %s344 = scalar_select %p343, %s23, 1
      %p345 = scmp.lt.s32.totalorder %s24, 9
      %s346 = scalar_select %p345, %s24, 9
      %s347 = smul.addr %s346, 2
      %s348 = smul.addr %s344, 20
      %s349 = sadd.s32 %s347, %s348
      %s350 = smul.addr %s349, 8
      %s351 = scalar_lea.vmem %s0, %s350
      %p352 = pneg %p54
      %p353 = pneg %p51
      %s354 = sadd.s32 %s24, 1
      %p355 = scmp.lt.s32.totalorder %s23, 1
      %s356 = scalar_select %p355, %s23, 1
      %p357 = scmp.lt.s32.totalorder %s354, 9
      %s358 = scalar_select %p357, %s354, 9
      %s359 = smul.addr %s358, 2
      %s360 = smul.addr %s356, 20
      %s361 = sadd.s32 %s359, %s360
      %s362 = smul.addr %s361, 8
      %s363 = scalar_lea.vmem %s1, %s362
      %p364 = pneg %p84
      %p365 = pneg %p81
      %s366 = sadd.s32 %s24, 2
      %p367 = scmp.lt.s32.totalorder %s23, 1
      %s368 = scalar_select %p367, %s23, 1
      %p369 = scmp.lt.s32.totalorder %s366, 9
      %s370 = scalar_select %p369, %s366, 9
      %s371 = smul.addr %s370, 2
      %s372 = smul.addr %s368, 20
      %s373 = sadd.s32 %s371, %s372
      %s374 = smul.addr %s373, 8
      %s375 = scalar_lea.vmem %s2, %s374
      %p376 = pneg %p114
      %p377 = pneg %p111
      %p378 = pneg %p135
      %p379 = pneg %p132
      %p380 = pneg %p156
      %p381 = pneg %p153
      %p382 = pneg %p177
      %p383 = pneg %p174
      %p384 = scmp.lt.s32.totalorder %s23, 1
      %s385 = scalar_select %p384, %s23, 1
      %p386 = scmp.lt.s32.totalorder %s24, 7
      %s387 = scalar_select %p386, %s24, 7
      %s388 = smul.addr %s385, 8
      %s389 = sadd.s32 %s387, %s388
      %s390 = smul.addr %s389, 8
      %s391 = scalar_lea.vmem %s6, %s390
      %p392 = pneg %p205
      %p393 = pneg %p202
      %p394 = pneg %p226
      %p395 = pneg %p223
      %p396 = pneg %p254
      %p397 = pneg %p251
      %p398 = scmp.lt.s32.totalorder %s23, 1
      %s399 = scalar_select %p398, %s23, 1
      %p400 = scmp.lt.s32.totalorder %s24, 7
      %s401 = scalar_select %p400, %s24, 7
      %s402 = smul.addr %s399, 8
      %s403 = sadd.s32 %s401, %s402
      %s404 = smul.addr %s403, 8
      %s405 = scalar_lea.vmem %s8, %s404
      %p406 = scmp.lt.s32.totalorder %s23, 1
      %s407 = scalar_select %p406, %s23, 1
      %p408 = scmp.lt.s32.totalorder %s24, 9
      %s409 = scalar_select %p408, %s24, 9
      %s410 = smul.addr %s409, 2
      %s411 = smul.addr %s407, 20
      %s412 = sadd.s32 %s410, %s411
      %s413 = smul.addr %s412, 8
      %s414 = scalar_lea.vmem %s0, %s413
      %s415 = sadd.s32 %s24, 1
      %p416 = scmp.lt.s32.totalorder %s23, 1
      %s417 = scalar_select %p416, %s23, 1
      %p418 = scmp.lt.s32.totalorder %s415, 9
      %s419 = scalar_select %p418, %s415, 9
      %s420 = smul.addr %s419, 2
      %s421 = smul.addr %s417, 20
      %s422 = sadd.s32 %s420, %s421
      %s423 = smul.addr %s422, 8
      %s424 = scalar_lea.vmem %s1, %s423
      %s425 = sadd.s32 %s24, 1
      %s426 = sadd.s32 %s24, 2
      %p427 = scmp.lt.s32.totalorder %s23, 1
      %s428 = scalar_select %p427, %s23, 1
      %p429 = scmp.lt.s32.totalorder %s426, 9
      %s430 = scalar_select %p429, %s426, 9
      %s431 = smul.addr %s430, 2
      %s432 = smul.addr %s428, 20
      %s433 = sadd.s32 %s431, %s432
      %s434 = smul.addr %s433, 8
      %s435 = scalar_lea.vmem %s2, %s434
      %s436 = sadd.s32 %s24, 2
      %p437 = scmp.lt.s32.totalorder %s23, 1
      %s438 = scalar_select %p437, %s23, 1
      %p439 = scmp.lt.s32.totalorder %s24, 7
      %s440 = scalar_select %p439, %s24, 7
      %s441 = smul.addr %s438, 8
      %s442 = sadd.s32 %s440, %s441
      %s443 = smul.addr %s442, 8
      %s444 = scalar_lea.vmem %s6, %s443
      %p445 = scmp.lt.s32.totalorder %s23, 1
      %s446 = scalar_select %p445, %s23, 1
      %p447 = scmp.lt.s32.totalorder %s24, 7
      %s448 = scalar_select %p447, %s24, 7
      %s449 = smul.addr %s446, 8
      %s450 = sadd.s32 %s448, %s449
      %s451 = smul.addr %s450, 8
      %s452 = scalar_lea.vmem %s8, %s451
      %v454 = vld [vmem:[%s3] sm:$0x1]
      %v455 = vld [vmem:[%s4] sm:$0x1]
      %p456 = scmp.ge.s32.totalorder %s24, 1
      %p457 = scmp.le.s32.totalorder %s24, 8
      %p458 = pnand %p456, %p457
      %p459 = pneg %p458
      %v460 = vld [vmem:[%s414] sm:$0xff]
      %v462 = vlaneseq
      %v463 = vshrl.u32 %v462, 7
      %v464 = vsub.s32 0, %v463
      %v465 = vrot.slane %v454, %v464
      %v467 = vmul.f32 %v460, %v465
      %v469 = vlaneseq
      %v470 = vshrl.u32 %v469, 7
      %v471 = vsub.s32 0, %v470
      %v472 = vrot.slane %v455, %v471
      %v474 = vadd.f32 %v467, %v472
      %v475 = vmax.f32 %v474, 0.0
      %v476 = vlaneseq
      %v477 = vshrl.u32 %v476, 7
      %vm478 = vcmp.ge.s32.totalorder %v477, 1
      %vm479 = vcmp.le.s32.totalorder %v477, 8
      %vm480 = vmand %vm478, %vm479
      %s481 = scalar_select %p459, 1, 0
      %v482 = vstv %s481
      %vm483 = vcmp.eq.s32.totalorder %v482, 1
      %vm484 = vmand %vm480, %vm483
      %v485 = vsel %vm484, 1, 0
      %vm486 = vcmp.eq.s32.totalorder %v485, 1
      %v487 = vsel %vm486, %v475, 0.0
      %v488 = vpack.c.bf16 %v487, %v487
      %v489 = vld [vmem:[%s414 + $0x1] sm:$0xff]
      %v490 = vmul.f32 %v489, %v465
      %v491 = vadd.f32 %v490, %v472
      %v492 = vmax.f32 %v491, 0.0
      %v493 = vadd.s32 %v477, 1
      %vm494 = vcmp.ge.s32.totalorder %v493, 1
      %vm495 = vcmp.le.s32.totalorder %v493, 8
      %vm496 = vmand %vm494, %vm495
      %vm497 = vmand %vm496, %vm483
      %v498 = vsel %vm497, 1, 0
      %vm499 = vcmp.eq.s32.totalorder %v498, 1
      %v500 = vsel %vm499, %v492, 0.0
      %v501 = vpack.c.bf16 %v500, %v500
      %v502 = vld [vmem:[%s414 + $0x2] sm:$0xff]
      %v503 = vmul.f32 %v502, %v465
      %v504 = vadd.f32 %v503, %v472
      %v505 = vmax.f32 %v504, 0.0
      %v506 = vadd.s32 %v477, 2
      %vm507 = vcmp.ge.s32.totalorder %v506, 1
      %vm508 = vcmp.le.s32.totalorder %v506, 8
      %vm509 = vmand %vm507, %vm508
      %vm510 = vmand %vm509, %vm483
      %v511 = vsel %vm510, 1, 0
      %vm512 = vcmp.eq.s32.totalorder %v511, 1
      %v513 = vsel %vm512, %v505, 0.0
      %v514 = vpack.c.bf16 %v513, %v513
      %s515 = sadd.s32 %s24, 1
      %p516 = scmp.ge.s32.totalorder %s515, 1
      %p517 = scmp.le.s32.totalorder %s515, 8
      %p518 = pnand %p516, %p517
      %p519 = pneg %p518
      %v520 = vld [vmem:[%s424] sm:$0xff]
      %v521 = vmul.f32 %v520, %v465
      %v522 = vadd.f32 %v521, %v472
      %v523 = vmax.f32 %v522, 0.0
      %s524 = scalar_select %p519, 1, 0
      %v525 = vstv %s524
      %vm526 = vcmp.eq.s32.totalorder %v525, 1
      %vm527 = vmand %vm480, %vm526
      %v528 = vsel %vm527, 1, 0
      %vm529 = vcmp.eq.s32.totalorder %v528, 1
      %v530 = vsel %vm529, %v523, 0.0
      %v531 = vpack.c.bf16 %v530, %v530
      %v532 = vld [vmem:[%s424 + $0x1] sm:$0xff]
      %v533 = vmul.f32 %v532, %v465
      %v534 = vadd.f32 %v533, %v472
      %v535 = vmax.f32 %v534, 0.0
      %vm536 = vmand %vm496, %vm526
      %v537 = vsel %vm536, 1, 0
      %vm538 = vcmp.eq.s32.totalorder %v537, 1
      %v539 = vsel %vm538, %v535, 0.0
      %v540 = vpack.c.bf16 %v539, %v539
      %v541 = vld [vmem:[%s424 + $0x2] sm:$0xff]
      %v542 = vmul.f32 %v541, %v465
      %v543 = vadd.f32 %v542, %v472
      %v544 = vmax.f32 %v543, 0.0
      %vm545 = vmand %vm509, %vm526
      %v546 = vsel %vm545, 1, 0
      %vm547 = vcmp.eq.s32.totalorder %v546, 1
      %v548 = vsel %vm547, %v544, 0.0
      %v549 = vpack.c.bf16 %v548, %v548
      %s550 = sadd.s32 %s24, 2
      %p551 = scmp.ge.s32.totalorder %s550, 1
      %p552 = scmp.le.s32.totalorder %s550, 8
      %p553 = pnand %p551, %p552
      %p554 = pneg %p553
      %v555 = vld [vmem:[%s435] sm:$0xff]
      %v556 = vmul.f32 %v555, %v465
      %v557 = vadd.f32 %v556, %v472
      %v558 = vmax.f32 %v557, 0.0
      %s559 = scalar_select %p554, 1, 0
      %v560 = vstv %s559
      %vm561 = vcmp.eq.s32.totalorder %v560, 1
      %vm562 = vmand %vm480, %vm561
      %v563 = vsel %vm562, 1, 0
      %vm564 = vcmp.eq.s32.totalorder %v563, 1
      %v565 = vsel %vm564, %v558, 0.0
      %v566 = vpack.c.bf16 %v565, %v565
      %v567 = vld [vmem:[%s435 + $0x1] sm:$0xff]
      %v568 = vmul.f32 %v567, %v465
      %v569 = vadd.f32 %v568, %v472
      %v570 = vmax.f32 %v569, 0.0
      %vm571 = vmand %vm496, %vm561
      %v572 = vsel %vm571, 1, 0
      %vm573 = vcmp.eq.s32.totalorder %v572, 1
      %v574 = vsel %vm573, %v570, 0.0
      %v575 = vpack.c.bf16 %v574, %v574
      %v576 = vld [vmem:[%s435 + $0x2] sm:$0xff]
      %v577 = vmul.f32 %v576, %v465
      %v578 = vadd.f32 %v577, %v472
      %v579 = vmax.f32 %v578, 0.0
      %vm580 = vmand %vm509, %vm561
      %v581 = vsel %vm580, 1, 0
      %vm582 = vcmp.eq.s32.totalorder %v581, 1
      %v583 = vsel %vm582, %v579, 0.0
      %v584 = vpack.c.bf16 %v583, %v583
      %v585 = vld [vmem:[%s5] sm:$0xf]
      %v586 = vld [vmem:[%s5 + $0x4] sm:$0xf]
      %v587 = vld [vmem:[%s5 + $0x8] sm:$0xf]
      %v588 = vld [vmem:[%s5 + $0xc] sm:$0xf]
      %v589 = vld [vmem:[%s5 + $0x10] sm:$0xf]
      %v590 = vld [vmem:[%s5 + $0x14] sm:$0xf]
      %v591 = vld [vmem:[%s5 + $0x18] sm:$0xf]
      %v592 = vld [vmem:[%s5 + $0x1c] sm:$0xf]
      %v593 = vld [vmem:[%s5 + $0x20] sm:$0xf]
      %v594 = vld [vmem:[%s5 + $0x24] sm:$0xf]
      %v595 = vld [vmem:[%s5 + $0x28] sm:$0xf]
      %v596 = vld [vmem:[%s5 + $0x2c] sm:$0xf]
      %v597 = vld [vmem:[%s5 + $0x30] sm:$0xf]
      %v598 = vld [vmem:[%s5 + $0x34] sm:$0xf]
      %v599 = vld [vmem:[%s5 + $0x38] sm:$0xf]
      %v600 = vld [vmem:[%s5 + $0x3c] sm:$0xf]
      %v601 = vld [vmem:[%s5 + $0x40] sm:$0xf]
      %v602 = vld [vmem:[%s5 + $0x44] sm:$0xf]
      %v603 = vld [vmem:[%s5 + $0x48] sm:$0xf]
      %v604 = vld [vmem:[%s5 + $0x4c] sm:$0xf]
      %v605 = vld [vmem:[%s5 + $0x50] sm:$0xf]
      %v606 = vld [vmem:[%s5 + $0x54] sm:$0xf]
      %v607 = vld [vmem:[%s5 + $0x58] sm:$0xf]
      %v608 = vld [vmem:[%s5 + $0x5c] sm:$0xf]
      %v609 = vld [vmem:[%s5 + $0x60] sm:$0xf]
      %v610 = vld [vmem:[%s5 + $0x64] sm:$0xf]
      %v611 = vld [vmem:[%s5 + $0x68] sm:$0xf]
      %v612 = vld [vmem:[%s5 + $0x6c] sm:$0xf]
      %v613 = vld [vmem:[%s5 + $0x70] sm:$0xf]
      %v614 = vld [vmem:[%s5 + $0x74] sm:$0xf]
      %v615 = vld [vmem:[%s5 + $0x78] sm:$0xf]
      %v616 = vld [vmem:[%s5 + $0x7c] sm:$0xf]
      %v617 = vld [vmem:[%s5 + $0x80] sm:$0xf]
      %v618 = vld [vmem:[%s5 + $0x84] sm:$0xf]
      %v619 = vld [vmem:[%s5 + $0x88] sm:$0xf]
      %v620 = vld [vmem:[%s5 + $0x8c] sm:$0xf]
      %v621 = vld [vmem:[%s5 + $0x90] sm:$0xf]
      %v622 = vld [vmem:[%s5 + $0x94] sm:$0xf]
      %v623 = vld [vmem:[%s5 + $0x98] sm:$0xf]
      %v624 = vld [vmem:[%s5 + $0x9c] sm:$0xf]
      %v625 = vld [vmem:[%s5 + $0xa0] sm:$0xf]
      %v626 = vld [vmem:[%s5 + $0xa4] sm:$0xf]
      %v627 = vld [vmem:[%s5 + $0xa8] sm:$0xf]
      %v628 = vld [vmem:[%s5 + $0xac] sm:$0xf]
      %v629 = vld [vmem:[%s5 + $0xb0] sm:$0xf]
      %v630 = vld [vmem:[%s5 + $0xb4] sm:$0xf]
      %v631 = vld [vmem:[%s5 + $0xb8] sm:$0xf]
      %v632 = vld [vmem:[%s5 + $0xbc] sm:$0xf]
      %v633 = vld [vmem:[%s5 + $0xc0] sm:$0xf]
      %v634 = vld [vmem:[%s5 + $0xc4] sm:$0xf]
      %v635 = vld [vmem:[%s5 + $0xc8] sm:$0xf]
      %v636 = vld [vmem:[%s5 + $0xcc] sm:$0xf]
      %v637 = vld [vmem:[%s5 + $0xd0] sm:$0xf]
      %v638 = vld [vmem:[%s5 + $0xd4] sm:$0xf]
      %v639 = vld [vmem:[%s5 + $0xd8] sm:$0xf]
      %v640 = vld [vmem:[%s5 + $0xdc] sm:$0xf]
      %v641 = vld [vmem:[%s5 + $0xe0] sm:$0xf]
      %v642 = vld [vmem:[%s5 + $0xe4] sm:$0xf]
      %v643 = vld [vmem:[%s5 + $0xe8] sm:$0xf]
      %v644 = vld [vmem:[%s5 + $0xec] sm:$0xf]
      %v645 = vld [vmem:[%s5 + $0xf0] sm:$0xf]
      %v646 = vld [vmem:[%s5 + $0xf4] sm:$0xf]
      %v647 = vld [vmem:[%s5 + $0xf8] sm:$0xf]
      %v648 = vld [vmem:[%s5 + $0xfc] sm:$0xf]
      %v649 = vld [vmem:[%s5 + $0x100] sm:$0xf]
      %v650 = vld [vmem:[%s5 + $0x104] sm:$0xf]
      %v651 = vld [vmem:[%s5 + $0x108] sm:$0xf]
      %v652 = vld [vmem:[%s5 + $0x10c] sm:$0xf]
      %v653 = vld [vmem:[%s5 + $0x110] sm:$0xf]
      %v654 = vld [vmem:[%s5 + $0x114] sm:$0xf]
      %v655 = vld [vmem:[%s5 + $0x118] sm:$0xf]
      %v656 = vld [vmem:[%s5 + $0x11c] sm:$0xf]
      %v657 = vld [vmem:[%s5 + $0x120] sm:$0xf]
      %v658 = vld [vmem:[%s5 + $0x124] sm:$0xf]
      %v659 = vld [vmem:[%s5 + $0x128] sm:$0xf]
      %v660 = vld [vmem:[%s5 + $0x12c] sm:$0xf]
      %v661 = vld [vmem:[%s5 + $0x130] sm:$0xf]
      %v662 = vld [vmem:[%s5 + $0x134] sm:$0xf]
      %v663 = vld [vmem:[%s5 + $0x138] sm:$0xf]
      %v664 = vld [vmem:[%s5 + $0x13c] sm:$0xf]
      %v665 = vld [vmem:[%s5 + $0x140] sm:$0xf]
      %v666 = vld [vmem:[%s5 + $0x144] sm:$0xf]
      %v667 = vld [vmem:[%s5 + $0x148] sm:$0xf]
      %v668 = vld [vmem:[%s5 + $0x14c] sm:$0xf]
      %v669 = vld [vmem:[%s5 + $0x150] sm:$0xf]
      %v670 = vld [vmem:[%s5 + $0x154] sm:$0xf]
      %v671 = vld [vmem:[%s5 + $0x158] sm:$0xf]
      %v672 = vld [vmem:[%s5 + $0x15c] sm:$0xf]
      %v673 = vld [vmem:[%s5 + $0x160] sm:$0xf]
      %v674 = vld [vmem:[%s5 + $0x164] sm:$0xf]
      %v675 = vld [vmem:[%s5 + $0x168] sm:$0xf]
      %v676 = vld [vmem:[%s5 + $0x16c] sm:$0xf]
      %v677 = vld [vmem:[%s5 + $0x170] sm:$0xf]
      %v678 = vld [vmem:[%s5 + $0x174] sm:$0xf]
      %v679 = vld [vmem:[%s5 + $0x178] sm:$0xf]
      %v680 = vld [vmem:[%s5 + $0x17c] sm:$0xf]
      %v681 = vld [vmem:[%s5 + $0x180] sm:$0xf]
      %v682 = vld [vmem:[%s5 + $0x184] sm:$0xf]
      %v683 = vld [vmem:[%s5 + $0x188] sm:$0xf]
      %v684 = vld [vmem:[%s5 + $0x18c] sm:$0xf]
      %v685 = vld [vmem:[%s5 + $0x190] sm:$0xf]
      %v686 = vld [vmem:[%s5 + $0x194] sm:$0xf]
      %v687 = vld [vmem:[%s5 + $0x198] sm:$0xf]
      %v688 = vld [vmem:[%s5 + $0x19c] sm:$0xf]
      %v689 = vld [vmem:[%s5 + $0x1a0] sm:$0xf]
      %v690 = vld [vmem:[%s5 + $0x1a4] sm:$0xf]
      %v691 = vld [vmem:[%s5 + $0x1a8] sm:$0xf]
      %v692 = vld [vmem:[%s5 + $0x1ac] sm:$0xf]
      %v693 = vld [vmem:[%s5 + $0x1b0] sm:$0xf]
      %v694 = vld [vmem:[%s5 + $0x1b4] sm:$0xf]
      %v695 = vld [vmem:[%s5 + $0x1b8] sm:$0xf]
      %v696 = vld [vmem:[%s5 + $0x1bc] sm:$0xf]
      %v697 = vld [vmem:[%s5 + $0x1c0] sm:$0xf]
      %v698 = vld [vmem:[%s5 + $0x1c4] sm:$0xf]
      %v699 = vld [vmem:[%s5 + $0x1c8] sm:$0xf]
      %v700 = vld [vmem:[%s5 + $0x1cc] sm:$0xf]
      %v701 = vld [vmem:[%s5 + $0x1d0] sm:$0xf]
      %v702 = vld [vmem:[%s5 + $0x1d4] sm:$0xf]
      %v703 = vld [vmem:[%s5 + $0x1d8] sm:$0xf]
      %v704 = vld [vmem:[%s5 + $0x1dc] sm:$0xf]
      %v705 = vld [vmem:[%s5 + $0x1e0] sm:$0xf]
      %v706 = vld [vmem:[%s5 + $0x1e4] sm:$0xf]
      %v707 = vld [vmem:[%s5 + $0x1e8] sm:$0xf]
      %v708 = vld [vmem:[%s5 + $0x1ec] sm:$0xf]
      %v709 = vld [vmem:[%s5 + $0x1f0] sm:$0xf]
      %v710 = vld [vmem:[%s5 + $0x1f4] sm:$0xf]
      %v711 = vld [vmem:[%s5 + $0x1f8] sm:$0xf]
      %v712 = vld [vmem:[%s5 + $0x1fc] sm:$0xf]
      %v713 = vld [vmem:[%s5 + $0x200] sm:$0xf]
      %v714 = vld [vmem:[%s5 + $0x204] sm:$0xf]
      %v715 = vld [vmem:[%s5 + $0x208] sm:$0xf]
      %v716 = vld [vmem:[%s5 + $0x20c] sm:$0xf]
      %v717 = vld [vmem:[%s5 + $0x210] sm:$0xf]
      %v718 = vld [vmem:[%s5 + $0x214] sm:$0xf]
      %v719 = vld [vmem:[%s5 + $0x218] sm:$0xf]
      %v720 = vld [vmem:[%s5 + $0x21c] sm:$0xf]
      %v721 = vld [vmem:[%s5 + $0x220] sm:$0xf]
      %v722 = vld [vmem:[%s5 + $0x224] sm:$0xf]
      %v723 = vld [vmem:[%s5 + $0x228] sm:$0xf]
      %v724 = vld [vmem:[%s5 + $0x22c] sm:$0xf]
      %v725 = vld [vmem:[%s5 + $0x230] sm:$0xf]
      %v726 = vld [vmem:[%s5 + $0x234] sm:$0xf]
      %v727 = vld [vmem:[%s5 + $0x238] sm:$0xf]
      %v728 = vld [vmem:[%s5 + $0x23c] sm:$0xf]
      %v729 = vld [vmem:[%s444] sm:$0xff]
      %v730 = vpack.c.bf16 %v729, %v729
      %v731 = vld [vmem:[%s7] sm:$0xf]
      %v732 = vld [vmem:[%s7 + $0x4] sm:$0xf]
      %v733 = vld [vmem:[%s7 + $0x8] sm:$0xf]
      %v734 = vld [vmem:[%s7 + $0xc] sm:$0xf]
      %v735 = vld [vmem:[%s7 + $0x10] sm:$0xf]
      %v736 = vld [vmem:[%s7 + $0x14] sm:$0xf]
      %v737 = vld [vmem:[%s7 + $0x18] sm:$0xf]
      %v738 = vld [vmem:[%s7 + $0x1c] sm:$0xf]
      %v739 = vld [vmem:[%s7 + $0x20] sm:$0xf]
      %v740 = vld [vmem:[%s7 + $0x24] sm:$0xf]
      %v741 = vld [vmem:[%s7 + $0x28] sm:$0xf]
      %v742 = vld [vmem:[%s7 + $0x2c] sm:$0xf]
      %v743 = vld [vmem:[%s7 + $0x30] sm:$0xf]
      %v744 = vld [vmem:[%s7 + $0x34] sm:$0xf]
      %v745 = vld [vmem:[%s7 + $0x38] sm:$0xf]
      %v746 = vld [vmem:[%s7 + $0x3c] sm:$0xf]
      %v763 = vunpack.c.l.b16 %v731
      %v764 = vunpack.c.l.b16 %v732
      %v765 = vunpack.c.l.b16 %v733
      %v766 = vunpack.c.l.b16 %v734
      %v767 = vunpack.c.l.b16 %v735
      %v768 = vunpack.c.l.b16 %v736
      %v769 = vunpack.c.l.b16 %v737
      %v770 = vunpack.c.l.b16 %v738
      %v771 = vunpack.c.l.b16 %v739
      %v772 = vunpack.c.l.b16 %v740
      %v773 = vunpack.c.l.b16 %v741
      %v774 = vunpack.c.l.b16 %v742
      %v775 = vunpack.c.l.b16 %v743
      %v776 = vunpack.c.l.b16 %v744
      %v777 = vunpack.c.l.b16 %v745
      %v778 = vunpack.c.l.b16 %v746
      %v779 = vpack.c.b16 %v764, %v763
      %v780 = vpack.c.b16 %v766, %v765
      %v781 = vpack.c.b16 %v768, %v767
      %v782 = vpack.c.b16 %v770, %v769
      %v783 = vpack.c.b16 %v772, %v771
      %v784 = vpack.c.b16 %v774, %v773
      %v785 = vpack.c.b16 %v776, %v775
      %v786 = vpack.c.b16 %v778, %v777
      %795 = vmatprep.subr.bf16.mxu0 0
      %796 = vmatpush1.bf16.msra.mxu0 %v786
      %797 = vmatprep.subr.bf16.mxu0 0
      %798 = vmatpush1.bf16.msra.mxu0 %v785
      %799 = vmatprep.subr.bf16.mxu0 0
      %800 = vmatpush1.bf16.msra.mxu0 %v784
      %801 = vmatprep.subr.bf16.mxu0 0
      %802 = vmatpush1.bf16.msra.mxu0 %v783
      %803 = vmatprep.subr.bf16.mxu0 0
      %804 = vmatpush1.bf16.msra.mxu0 %v782
      %805 = vmatprep.subr.bf16.mxu0 0
      %806 = vmatpush1.bf16.msra.mxu0 %v781
      %807 = vmatprep.subr.bf16.mxu0 0
      %808 = vmatpush1.bf16.msra.mxu0 %v780
      %809 = vmatprep.subr.bf16.mxu0 0
      %810 = vmatpush1.bf16.msra.mxu0 %v779
      %811 = vmatprep.subr.bf16.mxu0 0
      %812 = vmatpush2.bf16.msra.mxu0 0
      %813 = vmatprep.subr.bf16.mxu0 0
      %814 = vmatpush2.bf16.msra.mxu0 0
      %815 = vmatprep.subr.bf16.mxu0 0
      %816 = vmatpush2.bf16.msra.mxu0 0
      %817 = vmatprep.subr.bf16.mxu0 0
      %818 = vmatpush2.bf16.msra.mxu0 0
      %819 = vmatprep.subr.bf16.mxu0 0
      %820 = vmatpush2.bf16.msra.mxu0 0
      %821 = vmatprep.subr.bf16.mxu0 0
      %822 = vmatpush2.bf16.msra.mxu0 0
      %823 = vmatprep.subr.bf16.mxu0 0
      %824 = vmatpush2.bf16.msra.mxu0 0
      %825 = vmatprep.subr.bf16.mxu0 0
      %826 = vmatpush2.bf16.msra.mxu0 0
      %827 = vmatprep.mubr.bf16.mxu0 0
      %828 = vmatmul.mubr.bf16.gmra.mxu0 %v730
      %v829 = vpop.f32.mrf.mxu0
      %v830 = vadd.f32 0.0, %v829
      %v831 = vpop.f32.mrf.mxu0
      %v832 = vpop.f32.mrf.mxu0
      %v833 = vpop.f32.mrf.mxu0
      %834 = vdwg.mxu0
      %v979 = vunpack.c.l.b16 %v585
      %v980 = vunpack.c.l.b16 %v586
      %v981 = vunpack.c.l.b16 %v587
      %v982 = vunpack.c.l.b16 %v588
      %v983 = vunpack.c.l.b16 %v589
      %v984 = vunpack.c.l.b16 %v590
      %v985 = vunpack.c.l.b16 %v591
      %v986 = vunpack.c.l.b16 %v592
      %v987 = vunpack.c.l.b16 %v593
      %v988 = vunpack.c.l.b16 %v594
      %v989 = vunpack.c.l.b16 %v595
      %v990 = vunpack.c.l.b16 %v596
      %v991 = vunpack.c.l.b16 %v597
      %v992 = vunpack.c.l.b16 %v598
      %v993 = vunpack.c.l.b16 %v599
      %v994 = vunpack.c.l.b16 %v600
      %v995 = vunpack.c.l.b16 %v601
      %v996 = vunpack.c.l.b16 %v602
      %v997 = vunpack.c.l.b16 %v603
      %v998 = vunpack.c.l.b16 %v604
      %v999 = vunpack.c.l.b16 %v605
      %v1000 = vunpack.c.l.b16 %v606
      %v1001 = vunpack.c.l.b16 %v607
      %v1002 = vunpack.c.l.b16 %v608
      %v1003 = vunpack.c.l.b16 %v609
      %v1004 = vunpack.c.l.b16 %v610
      %v1005 = vunpack.c.l.b16 %v611
      %v1006 = vunpack.c.l.b16 %v612
      %v1007 = vunpack.c.l.b16 %v613
      %v1008 = vunpack.c.l.b16 %v614
      %v1009 = vunpack.c.l.b16 %v615
      %v1010 = vunpack.c.l.b16 %v616
      %v1011 = vunpack.c.l.b16 %v617
      %v1012 = vunpack.c.l.b16 %v618
      %v1013 = vunpack.c.l.b16 %v619
      %v1014 = vunpack.c.l.b16 %v620
      %v1015 = vunpack.c.l.b16 %v621
      %v1016 = vunpack.c.l.b16 %v622
      %v1017 = vunpack.c.l.b16 %v623
      %v1018 = vunpack.c.l.b16 %v624
      %v1019 = vunpack.c.l.b16 %v625
      %v1020 = vunpack.c.l.b16 %v626
      %v1021 = vunpack.c.l.b16 %v627
      %v1022 = vunpack.c.l.b16 %v628
      %v1023 = vunpack.c.l.b16 %v629
      %v1024 = vunpack.c.l.b16 %v630
      %v1025 = vunpack.c.l.b16 %v631
      %v1026 = vunpack.c.l.b16 %v632
      %v1027 = vunpack.c.l.b16 %v633
      %v1028 = vunpack.c.l.b16 %v634
      %v1029 = vunpack.c.l.b16 %v635
      %v1030 = vunpack.c.l.b16 %v636
      %v1031 = vunpack.c.l.b16 %v637
      %v1032 = vunpack.c.l.b16 %v638
      %v1033 = vunpack.c.l.b16 %v639
      %v1034 = vunpack.c.l.b16 %v640
      %v1035 = vunpack.c.l.b16 %v641
      %v1036 = vunpack.c.l.b16 %v642
      %v1037 = vunpack.c.l.b16 %v643
      %v1038 = vunpack.c.l.b16 %v644
      %v1039 = vunpack.c.l.b16 %v645
      %v1040 = vunpack.c.l.b16 %v646
      %v1041 = vunpack.c.l.b16 %v647
      %v1042 = vunpack.c.l.b16 %v648
      %v1043 = vunpack.c.l.b16 %v649
      %v1044 = vunpack.c.l.b16 %v650
      %v1045 = vunpack.c.l.b16 %v651
      %v1046 = vunpack.c.l.b16 %v652
      %v1047 = vunpack.c.l.b16 %v653
      %v1048 = vunpack.c.l.b16 %v654
      %v1049 = vunpack.c.l.b16 %v655
      %v1050 = vunpack.c.l.b16 %v656
      %v1051 = vunpack.c.l.b16 %v657
      %v1052 = vunpack.c.l.b16 %v658
      %v1053 = vunpack.c.l.b16 %v659
      %v1054 = vunpack.c.l.b16 %v660
      %v1055 = vunpack.c.l.b16 %v661
      %v1056 = vunpack.c.l.b16 %v662
      %v1057 = vunpack.c.l.b16 %v663
      %v1058 = vunpack.c.l.b16 %v664
      %v1059 = vunpack.c.l.b16 %v665
      %v1060 = vunpack.c.l.b16 %v666
      %v1061 = vunpack.c.l.b16 %v667
      %v1062 = vunpack.c.l.b16 %v668
      %v1063 = vunpack.c.l.b16 %v669
      %v1064 = vunpack.c.l.b16 %v670
      %v1065 = vunpack.c.l.b16 %v671
      %v1066 = vunpack.c.l.b16 %v672
      %v1067 = vunpack.c.l.b16 %v673
      %v1068 = vunpack.c.l.b16 %v674
      %v1069 = vunpack.c.l.b16 %v675
      %v1070 = vunpack.c.l.b16 %v676
      %v1071 = vunpack.c.l.b16 %v677
      %v1072 = vunpack.c.l.b16 %v678
      %v1073 = vunpack.c.l.b16 %v679
      %v1074 = vunpack.c.l.b16 %v680
      %v1075 = vunpack.c.l.b16 %v681
      %v1076 = vunpack.c.l.b16 %v682
      %v1077 = vunpack.c.l.b16 %v683
      %v1078 = vunpack.c.l.b16 %v684
      %v1079 = vunpack.c.l.b16 %v685
      %v1080 = vunpack.c.l.b16 %v686
      %v1081 = vunpack.c.l.b16 %v687
      %v1082 = vunpack.c.l.b16 %v688
      %v1083 = vunpack.c.l.b16 %v689
      %v1084 = vunpack.c.l.b16 %v690
      %v1085 = vunpack.c.l.b16 %v691
      %v1086 = vunpack.c.l.b16 %v692
      %v1087 = vunpack.c.l.b16 %v693
      %v1088 = vunpack.c.l.b16 %v694
      %v1089 = vunpack.c.l.b16 %v695
      %v1090 = vunpack.c.l.b16 %v696
      %v1091 = vunpack.c.l.b16 %v697
      %v1092 = vunpack.c.l.b16 %v698
      %v1093 = vunpack.c.l.b16 %v699
      %v1094 = vunpack.c.l.b16 %v700
      %v1095 = vunpack.c.l.b16 %v701
      %v1096 = vunpack.c.l.b16 %v702
      %v1097 = vunpack.c.l.b16 %v703
      %v1098 = vunpack.c.l.b16 %v704
      %v1099 = vunpack.c.l.b16 %v705
      %v1100 = vunpack.c.l.b16 %v706
      %v1101 = vunpack.c.l.b16 %v707
      %v1102 = vunpack.c.l.b16 %v708
      %v1103 = vunpack.c.l.b16 %v709
      %v1104 = vunpack.c.l.b16 %v710
      %v1105 = vunpack.c.l.b16 %v711
      %v1106 = vunpack.c.l.b16 %v712
      %v1107 = vunpack.c.l.b16 %v713
      %v1108 = vunpack.c.l.b16 %v714
      %v1109 = vunpack.c.l.b16 %v715
      %v1110 = vunpack.c.l.b16 %v716
      %v1111 = vunpack.c.l.b16 %v717
      %v1112 = vunpack.c.l.b16 %v718
      %v1113 = vunpack.c.l.b16 %v719
      %v1114 = vunpack.c.l.b16 %v720
      %v1115 = vunpack.c.l.b16 %v721
      %v1116 = vunpack.c.l.b16 %v722
      %v1117 = vunpack.c.l.b16 %v723
      %v1118 = vunpack.c.l.b16 %v724
      %v1119 = vunpack.c.l.b16 %v725
      %v1120 = vunpack.c.l.b16 %v726
      %v1121 = vunpack.c.l.b16 %v727
      %v1122 = vunpack.c.l.b16 %v728
      %v1123 = vpack.c.b16 %v980, %v979
      %v1124 = vpack.c.b16 %v982, %v981
      %v1125 = vpack.c.b16 %v984, %v983
      %v1126 = vpack.c.b16 %v986, %v985
      %v1127 = vpack.c.b16 %v988, %v987
      %v1128 = vpack.c.b16 %v990, %v989
      %v1129 = vpack.c.b16 %v992, %v991
      %v1130 = vpack.c.b16 %v994, %v993
      %v1131 = vpack.c.b16 %v996, %v995
      %v1132 = vpack.c.b16 %v998, %v997
      %v1133 = vpack.c.b16 %v1000, %v999
      %v1134 = vpack.c.b16 %v1002, %v1001
      %v1135 = vpack.c.b16 %v1004, %v1003
      %v1136 = vpack.c.b16 %v1006, %v1005
      %v1137 = vpack.c.b16 %v1008, %v1007
      %v1138 = vpack.c.b16 %v1010, %v1009
      %v1139 = vpack.c.b16 %v1012, %v1011
      %v1140 = vpack.c.b16 %v1014, %v1013
      %v1141 = vpack.c.b16 %v1016, %v1015
      %v1142 = vpack.c.b16 %v1018, %v1017
      %v1143 = vpack.c.b16 %v1020, %v1019
      %v1144 = vpack.c.b16 %v1022, %v1021
      %v1145 = vpack.c.b16 %v1024, %v1023
      %v1146 = vpack.c.b16 %v1026, %v1025
      %v1147 = vpack.c.b16 %v1028, %v1027
      %v1148 = vpack.c.b16 %v1030, %v1029
      %v1149 = vpack.c.b16 %v1032, %v1031
      %v1150 = vpack.c.b16 %v1034, %v1033
      %v1151 = vpack.c.b16 %v1036, %v1035
      %v1152 = vpack.c.b16 %v1038, %v1037
      %v1153 = vpack.c.b16 %v1040, %v1039
      %v1154 = vpack.c.b16 %v1042, %v1041
      %v1155 = vpack.c.b16 %v1044, %v1043
      %v1156 = vpack.c.b16 %v1046, %v1045
      %v1157 = vpack.c.b16 %v1048, %v1047
      %v1158 = vpack.c.b16 %v1050, %v1049
      %v1159 = vpack.c.b16 %v1052, %v1051
      %v1160 = vpack.c.b16 %v1054, %v1053
      %v1161 = vpack.c.b16 %v1056, %v1055
      %v1162 = vpack.c.b16 %v1058, %v1057
      %v1163 = vpack.c.b16 %v1060, %v1059
      %v1164 = vpack.c.b16 %v1062, %v1061
      %v1165 = vpack.c.b16 %v1064, %v1063
      %v1166 = vpack.c.b16 %v1066, %v1065
      %v1167 = vpack.c.b16 %v1068, %v1067
      %v1168 = vpack.c.b16 %v1070, %v1069
      %v1169 = vpack.c.b16 %v1072, %v1071
      %v1170 = vpack.c.b16 %v1074, %v1073
      %v1171 = vpack.c.b16 %v1076, %v1075
      %v1172 = vpack.c.b16 %v1078, %v1077
      %v1173 = vpack.c.b16 %v1080, %v1079
      %v1174 = vpack.c.b16 %v1082, %v1081
      %v1175 = vpack.c.b16 %v1084, %v1083
      %v1176 = vpack.c.b16 %v1086, %v1085
      %v1177 = vpack.c.b16 %v1088, %v1087
      %v1178 = vpack.c.b16 %v1090, %v1089
      %v1179 = vpack.c.b16 %v1092, %v1091
      %v1180 = vpack.c.b16 %v1094, %v1093
      %v1181 = vpack.c.b16 %v1096, %v1095
      %v1182 = vpack.c.b16 %v1098, %v1097
      %v1183 = vpack.c.b16 %v1100, %v1099
      %v1184 = vpack.c.b16 %v1102, %v1101
      %v1185 = vpack.c.b16 %v1104, %v1103
      %v1186 = vpack.c.b16 %v1106, %v1105
      %v1187 = vpack.c.b16 %v1108, %v1107
      %v1188 = vpack.c.b16 %v1110, %v1109
      %v1189 = vpack.c.b16 %v1112, %v1111
      %v1190 = vpack.c.b16 %v1114, %v1113
      %v1191 = vpack.c.b16 %v1116, %v1115
      %v1192 = vpack.c.b16 %v1118, %v1117
      %v1193 = vpack.c.b16 %v1120, %v1119
      %v1194 = vpack.c.b16 %v1122, %v1121
      %1267 = vmatprep.subr.bf16.mxu0 0
      %1268 = vmatpush1.bf16.msra.mxu0 %v1130
      %1269 = vmatprep.subr.bf16.mxu0 0
      %1270 = vmatpush1.bf16.msra.mxu0 %v1129
      %1271 = vmatprep.subr.bf16.mxu0 0
      %1272 = vmatpush1.bf16.msra.mxu0 %v1128
      %1273 = vmatprep.subr.bf16.mxu0 0
      %1274 = vmatpush1.bf16.msra.mxu0 %v1127
      %1275 = vmatprep.subr.bf16.mxu0 0
      %1276 = vmatpush1.bf16.msra.mxu0 %v1126
      %1277 = vmatprep.subr.bf16.mxu0 0
      %1278 = vmatpush1.bf16.msra.mxu0 %v1125
      %1279 = vmatprep.subr.bf16.mxu0 0
      %1280 = vmatpush1.bf16.msra.mxu0 %v1124
      %1281 = vmatprep.subr.bf16.mxu0 0
      %1282 = vmatpush1.bf16.msra.mxu0 %v1123
      %1283 = vmatprep.subr.bf16.mxu0 0
      %1284 = vmatpush2.bf16.msra.mxu0 %v1138
      %1285 = vmatprep.subr.bf16.mxu0 0
      %1286 = vmatpush2.bf16.msra.mxu0 %v1137
      %1287 = vmatprep.subr.bf16.mxu0 0
      %1288 = vmatpush2.bf16.msra.mxu0 %v1136
      %1289 = vmatprep.subr.bf16.mxu0 0
      %1290 = vmatpush2.bf16.msra.mxu0 %v1135
      %1291 = vmatprep.subr.bf16.mxu0 0
      %1292 = vmatpush2.bf16.msra.mxu0 %v1134
      %1293 = vmatprep.subr.bf16.mxu0 0
      %1294 = vmatpush2.bf16.msra.mxu0 %v1133
      %1295 = vmatprep.subr.bf16.mxu0 0
      %1296 = vmatpush2.bf16.msra.mxu0 %v1132
      %1297 = vmatprep.subr.bf16.mxu0 0
      %1298 = vmatpush2.bf16.msra.mxu0 %v1131
      %1299 = vmatprep.mubr.bf16.mxu0 %v501
      %1300 = vmatmul.mubr.bf16.gmra.mxu0 %v488
      %v1301 = vpop.f32.mrf.mxu0
      %v1302 = vadd.f32 %v830, %v1301
      %v1303 = vpop.f32.mrf.mxu0
      %v1304 = vpop.f32.mrf.mxu0
      %v1305 = vpop.f32.mrf.mxu0
      %1306 = vdwg.mxu0
      %1307 = vmatprep.subr.bf16.mxu0 0
      %1308 = vmatpush1.bf16.msra.mxu0 %v1146
      %1309 = vmatprep.subr.bf16.mxu0 0
      %1310 = vmatpush1.bf16.msra.mxu0 %v1145
      %1311 = vmatprep.subr.bf16.mxu0 0
      %1312 = vmatpush1.bf16.msra.mxu0 %v1144
      %1313 = vmatprep.subr.bf16.mxu0 0
      %1314 = vmatpush1.bf16.msra.mxu0 %v1143
      %1315 = vmatprep.subr.bf16.mxu0 0
      %1316 = vmatpush1.bf16.msra.mxu0 %v1142
      %1317 = vmatprep.subr.bf16.mxu0 0
      %1318 = vmatpush1.bf16.msra.mxu0 %v1141
      %1319 = vmatprep.subr.bf16.mxu0 0
      %1320 = vmatpush1.bf16.msra.mxu0 %v1140
      %1321 = vmatprep.subr.bf16.mxu0 0
      %1322 = vmatpush1.bf16.msra.mxu0 %v1139
      %1323 = vmatprep.subr.bf16.mxu0 0
      %1324 = vmatpush2.bf16.msra.mxu0 %v1154
      %1325 = vmatprep.subr.bf16.mxu0 0
      %1326 = vmatpush2.bf16.msra.mxu0 %v1153
      %1327 = vmatprep.subr.bf16.mxu0 0
      %1328 = vmatpush2.bf16.msra.mxu0 %v1152
      %1329 = vmatprep.subr.bf16.mxu0 0
      %1330 = vmatpush2.bf16.msra.mxu0 %v1151
      %1331 = vmatprep.subr.bf16.mxu0 0
      %1332 = vmatpush2.bf16.msra.mxu0 %v1150
      %1333 = vmatprep.subr.bf16.mxu0 0
      %1334 = vmatpush2.bf16.msra.mxu0 %v1149
      %1335 = vmatprep.subr.bf16.mxu0 0
      %1336 = vmatpush2.bf16.msra.mxu0 %v1148
      %1337 = vmatprep.subr.bf16.mxu0 0
      %1338 = vmatpush2.bf16.msra.mxu0 %v1147
      %1339 = vmatprep.mubr.bf16.mxu0 %v531
      %1340 = vmatmul.mubr.bf16.gmra.mxu0 %v514
      %v1341 = vpop.f32.mrf.mxu0
      %v1342 = vadd.f32 %v1302, %v1341
      %v1343 = vpop.f32.mrf.mxu0
      %v1344 = vpop.f32.mrf.mxu0
      %v1345 = vpop.f32.mrf.mxu0
      %1346 = vdwg.mxu0
      %1347 = vmatprep.subr.bf16.mxu0 0
      %1348 = vmatpush1.bf16.msra.mxu0 %v1162
      %1349 = vmatprep.subr.bf16.mxu0 0
      %1350 = vmatpush1.bf16.msra.mxu0 %v1161
      %1351 = vmatprep.subr.bf16.mxu0 0
      %1352 = vmatpush1.bf16.msra.mxu0 %v1160
      %1353 = vmatprep.subr.bf16.mxu0 0
      %1354 = vmatpush1.bf16.msra.mxu0 %v1159
      %1355 = vmatprep.subr.bf16.mxu0 0
      %1356 = vmatpush1.bf16.msra.mxu0 %v1158
      %1357 = vmatprep.subr.bf16.mxu0 0
      %1358 = vmatpush1.bf16.msra.mxu0 %v1157
      %1359 = vmatprep.subr.bf16.mxu0 0
      %1360 = vmatpush1.bf16.msra.mxu0 %v1156
      %1361 = vmatprep.subr.bf16.mxu0 0
      %1362 = vmatpush1.bf16.msra.mxu0 %v1155
      %1363 = vmatprep.subr.bf16.mxu0 0
      %1364 = vmatpush2.bf16.msra.mxu0 %v1170
      %1365 = vmatprep.subr.bf16.mxu0 0
      %1366 = vmatpush2.bf16.msra.mxu0 %v1169
      %1367 = vmatprep.subr.bf16.mxu0 0
      %1368 = vmatpush2.bf16.msra.mxu0 %v1168
      %1369 = vmatprep.subr.bf16.mxu0 0
      %1370 = vmatpush2.bf16.msra.mxu0 %v1167
      %1371 = vmatprep.subr.bf16.mxu0 0
      %1372 = vmatpush2.bf16.msra.mxu0 %v1166
      %1373 = vmatprep.subr.bf16.mxu0 0
      %1374 = vmatpush2.bf16.msra.mxu0 %v1165
      %1375 = vmatprep.subr.bf16.mxu0 0
      %1376 = vmatpush2.bf16.msra.mxu0 %v1164
      %1377 = vmatprep.subr.bf16.mxu0 0
      %1378 = vmatpush2.bf16.msra.mxu0 %v1163
      %1379 = vmatprep.mubr.bf16.mxu0 %v549
      %1380 = vmatmul.mubr.bf16.gmra.mxu0 %v540
      %v1381 = vpop.f32.mrf.mxu0
      %v1382 = vadd.f32 %v1342, %v1381
      %v1383 = vpop.f32.mrf.mxu0
      %v1384 = vpop.f32.mrf.mxu0
      %v1385 = vpop.f32.mrf.mxu0
      %1386 = vdwg.mxu0
      %1387 = vmatprep.subr.bf16.mxu0 0
      %1388 = vmatpush1.bf16.msra.mxu0 %v1178
      %1389 = vmatprep.subr.bf16.mxu0 0
      %1390 = vmatpush1.bf16.msra.mxu0 %v1177
      %1391 = vmatprep.subr.bf16.mxu0 0
      %1392 = vmatpush1.bf16.msra.mxu0 %v1176
      %1393 = vmatprep.subr.bf16.mxu0 0
      %1394 = vmatpush1.bf16.msra.mxu0 %v1175
      %1395 = vmatprep.subr.bf16.mxu0 0
      %1396 = vmatpush1.bf16.msra.mxu0 %v1174
      %1397 = vmatprep.subr.bf16.mxu0 0
      %1398 = vmatpush1.bf16.msra.mxu0 %v1173
      %1399 = vmatprep.subr.bf16.mxu0 0
      %1400 = vmatpush1.bf16.msra.mxu0 %v1172
      %1401 = vmatprep.subr.bf16.mxu0 0
      %1402 = vmatpush1.bf16.msra.mxu0 %v1171
      %1403 = vmatprep.subr.bf16.mxu0 0
      %1404 = vmatpush2.bf16.msra.mxu0 %v1186
      %1405 = vmatprep.subr.bf16.mxu0 0
      %1406 = vmatpush2.bf16.msra.mxu0 %v1185
      %1407 = vmatprep.subr.bf16.mxu0 0
      %1408 = vmatpush2.bf16.msra.mxu0 %v1184
      %1409 = vmatprep.subr.bf16.mxu0 0
      %1410 = vmatpush2.bf16.msra.mxu0 %v1183
      %1411 = vmatprep.subr.bf16.mxu0 0
      %1412 = vmatpush2.bf16.msra.mxu0 %v1182
      %1413 = vmatprep.subr.bf16.mxu0 0
      %1414 = vmatpush2.bf16.msra.mxu0 %v1181
      %1415 = vmatprep.subr.bf16.mxu0 0
      %1416 = vmatpush2.bf16.msra.mxu0 %v1180
      %1417 = vmatprep.subr.bf16.mxu0 0
      %1418 = vmatpush2.bf16.msra.mxu0 %v1179
      %1419 = vmatprep.mubr.bf16.mxu0 %v575
      %1420 = vmatmul.mubr.bf16.gmra.mxu0 %v566
      %v1421 = vpop.f32.mrf.mxu0
      %v1422 = vadd.f32 %v1382, %v1421
      %v1423 = vpop.f32.mrf.mxu0
      %v1424 = vpop.f32.mrf.mxu0
      %v1425 = vpop.f32.mrf.mxu0
      %1426 = vdwg.mxu0
      %1427 = vmatprep.subr.bf16.mxu0 0
      %1428 = vmatpush1.bf16.msra.mxu0 %v1194
      %1429 = vmatprep.subr.bf16.mxu0 0
      %1430 = vmatpush1.bf16.msra.mxu0 %v1193
      %1431 = vmatprep.subr.bf16.mxu0 0
      %1432 = vmatpush1.bf16.msra.mxu0 %v1192
      %1433 = vmatprep.subr.bf16.mxu0 0
      %1434 = vmatpush1.bf16.msra.mxu0 %v1191
      %1435 = vmatprep.subr.bf16.mxu0 0
      %1436 = vmatpush1.bf16.msra.mxu0 %v1190
      %1437 = vmatprep.subr.bf16.mxu0 0
      %1438 = vmatpush1.bf16.msra.mxu0 %v1189
      %1439 = vmatprep.subr.bf16.mxu0 0
      %1440 = vmatpush1.bf16.msra.mxu0 %v1188
      %1441 = vmatprep.subr.bf16.mxu0 0
      %1442 = vmatpush1.bf16.msra.mxu0 %v1187
      %1443 = vmatprep.subr.bf16.mxu0 0
      %1444 = vmatpush2.bf16.msra.mxu0 0
      %1445 = vmatprep.subr.bf16.mxu0 0
      %1446 = vmatpush2.bf16.msra.mxu0 0
      %1447 = vmatprep.subr.bf16.mxu0 0
      %1448 = vmatpush2.bf16.msra.mxu0 0
      %1449 = vmatprep.subr.bf16.mxu0 0
      %1450 = vmatpush2.bf16.msra.mxu0 0
      %1451 = vmatprep.subr.bf16.mxu0 0
      %1452 = vmatpush2.bf16.msra.mxu0 0
      %1453 = vmatprep.subr.bf16.mxu0 0
      %1454 = vmatpush2.bf16.msra.mxu0 0
      %1455 = vmatprep.subr.bf16.mxu0 0
      %1456 = vmatpush2.bf16.msra.mxu0 0
      %1457 = vmatprep.subr.bf16.mxu0 0
      %1458 = vmatpush2.bf16.msra.mxu0 0
      %1459 = vmatprep.mubr.bf16.mxu0 0
      %1460 = vmatmul.mubr.bf16.gmra.mxu0 %v584
      %v1461 = vpop.f32.mrf.mxu0
      %v1462 = vadd.f32 %v1422, %v1461
      %v1463 = vpop.f32.mrf.mxu0
      %v1464 = vpop.f32.mrf.mxu0
      %v1465 = vpop.f32.mrf.mxu0
      %1466 = vdwg.mxu0
      %1467 = vst [vmem:[%s452] sm:$0xff] %v1462
      %p1468 = scmp.lt.s32.totalorder %s23, 1
      %s1469 = scalar_select %p1468, %s23, 1
      %p1470 = scmp.lt.s32.totalorder %s24, 7
      %s1471 = scalar_select %p1470, %s24, 7
      %s1472 = smul.addr %s1469, 8
      %s1473 = sadd.s32 %s1471, %s1472
      %s1474 = smul.addr %s1473, 8
      %s1475 = scalar_lea.vmem %s8, %s1474
      // Predicated region
      $region53: #{residual_block.11} parent=51 // pred_check
        %p1476 = pneg %p251
      $region54: #{residual_block.11} parent=51 // pred_check_branch
        %1478 = sbr.rel (%p1476) target = $region56
      $region55: #{residual_block.11} parent=51 // pred_region
        _
      $region56: #{residual_block.11} parent=51 // pred_fallthru
        _
    $region52: #{residual_block.11} parent=5 // pred_fallthru
      _
    %p1479 = scmp.le.s32.totalorder 2, %s14
    // Predicated region
    $region57: #{residual_block.11} parent=5 // pred_check
      %p1480 = pneg %p1479
    $region58: #{residual_block.11} parent=5 // pred_check_branch
      %1482 = sbr.rel (%p1480) target = $region60
    $region59: #{residual_block.11} parent=5 // pred_region
      %s1483 = ssub.s32 %s14, 2
      // Predicated region
      $region61: #{residual_block.11} parent=59 // pred_check
        %p1484 = pneg %p257
      $region62: #{residual_block.11} parent=59 // pred_check_branch
        %1486 = sbr.rel (%p1484) target = $region64
      $region63: #{residual_block.11} parent=59 // pred_region
        %p1487 = scmp.lt.s32.totalorder %s25, 1
        %s1488 = scalar_select %p1487, %s25, 1
        %p1489 = scmp.lt.s32.totalorder %s26, 7
        %s1490 = scalar_select %p1489, %s26, 7
        %s1491 = smul.addr %s1488, 8
        %s1492 = sadd.s32 %s1490, %s1491
        %s1493 = smul.addr %s1492, 8
        %s1494 = scalar_lea.vmem %s8, %s1493
      $region64: #{residual_block.11} parent=59 // pred_fallthru
        _
    $region60: #{residual_block.11} parent=5 // pred_fallthru
      _
  $region6: #{residual_block.11} parent=0 // loop_footer
    %s18 = sadd.s32 1, %s14
  $region7: #{residual_block.11} parent=0 // loop_footer_branch
    %13 = sbr.rel target = $region3
  $region8: #{residual_block.11} parent=0 // loop_exit
    _

</llo_original>
